<compile_context>
chip_gen: v6e
topology: v6e:2x2x1
jax: 0.10.0
libtpu: 0.0.40
codegen_flags: <defaults>
</compile_context>

<pallas_src>
import math
from functools import partial

import jax
import jax.numpy as jnp
from jax import lax
from jax.experimental import pallas as pl
from jax.experimental.pallas import tpu as pltpu

_NEG = -1e30   # large finite negative instead of -inf (avoids NaN on masked rows)

_W_KEYS = ('sa_wqkv', 'sa_bqkv', 'sa_wo', 'sa_bo', 'sa_g', 'sa_b',
           'ca_wq', 'ca_bq', 'ca_wkv', 'ca_bkv', 'ca_wo', 'ca_bo', 'ca_g', 'ca_b',
           'ff_w1', 'ff_b1', 'ff_w2', 'ff_b2', 'ff_g', 'ff_b')


# ------------------------------ fused decoder kernel -------------------------

def _decoder_kernel(x_ref, enc_ref, pad_ref,
                    sa_wqkv, sa_bqkv, sa_wo, sa_bo, sa_g, sa_b,
                    ca_wq, ca_bq, ca_wkv, ca_bkv, ca_wo, ca_bo, ca_g, ca_b,
                    ff_w1, ff_b1, ff_w2, ff_b2, ff_g, ff_b,
                    out_ref, attn_ref,
                    qh_scr, kh_sa_scr, vh_sa_scr, kh_ca_scr, vh_ca_scr, ctx_scr,
                    *, num_heads, num_layers):
    f32 = jnp.float32
    bf16 = jnp.bfloat16

    x = x_ref[0]          # (L, D) f32
    enc = enc_ref[0]      # (S, D) f32
    L, D = x.shape
    H = num_heads
    Dh = D // H
    enc_bf = enc.astype(bf16)

    # causal + key-padding additive bias, built once and reused by both layers
    row = lax.broadcasted_iota(jnp.int32, (L, L), 0)
    col = lax.broadcasted_iota(jnp.int32, (L, L), 1)
    causal = jnp.where(col > row, _NEG, 0.0).astype(f32)
    sa_bias = (causal + pad_ref[0])[None]        # (1, L, L), broadcast over heads

    def layer_norm(v, g, b):
        # one-pass: E[x] and E[x^2] are independent lane reductions
        mean = jnp.mean(v, axis=-1, keepdims=True)
        mean_sq = jnp.mean(v * v, axis=-1, keepdims=True)
        var = mean_sq - mean * mean
        return (v - mean) * lax.rsqrt(var + 1e-5) * g + b

    def split_heads(val, scr):
        # (Lk, D) f32 value -> (H, Lk, Dh) bf16 scratch (static slices: cheap stores)
        for h in range(H):
            scr[h] = val[:, h * Dh:(h + 1) * Dh].astype(scr.dtype)
        return scr[...]

    def mha(q, kh, vh, bias, wo, bo, attn_out=None):
        # q: (L, D) f32 (1/sqrt(Dh) folded into W_q); kh/vh: (H, Lk, Dh) bf16
        qh = split_heads(q, qh_scr)                                  # (H, L, Dh)
        s = jnp.einsum('hqd,hkd->hqk', qh, kh,
                       preferred_element_type=f32)                   # (H, L, Lk)
        if bias is not None:
            s = s + bias
        m = jnp.max(s, axis=-1, keepdims=True)
        e = jnp.exp(s - m)
        denom = jnp.sum(e, axis=-1, keepdims=True)
        if attn_out is None:
            p = e * pl.reciprocal(denom, approx=True)    # probs discarded: approx OK
        else:
            p = e / denom                                # probs returned: exact
            attn_out(p)
        o = jnp.einsum('hqk,hkd->hqd', p.astype(bf16), vh,
                       preferred_element_type=f32)                   # (H, L, Dh)
        for h in range(H):                               # merge heads -> (L, D)
            ctx_scr[:, h * Dh:(h + 1) * Dh] = o[h].astype(ctx_scr.dtype)
        # ONE K=D output projection (instead of H tiny K=Dh matmuls)
        return jnp.dot(ctx_scr[...], wo, preferred_element_type=f32) + bo

    for l in range(num_layers):
        # ---- masked causal self-attention ----------------------------------
        qkv = jnp.dot(x.astype(bf16), sa_wqkv[l],
                      preferred_element_type=f32) + sa_bqkv[l]       # (L, 3D)
        kh = split_heads(qkv[:, D:2 * D], kh_sa_scr)
        vh = split_heads(qkv[:, 2 * D:], vh_sa_scr)
        sa = mha(qkv[:, :D], kh, vh, sa_bias, sa_wo[l], sa_bo[l])
        x1 = layer_norm(x + sa, sa_g[l], sa_b[l])

        # ---- cross attention (weights returned) -----------------------------
        qc = jnp.dot(x1.astype(bf16), ca_wq[l],
                     preferred_element_type=f32) + ca_bq[l]          # (L, D)
        kvc = jnp.dot(enc_bf, ca_wkv[l],
                      preferred_element_type=f32) + ca_bkv[l]        # (S, 2D)
        khc = split_heads(kvc[:, :D], kh_ca_scr)
        vhc = split_heads(kvc[:, D:], vh_ca_scr)

        def store_attn(p, _l=l):
            attn_ref[_l, 0] = p                                      # one (H, L, S) store

        ca = mha(qc, khc, vhc, None, ca_wo[l], ca_bo[l], attn_out=store_attn)
        x2 = layer_norm(x1 + ca, ca_g[l], ca_b[l])

        # ---- feed-forward ----------------------------------------------------
        h1 = jnp.maximum(
            jnp.dot(x2.astype(bf16), ff_w1[l],
                    preferred_element_type=f32) + ff_b1[l], 0.0)
        h2 = jnp.dot(h1.astype(bf16), ff_w2[l],
                     preferred_element_type=f32) + ff_b2[l]
        x = layer_norm(x2 + h2, ff_g[l], ff_b[l])

    out_ref[0] = x


def _const_map(rank):
    zeros = (0,) * rank
    return lambda b: zeros


def decoder_fused(x, enc, pad_bias, w, num_heads):
    """x:(B,L,D) f32, enc:(B,S,D) f32, pad_bias:(B,1,L) f32.
    Returns (out:(B,L,D) f32, attns:(num_layers,B,H,L,S) f32)."""
    B, L, D = x.shape
    S = enc.shape[1]
    H = num_heads
    Dh = D // H
    nL = w['sa_wqkv'].shape[0]
    weights = [w[k] for k in _W_KEYS]

    in_specs = [
        pl.BlockSpec((1, L, D), lambda b: (b, 0, 0)),      # x        (per batch)
        pl.BlockSpec((1, S, D), lambda b: (b, 0, 0)),      # enc      (per batch)
        pl.BlockSpec((1, 1, L), lambda b: (b, 0, 0)),      # pad bias (per batch)
    ]
    # Constant-index weight blocks: DMA'd once, resident across the whole grid.
    in_specs += [pl.BlockSpec(a.shape, _const_map(a.ndim)) for a in weights]

    out, attns = pl.pallas_call(
        partial(_decoder_kernel, num_heads=H, num_layers=nL),
        out_shape=(jax.ShapeDtypeStruct((B, L, D), jnp.float32),
                   jax.ShapeDtypeStruct((nL, B, H, L, S), jnp.float32)),
        grid=(B,),
        in_specs=in_specs,
        out_specs=(pl.BlockSpec((1, L, D), lambda b: (b, 0, 0)),
                   pl.BlockSpec((nL, 1, H, L, S), lambda b: (0, b, 0, 0, 0))),
        scratch_shapes=[
            pltpu.VMEM((H, L, Dh), jnp.bfloat16),   # q heads
            pltpu.VMEM((H, L, Dh), jnp.bfloat16),   # self-attn k heads
            pltpu.VMEM((H, L, Dh), jnp.bfloat16),   # self-attn v heads
            pltpu.VMEM((H, S, Dh), jnp.bfloat16),   # cross-attn k heads
            pltpu.VMEM((H, S, Dh), jnp.bfloat16),   # cross-attn v heads
            pltpu.VMEM((L, D), jnp.bfloat16),       # merged-head context
        ],
        compiler_params=pltpu.CompilerParams(
            dimension_semantics=("parallel",)),      # B=2 fills both v7x cores
    )(x, enc, pad_bias, *weights)
    return out, attns


# ------------------------------- decoder forward -----------------------------

def decoder_forward(tgt_cptn, src_img, packed, *, pad_id, num_heads):
    """tgt_cptn:(B,T) int32 tokens, src_img:(S,B,D).
    Returns ((T,B,D), (num_layers,B,H,T,S)), matching the PyTorch module."""
    B, T = tgt_cptn.shape
    D = src_img.shape[-1]

    # additive key-padding bias (B, 1, T): large-negative at PAD positions
    pad_bias = jnp.where(tgt_cptn == pad_id, _NEG, 0.0).astype(jnp.float32)
    pad_bias = pad_bias.reshape(B, 1, T)

    # Embedding gather + PE add: cheap XLA glue outside the kernel.
    x = packed['emb'][tgt_cptn]                          # (B, T, D)
    # Faithful to the reference: pos_emb is applied AFTER permute(1,0,2), so the
    # PE table is indexed by the batch dimension and broadcast along the sequence.
    x = x * math.sqrt(D) + packed['pe'][:B][:, None, :]

    enc = src_img.transpose(1, 0, 2)                     # (B, S, D), once per forward
    out, attns = decoder_fused(x, enc, pad_bias, packed['w'], num_heads)
    return out.transpose(1, 0, 2), attns                 # (T,B,D), (nL,B,H,T,S)


# ------------------------------ parameter handling ----------------------------

def init_params(key, vocab_size, d_model, num_layers, ff_dim, max_len, pad_id):
    keys = jax.random.split(key, 1 + num_layers)
    emb = jax.random.normal(keys[0], (vocab_size, d_model), jnp.float32) * 0.02
    emb = emb.at[pad_id].set(0.0)                        # padding_idx row

    position = jnp.arange(max_len, dtype=jnp.float32)[:, None]
    div_term = jnp.exp(jnp.arange(0, d_model, 2, dtype=jnp.float32)
                       * (-math.log(10000.0) / d_model))
    pe = jnp.zeros((max_len, d_model), jnp.float32)
    pe = pe.at[:, 0::2].set(jnp.sin(position * div_term))
    pe = pe.at[:, 1::2].set(jnp.cos(position * div_term))

    def init_layer(k):
        ks = jax.random.split(k, 6)
        s = 0.02
        return dict(
            self_attn=dict(
                in_proj_w=jax.random.normal(ks[0], (3 * d_model, d_model), jnp.float32) * s,
                in_proj_b=jnp.zeros((3 * d_model,), jnp.float32),
                out_proj_w=jax.random.normal(ks[1], (d_model, d_model), jnp.float32) * s,
                out_proj_b=jnp.zeros((d_model,), jnp.float32)),
            cross_attn=dict(
                in_proj_w=jax.random.normal(ks[2], (3 * d_model, d_model), jnp.float32) * s,
                in_proj_b=jnp.zeros((3 * d_model,), jnp.float32),
                out_proj_w=jax.random.normal(ks[3], (d_model, d_model), jnp.float32) * s,
                out_proj_b=jnp.zeros((d_model,), jnp.float32)),
            sa_ln_g=jnp.ones((d_model,), jnp.float32),
            sa_ln_b=jnp.zeros((d_model,), jnp.float32),
            ca_ln_g=jnp.ones((d_model,), jnp.float32),
            ca_ln_b=jnp.zeros((d_model,), jnp.float32),
            ff_w1=jax.random.normal(ks[4], (ff_dim, d_model), jnp.float32) * s,
            ff_b1=jnp.zeros((ff_dim,), jnp.float32),
            ff_w2=jax.random.normal(ks[5], (d_model, ff_dim), jnp.float32) * s,
            ff_b2=jnp.zeros((d_model,), jnp.float32),
            ff_ln_g=jnp.ones((d_model,), jnp.float32),
            ff_ln_b=jnp.zeros((d_model,), jnp.float32),
        )

    return dict(emb=emb, pe=pe, layers=[init_layer(k) for k in keys[1:]])


def pack_params(params, num_heads):
    """One-time packing: transpose weights, fuse QKV, fold 1/sqrt(Dh) into Q,
    cast matmul weights to bf16, and stack per-layer arrays along a leading axis."""
    d_model = params['emb'].shape[1]
    scale = 1.0 / math.sqrt(d_model // num_heads)
    bf16 = jnp.bfloat16
    r = lambda v: v.reshape(1, -1)

    def attn_parts(a):
        w_q, w_k, w_v = jnp.split(a['in_proj_w'], 3, axis=0)   # each (D, D)
        b_q, b_k, b_v = jnp.split(a['in_proj_b'], 3, axis=0)
        return (w_q.T * scale, w_k.T, w_v.T, b_q * scale, b_k, b_v,
                a['out_proj_w'].T, a['out_proj_b'])

    def pack_layer(p):
        swq, swk, swv, sbq, sbk, sbv, swo, sbo = attn_parts(p['self_attn'])
        cwq, cwk, cwv, cbq, cbk, cbv, cwo, cbo = attn_parts(p['cross_attn'])
        return dict(
            sa_wqkv=jnp.concatenate([swq, swk, swv], axis=1).astype(bf16),
            sa_bqkv=r(jnp.concatenate([sbq, sbk, sbv])),
            sa_wo=swo.astype(bf16), sa_bo=r(sbo),
            sa_g=r(p['sa_ln_g']), sa_b=r(p['sa_ln_b']),
            ca_wq=cwq.astype(bf16), ca_bq=r(cbq),
            ca_wkv=jnp.concatenate([cwk, cwv], axis=1).astype(bf16),
            ca_bkv=r(jnp.concatenate([cbk, cbv])),
            ca_wo=cwo.astype(bf16), ca_bo=r(cbo),
            ca_g=r(p['ca_ln_g']), ca_b=r(p['ca_ln_b']),
            ff_w1=p['ff_w1'].T.astype(bf16), ff_b1=r(p['ff_b1']),
            ff_w2=p['ff_w2'].T.astype(bf16), ff_b2=r(p['ff_b2']),
            ff_g=r(p['ff_ln_g']), ff_b=r(p['ff_ln_b']),
        )

    layers = [pack_layer(p) for p in params['layers']]
    stacked = {k: jnp.stack([lay[k] for lay in layers], axis=0)
               for k in layers[0]}
    return dict(emb=params['emb'], pe=params['pe'], w=stacked)


# ----------------------------------- main -------------------------------------

if __name__ == "__main__":
    VOCAB = 50
    D_MODEL = 32
    NUM_HEADS = 4
    FF_DIM = 64
    NUM_LAYERS = 2
    MAX_LEN = 64
    PAD_ID = 0
    B, T, S = 2, 8, 16

    key = jax.random.PRNGKey(0)
    k_par, k_tok, k_img = jax.random.split(key, 3)

    raw_params = init_params(k_par, VOCAB, D_MODEL, NUM_LAYERS, FF_DIM, MAX_LEN, PAD_ID)
    packed = pack_params(raw_params, NUM_HEADS)          # pre-transpose / fuse / stack once

    # tokens in [1, VOCAB); last two positions of each sequence set to PAD_ID
    tgt_cptn = jax.random.randint(k_tok, (B, T), 1, VOCAB, dtype=jnp.int32)
    tgt_cptn = tgt_cptn.at[:, -2:].set(PAD_ID)

    src_img = jax.random.normal(k_img, (S, B, D_MODEL), jnp.float32)

    fwd = jax.jit(lambda tok, img, prm: decoder_forward(
        tok, img, prm, pad_id=PAD_ID, num_heads=NUM_HEADS))

    out, attns_all = fwd(tgt_cptn, src_img, packed)
    jax.block_until_ready(out)
    jax.block_until_ready(attns_all)

    assert out.shape == (T, B, D_MODEL)
    assert attns_all.shape == (NUM_LAYERS, B, NUM_HEADS, T, S)
    assert bool(jnp.all(jnp.isfinite(out)))
    print("KERNEL_OK")
</pallas_src>

<mosaic_0001>
module attributes {stable_mosaic.version = 11 : i64} {
  func.func @_decoder_kernel(%arg0: i32, %arg1: memref<1x8x32xf32, #tpu.memory_space<vmem>>, %arg2: memref<1x16x32xf32, #tpu.memory_space<vmem>>, %arg3: memref<1x1x8xf32, #tpu.memory_space<vmem>>, %arg4: memref<2x32x96xbf16, #tpu.memory_space<vmem>>, %arg5: memref<2x1x96xf32, #tpu.memory_space<vmem>>, %arg6: memref<2x32x32xbf16, #tpu.memory_space<vmem>>, %arg7: memref<2x1x32xf32, #tpu.memory_space<vmem>>, %arg8: memref<2x1x32xf32, #tpu.memory_space<vmem>>, %arg9: memref<2x1x32xf32, #tpu.memory_space<vmem>>, %arg10: memref<2x32x32xbf16, #tpu.memory_space<vmem>>, %arg11: memref<2x1x32xf32, #tpu.memory_space<vmem>>, %arg12: memref<2x32x64xbf16, #tpu.memory_space<vmem>>, %arg13: memref<2x1x64xf32, #tpu.memory_space<vmem>>, %arg14: memref<2x32x32xbf16, #tpu.memory_space<vmem>>, %arg15: memref<2x1x32xf32, #tpu.memory_space<vmem>>, %arg16: memref<2x1x32xf32, #tpu.memory_space<vmem>>, %arg17: memref<2x1x32xf32, #tpu.memory_space<vmem>>, %arg18: memref<2x32x64xbf16, #tpu.memory_space<vmem>>, %arg19: memref<2x1x64xf32, #tpu.memory_space<vmem>>, %arg20: memref<2x64x32xbf16, #tpu.memory_space<vmem>>, %arg21: memref<2x1x32xf32, #tpu.memory_space<vmem>>, %arg22: memref<2x1x32xf32, #tpu.memory_space<vmem>>, %arg23: memref<2x1x32xf32, #tpu.memory_space<vmem>>, %arg24: memref<1x8x32xf32, #tpu.memory_space<vmem>>, %arg25: memref<2x1x4x8x16xf32, #tpu.memory_space<vmem>>, %arg26: memref<4x8x8xbf16, #tpu.memory_space<vmem>>, %arg27: memref<4x8x8xbf16, #tpu.memory_space<vmem>>, %arg28: memref<4x8x8xbf16, #tpu.memory_space<vmem>>, %arg29: memref<4x16x8xbf16, #tpu.memory_space<vmem>>, %arg30: memref<4x16x8xbf16, #tpu.memory_space<vmem>>, %arg31: memref<8x32xbf16, #tpu.memory_space<vmem>>) attributes {dimension_semantics = [#tpu.dimension_semantics<parallel>], iteration_bounds = array<i64: 2>, scalar_prefetch = 0 : i64, scratch_operands = 6 : i64, tpu.core_type = #tpu.core_type<tc>, window_params = [{transform_indices = @transform_0, window_bounds = array<i64: 1, 8, 32>}, {transform_indices = @transform_1, window_bounds = array<i64: 1, 16, 32>}, {transform_indices = @transform_2, window_bounds = array<i64: 1, 1, 8>}, {pipeline_mode = #tpu.pipeline_mode<synchronous>, transform_indices = @transform_3, window_bounds = array<i64: 2, 32, 96>}, {pipeline_mode = #tpu.pipeline_mode<synchronous>, transform_indices = @transform_4, window_bounds = array<i64: 2, 1, 96>}, {pipeline_mode = #tpu.pipeline_mode<synchronous>, transform_indices = @transform_5, window_bounds = array<i64: 2, 32, 32>}, {pipeline_mode = #tpu.pipeline_mode<synchronous>, transform_indices = @transform_6, window_bounds = array<i64: 2, 1, 32>}, {pipeline_mode = #tpu.pipeline_mode<synchronous>, transform_indices = @transform_7, window_bounds = array<i64: 2, 1, 32>}, {pipeline_mode = #tpu.pipeline_mode<synchronous>, transform_indices = @transform_8, window_bounds = array<i64: 2, 1, 32>}, {pipeline_mode = #tpu.pipeline_mode<synchronous>, transform_indices = @transform_9, window_bounds = array<i64: 2, 32, 32>}, {pipeline_mode = #tpu.pipeline_mode<synchronous>, transform_indices = @transform_10, window_bounds = array<i64: 2, 1, 32>}, {pipeline_mode = #tpu.pipeline_mode<synchronous>, transform_indices = @transform_11, window_bounds = array<i64: 2, 32, 64>}, {pipeline_mode = #tpu.pipeline_mode<synchronous>, transform_indices = @transform_12, window_bounds = array<i64: 2, 1, 64>}, {pipeline_mode = #tpu.pipeline_mode<synchronous>, transform_indices = @transform_13, window_bounds = array<i64: 2, 32, 32>}, {pipeline_mode = #tpu.pipeline_mode<synchronous>, transform_indices = @transform_14, window_bounds = array<i64: 2, 1, 32>}, {pipeline_mode = #tpu.pipeline_mode<synchronous>, transform_indices = @transform_15, window_bounds = array<i64: 2, 1, 32>}, {pipeline_mode = #tpu.pipeline_mode<synchronous>, transform_indices = @transform_16, window_bounds = array<i64: 2, 1, 32>}, {pipeline_mode = #tpu.pipeline_mode<synchronous>, transform_indices = @transform_17, window_bounds = array<i64: 2, 32, 64>}, {pipeline_mode = #tpu.pipeline_mode<synchronous>, transform_indices = @transform_18, window_bounds = array<i64: 2, 1, 64>}, {pipeline_mode = #tpu.pipeline_mode<synchronous>, transform_indices = @transform_19, window_bounds = array<i64: 2, 64, 32>}, {pipeline_mode = #tpu.pipeline_mode<synchronous>, transform_indices = @transform_20, window_bounds = array<i64: 2, 1, 32>}, {pipeline_mode = #tpu.pipeline_mode<synchronous>, transform_indices = @transform_21, window_bounds = array<i64: 2, 1, 32>}, {pipeline_mode = #tpu.pipeline_mode<synchronous>, transform_indices = @transform_22, window_bounds = array<i64: 2, 1, 32>}, {transform_indices = @transform_23, window_bounds = array<i64: 1, 8, 32>}, {transform_indices = @transform_24, window_bounds = array<i64: 2, 1, 4, 8, 16>}]} {
    %c0 = arith.constant 0 : index
    %c0_0 = arith.constant 0 : index
    %c0_1 = arith.constant 0 : index
    %0 = vector.load %arg1[%c0, %c0_0, %c0_1] : memref<1x8x32xf32, #tpu.memory_space<vmem>>, vector<1x8x32xf32>
    %1 = vector.shape_cast %0 : vector<1x8x32xf32> to vector<8x32xf32>
    %c0_2 = arith.constant 0 : index
    %c0_3 = arith.constant 0 : index
    %c0_4 = arith.constant 0 : index
    %2 = vector.load %arg2[%c0_2, %c0_3, %c0_4] : memref<1x16x32xf32, #tpu.memory_space<vmem>>, vector<1x16x32xf32>
    %3 = vector.shape_cast %2 : vector<1x16x32xf32> to vector<16x32xf32>
    %4 = arith.truncf %3 : vector<16x32xf32> to vector<16x32xbf16>
    %5 = tpu.iota {dimensions = array<i32: 0>} : vector<8x8xi32>
    %6 = tpu.iota {dimensions = array<i32: 1>} : vector<8x8xi32>
    %7 = arith.cmpi sgt, %6, %5 : vector<8x8xi32>
    %cst = arith.constant -1.000000e+30 : f32
    %cst_5 = arith.constant 0.000000e+00 : f32
    %8 = vector.broadcast %cst : f32 to vector<8x8xf32>
    %9 = vector.broadcast %cst_5 : f32 to vector<8x8xf32>
    %10 = arith.select %7, %8, %9 : vector<8x8xi1>, vector<8x8xf32>
    %c0_6 = arith.constant 0 : index
    %c0_7 = arith.constant 0 : index
    %c0_8 = arith.constant 0 : index
    %11 = vector.load %arg3[%c0_6, %c0_7, %c0_8] : memref<1x1x8xf32, #tpu.memory_space<vmem>>, vector<1x1x8xf32>
    %12 = vector.shape_cast %11 : vector<1x1x8xf32> to vector<1x8xf32>
    %13 = vector.broadcast %12 : vector<1x8xf32> to vector<8x8xf32>
    %14 = arith.addf %10, %13 : vector<8x8xf32>
    %15 = vector.shape_cast %14 : vector<8x8xf32> to vector<1x8x8xf32>
    %16 = arith.truncf %1 : vector<8x32xf32> to vector<8x32xbf16>
    %c0_9 = arith.constant 0 : index
    %c0_10 = arith.constant 0 : index
    %c0_11 = arith.constant 0 : index
    %17 = vector.load %arg4[%c0_9, %c0_10, %c0_11] : memref<2x32x96xbf16, #tpu.memory_space<vmem>>, vector<1x32x96xbf16>
    %18 = vector.shape_cast %17 : vector<1x32x96xbf16> to vector<32x96xbf16>
    %cst_12 = arith.constant dense<0.000000e+00> : vector<8x96xf32>
    %19 = tpu.matmul %16, %18, %cst_12 {dimension_numbers = #tpu.dot_dimension_numbers<[1], [0], [0], [1], [0, 0, 1, 1], [], []>} : vector<8x32xbf16>, vector<32x96xbf16>, vector<8x96xf32> -> vector<8x96xf32>
    %c0_13 = arith.constant 0 : index
    %c0_14 = arith.constant 0 : index
    %c0_15 = arith.constant 0 : index
    %20 = vector.load %arg5[%c0_13, %c0_14, %c0_15] : memref<2x1x96xf32, #tpu.memory_space<vmem>>, vector<1x1x96xf32>
    %21 = vector.shape_cast %20 : vector<1x1x96xf32> to vector<1x96xf32>
    %22 = vector.broadcast %21 : vector<1x96xf32> to vector<8x96xf32>
    %23 = arith.addf %19, %22 : vector<8x96xf32>
    %24 = vector.extract_strided_slice %23 {offsets = [0, 32], sizes = [8, 32], strides = [1, 1]} : vector<8x96xf32> to vector<8x32xf32>
    %25 = vector.extract_strided_slice %24 {offsets = [0, 0], sizes = [8, 8], strides = [1, 1]} : vector<8x32xf32> to vector<8x8xf32>
    %26 = arith.truncf %25 : vector<8x8xf32> to vector<8x8xbf16>
    %c0_16 = arith.constant 0 : index
    %c0_17 = arith.constant 0 : index
    %c0_18 = arith.constant 0 : index
    %27 = vector.load %arg27[%c0_16, %c0_17, %c0_18] : memref<4x8x8xbf16, #tpu.memory_space<vmem>>, vector<1x8x8xbf16>
    %28 = vector.shape_cast %27 : vector<1x8x8xbf16> to vector<8x8xbf16>
    %29 = vector.shape_cast %26 : vector<8x8xbf16> to vector<1x8x8xbf16>
    tpu.vector_store %arg27[%c0_16, %c0_17, %c0_18], %29 {strides = array<i32>} : memref<4x8x8xbf16, #tpu.memory_space<vmem>>, vector<1x8x8xbf16>,
    %30 = vector.extract_strided_slice %24 {offsets = [0, 8], sizes = [8, 8], strides = [1, 1]} : vector<8x32xf32> to vector<8x8xf32>
    %31 = arith.truncf %30 : vector<8x8xf32> to vector<8x8xbf16>
    %c1 = arith.constant 1 : index
    %c0_19 = arith.constant 0 : index
    %c0_20 = arith.constant 0 : index
    %32 = vector.load %arg27[%c1, %c0_19, %c0_20] : memref<4x8x8xbf16, #tpu.memory_space<vmem>>, vector<1x8x8xbf16>
    %33 = vector.shape_cast %32 : vector<1x8x8xbf16> to vector<8x8xbf16>
    %34 = vector.shape_cast %31 : vector<8x8xbf16> to vector<1x8x8xbf16>
    tpu.vector_store %arg27[%c1, %c0_19, %c0_20], %34 {strides = array<i32>} : memref<4x8x8xbf16, #tpu.memory_space<vmem>>, vector<1x8x8xbf16>,
    %35 = vector.extract_strided_slice %24 {offsets = [0, 16], sizes = [8, 8], strides = [1, 1]} : vector<8x32xf32> to vector<8x8xf32>
    %36 = arith.truncf %35 : vector<8x8xf32> to vector<8x8xbf16>
    %c2 = arith.constant 2 : index
    %c0_21 = arith.constant 0 : index
    %c0_22 = arith.constant 0 : index
    %37 = vector.load %arg27[%c2, %c0_21, %c0_22] : memref<4x8x8xbf16, #tpu.memory_space<vmem>>, vector<1x8x8xbf16>
    %38 = vector.shape_cast %37 : vector<1x8x8xbf16> to vector<8x8xbf16>
    %39 = vector.shape_cast %36 : vector<8x8xbf16> to vector<1x8x8xbf16>
    tpu.vector_store %arg27[%c2, %c0_21, %c0_22], %39 {strides = array<i32>} : memref<4x8x8xbf16, #tpu.memory_space<vmem>>, vector<1x8x8xbf16>,
    %40 = vector.extract_strided_slice %24 {offsets = [0, 24], sizes = [8, 8], strides = [1, 1]} : vector<8x32xf32> to vector<8x8xf32>
    %41 = arith.truncf %40 : vector<8x8xf32> to vector<8x8xbf16>
    %c3 = arith.constant 3 : index
    %c0_23 = arith.constant 0 : index
    %c0_24 = arith.constant 0 : index
    %42 = vector.load %arg27[%c3, %c0_23, %c0_24] : memref<4x8x8xbf16, #tpu.memory_space<vmem>>, vector<1x8x8xbf16>
    %43 = vector.shape_cast %42 : vector<1x8x8xbf16> to vector<8x8xbf16>
    %44 = vector.shape_cast %41 : vector<8x8xbf16> to vector<1x8x8xbf16>
    tpu.vector_store %arg27[%c3, %c0_23, %c0_24], %44 {strides = array<i32>} : memref<4x8x8xbf16, #tpu.memory_space<vmem>>, vector<1x8x8xbf16>,
    %c0_25 = arith.constant 0 : index
    %c0_26 = arith.constant 0 : index
    %c0_27 = arith.constant 0 : index
    %45 = vector.load %arg27[%c0_25, %c0_26, %c0_27] : memref<4x8x8xbf16, #tpu.memory_space<vmem>>, vector<4x8x8xbf16>
    %46 = vector.extract_strided_slice %23 {offsets = [0, 64], sizes = [8, 32], strides = [1, 1]} : vector<8x96xf32> to vector<8x32xf32>
    %47 = vector.extract_strided_slice %46 {offsets = [0, 0], sizes = [8, 8], strides = [1, 1]} : vector<8x32xf32> to vector<8x8xf32>
    %48 = arith.truncf %47 : vector<8x8xf32> to vector<8x8xbf16>
    %c0_28 = arith.constant 0 : index
    %c0_29 = arith.constant 0 : index
    %c0_30 = arith.constant 0 : index
    %49 = vector.load %arg28[%c0_28, %c0_29, %c0_30] : memref<4x8x8xbf16, #tpu.memory_space<vmem>>, vector<1x8x8xbf16>
    %50 = vector.shape_cast %49 : vector<1x8x8xbf16> to vector<8x8xbf16>
    %51 = vector.shape_cast %48 : vector<8x8xbf16> to vector<1x8x8xbf16>
    tpu.vector_store %arg28[%c0_28, %c0_29, %c0_30], %51 {strides = array<i32>} : memref<4x8x8xbf16, #tpu.memory_space<vmem>>, vector<1x8x8xbf16>,
    %52 = vector.extract_strided_slice %46 {offsets = [0, 8], sizes = [8, 8], strides = [1, 1]} : vector<8x32xf32> to vector<8x8xf32>
    %53 = arith.truncf %52 : vector<8x8xf32> to vector<8x8xbf16>
    %c1_31 = arith.constant 1 : index
    %c0_32 = arith.constant 0 : index
    %c0_33 = arith.constant 0 : index
    %54 = vector.load %arg28[%c1_31, %c0_32, %c0_33] : memref<4x8x8xbf16, #tpu.memory_space<vmem>>, vector<1x8x8xbf16>
    %55 = vector.shape_cast %54 : vector<1x8x8xbf16> to vector<8x8xbf16>
    %56 = vector.shape_cast %53 : vector<8x8xbf16> to vector<1x8x8xbf16>
    tpu.vector_store %arg28[%c1_31, %c0_32, %c0_33], %56 {strides = array<i32>} : memref<4x8x8xbf16, #tpu.memory_space<vmem>>, vector<1x8x8xbf16>,
    %57 = vector.extract_strided_slice %46 {offsets = [0, 16], sizes = [8, 8], strides = [1, 1]} : vector<8x32xf32> to vector<8x8xf32>
    %58 = arith.truncf %57 : vector<8x8xf32> to vector<8x8xbf16>
    %c2_34 = arith.constant 2 : index
    %c0_35 = arith.constant 0 : index
    %c0_36 = arith.constant 0 : index
    %59 = vector.load %arg28[%c2_34, %c0_35, %c0_36] : memref<4x8x8xbf16, #tpu.memory_space<vmem>>, vector<1x8x8xbf16>
    %60 = vector.shape_cast %59 : vector<1x8x8xbf16> to vector<8x8xbf16>
    %61 = vector.shape_cast %58 : vector<8x8xbf16> to vector<1x8x8xbf16>
    tpu.vector_store %arg28[%c2_34, %c0_35, %c0_36], %61 {strides = array<i32>} : memref<4x8x8xbf16, #tpu.memory_space<vmem>>, vector<1x8x8xbf16>,
    %62 = vector.extract_strided_slice %46 {offsets = [0, 24], sizes = [8, 8], strides = [1, 1]} : vector<8x32xf32> to vector<8x8xf32>
    %63 = arith.truncf %62 : vector<8x8xf32> to vector<8x8xbf16>
    %c3_37 = arith.constant 3 : index
    %c0_38 = arith.constant 0 : index
    %c0_39 = arith.constant 0 : index
    %64 = vector.load %arg28[%c3_37, %c0_38, %c0_39] : memref<4x8x8xbf16, #tpu.memory_space<vmem>>, vector<1x8x8xbf16>
    %65 = vector.shape_cast %64 : vector<1x8x8xbf16> to vector<8x8xbf16>
    %66 = vector.shape_cast %63 : vector<8x8xbf16> to vector<1x8x8xbf16>
    tpu.vector_store %arg28[%c3_37, %c0_38, %c0_39], %66 {strides = array<i32>} : memref<4x8x8xbf16, #tpu.memory_space<vmem>>, vector<1x8x8xbf16>,
    %c0_40 = arith.constant 0 : index
    %c0_41 = arith.constant 0 : index
    %c0_42 = arith.constant 0 : index
    %67 = vector.load %arg28[%c0_40, %c0_41, %c0_42] : memref<4x8x8xbf16, #tpu.memory_space<vmem>>, vector<4x8x8xbf16>
    %68 = vector.extract_strided_slice %23 {offsets = [0, 0], sizes = [8, 32], strides = [1, 1]} : vector<8x96xf32> to vector<8x32xf32>
    %c0_43 = arith.constant 0 : index
    %c0_44 = arith.constant 0 : index
    %c0_45 = arith.constant 0 : index
    %69 = vector.load %arg6[%c0_43, %c0_44, %c0_45] : memref<2x32x32xbf16, #tpu.memory_space<vmem>>, vector<1x32x32xbf16>
    %70 = vector.shape_cast %69 : vector<1x32x32xbf16> to vector<32x32xbf16>
    %c0_46 = arith.constant 0 : index
    %c0_47 = arith.constant 0 : index
    %c0_48 = arith.constant 0 : index
    %71 = vector.load %arg7[%c0_46, %c0_47, %c0_48] : memref<2x1x32xf32, #tpu.memory_space<vmem>>, vector<1x1x32xf32>
    %72 = vector.shape_cast %71 : vector<1x1x32xf32> to vector<1x32xf32>
    %73 = vector.extract_strided_slice %68 {offsets = [0, 0], sizes = [8, 8], strides = [1, 1]} : vector<8x32xf32> to vector<8x8xf32>
    %74 = arith.truncf %73 : vector<8x8xf32> to vector<8x8xbf16>
    %c0_49 = arith.constant 0 : index
    %c0_50 = arith.constant 0 : index
    %c0_51 = arith.constant 0 : index
    %75 = vector.load %arg26[%c0_49, %c0_50, %c0_51] : memref<4x8x8xbf16, #tpu.memory_space<vmem>>, vector<1x8x8xbf16>
    %76 = vector.shape_cast %75 : vector<1x8x8xbf16> to vector<8x8xbf16>
    %77 = vector.shape_cast %74 : vector<8x8xbf16> to vector<1x8x8xbf16>
    tpu.vector_store %arg26[%c0_49, %c0_50, %c0_51], %77 {strides = array<i32>} : memref<4x8x8xbf16, #tpu.memory_space<vmem>>, vector<1x8x8xbf16>,
    %78 = vector.extract_strided_slice %68 {offsets = [0, 8], sizes = [8, 8], strides = [1, 1]} : vector<8x32xf32> to vector<8x8xf32>
    %79 = arith.truncf %78 : vector<8x8xf32> to vector<8x8xbf16>
    %c1_52 = arith.constant 1 : index
    %c0_53 = arith.constant 0 : index
    %c0_54 = arith.constant 0 : index
    %80 = vector.load %arg26[%c1_52, %c0_53, %c0_54] : memref<4x8x8xbf16, #tpu.memory_space<vmem>>, vector<1x8x8xbf16>
    %81 = vector.shape_cast %80 : vector<1x8x8xbf16> to vector<8x8xbf16>
    %82 = vector.shape_cast %79 : vector<8x8xbf16> to vector<1x8x8xbf16>
    tpu.vector_store %arg26[%c1_52, %c0_53, %c0_54], %82 {strides = array<i32>} : memref<4x8x8xbf16, #tpu.memory_space<vmem>>, vector<1x8x8xbf16>,
    %83 = vector.extract_strided_slice %68 {offsets = [0, 16], sizes = [8, 8], strides = [1, 1]} : vector<8x32xf32> to vector<8x8xf32>
    %84 = arith.truncf %83 : vector<8x8xf32> to vector<8x8xbf16>
    %c2_55 = arith.constant 2 : index
    %c0_56 = arith.constant 0 : index
    %c0_57 = arith.constant 0 : index
    %85 = vector.load %arg26[%c2_55, %c0_56, %c0_57] : memref<4x8x8xbf16, #tpu.memory_space<vmem>>, vector<1x8x8xbf16>
    %86 = vector.shape_cast %85 : vector<1x8x8xbf16> to vector<8x8xbf16>
    %87 = vector.shape_cast %84 : vector<8x8xbf16> to vector<1x8x8xbf16>
    tpu.vector_store %arg26[%c2_55, %c0_56, %c0_57], %87 {strides = array<i32>} : memref<4x8x8xbf16, #tpu.memory_space<vmem>>, vector<1x8x8xbf16>,
    %88 = vector.extract_strided_slice %68 {offsets = [0, 24], sizes = [8, 8], strides = [1, 1]} : vector<8x32xf32> to vector<8x8xf32>
    %89 = arith.truncf %88 : vector<8x8xf32> to vector<8x8xbf16>
    %c3_58 = arith.constant 3 : index
    %c0_59 = arith.constant 0 : index
    %c0_60 = arith.constant 0 : index
    %90 = vector.load %arg26[%c3_58, %c0_59, %c0_60] : memref<4x8x8xbf16, #tpu.memory_space<vmem>>, vector<1x8x8xbf16>
    %91 = vector.shape_cast %90 : vector<1x8x8xbf16> to vector<8x8xbf16>
    %92 = vector.shape_cast %89 : vector<8x8xbf16> to vector<1x8x8xbf16>
    tpu.vector_store %arg26[%c3_58, %c0_59, %c0_60], %92 {strides = array<i32>} : memref<4x8x8xbf16, #tpu.memory_space<vmem>>, vector<1x8x8xbf16>,
    %c0_61 = arith.constant 0 : index
    %c0_62 = arith.constant 0 : index
    %c0_63 = arith.constant 0 : index
    %93 = vector.load %arg26[%c0_61, %c0_62, %c0_63] : memref<4x8x8xbf16, #tpu.memory_space<vmem>>, vector<4x8x8xbf16>
    "tpu.trace_start"() <{level = 10 : i32, message = "hqd,hkd->hqk"}> : () -> ()
    %cst_64 = arith.constant dense<0.000000e+00> : vector<4x8x8xf32>
    %94 = tpu.matmul %93, %45, %cst_64 {dimension_numbers = #tpu.dot_dimension_numbers<[2], [2], [1], [1], [0, 0, 0, 1, 1, 1], [0], [0]>} : vector<4x8x8xbf16>, vector<4x8x8xbf16>, vector<4x8x8xf32> -> vector<4x8x8xf32>
    "tpu.trace_stop"() : () -> ()
    %95 = vector.broadcast %15 : vector<1x8x8xf32> to vector<4x8x8xf32>
    %96 = arith.addf %94, %95 : vector<4x8x8xf32>
    %cst_65 = arith.constant dense<0xFF800000> : vector<4x8xf32>
    %97 = vector.multi_reduction <maximumf>, %96, %cst_65 [2] : vector<4x8x8xf32> to vector<4x8xf32>
    %98 = vector.shape_cast %97 : vector<4x8xf32> to vector<4x8x1xf32>
    %99 = vector.broadcast %98 : vector<4x8x1xf32> to vector<4x8x8xf32>
    %100 = arith.subf %96, %99 : vector<4x8x8xf32>
    %101 = math.exp %100 : vector<4x8x8xf32>
    %cst_66 = arith.constant dense<0.000000e+00> : vector<4x8xf32>
    %102 = vector.multi_reduction <add>, %101, %cst_66 [2] : vector<4x8x8xf32> to vector<4x8xf32>
    %103 = vector.shape_cast %102 : vector<4x8xf32> to vector<4x8x1xf32>
    %104 = tpu.reciprocal %103 {approx = true} : vector<4x8x1xf32> -> vector<4x8x1xf32>
    %105 = vector.broadcast %104 : vector<4x8x1xf32> to vector<4x8x8xf32>
    %106 = arith.mulf %101, %105 : vector<4x8x8xf32>
    %107 = arith.truncf %106 : vector<4x8x8xf32> to vector<4x8x8xbf16>
    "tpu.trace_start"() <{level = 10 : i32, message = "hqk,hkd->hqd"}> : () -> ()
    %cst_67 = arith.constant dense<0.000000e+00> : vector<4x8x8xf32>
    %108 = tpu.matmul %107, %67, %cst_67 {dimension_numbers = #tpu.dot_dimension_numbers<[2], [1], [1], [2], [0, 0, 0, 1, 1, 2], [0], [0]>} : vector<4x8x8xbf16>, vector<4x8x8xbf16>, vector<4x8x8xf32> -> vector<4x8x8xf32>
    "tpu.trace_stop"() : () -> ()
    %109 = vector.extract_strided_slice %108 {offsets = [0, 0, 0], sizes = [1, 8, 8], strides = [1, 1, 1]} : vector<4x8x8xf32> to vector<1x8x8xf32>
    %110 = vector.shape_cast %109 : vector<1x8x8xf32> to vector<8x8xf32>
    %111 = arith.truncf %110 : vector<8x8xf32> to vector<8x8xbf16>
    %c0_68 = arith.constant 0 : index
    %c0_69 = arith.constant 0 : index
    %112 = vector.load %arg31[%c0_68, %c0_69] : memref<8x32xbf16, #tpu.memory_space<vmem>>, vector<8x8xbf16>
    tpu.vector_store %arg31[%c0_68, %c0_69], %111 {strides = array<i32>} : memref<8x32xbf16, #tpu.memory_space<vmem>>, vector<8x8xbf16>,
    %113 = vector.extract_strided_slice %108 {offsets = [1, 0, 0], sizes = [1, 8, 8], strides = [1, 1, 1]} : vector<4x8x8xf32> to vector<1x8x8xf32>
    %114 = vector.shape_cast %113 : vector<1x8x8xf32> to vector<8x8xf32>
    %115 = arith.truncf %114 : vector<8x8xf32> to vector<8x8xbf16>
    %c0_70 = arith.constant 0 : index
    %c8 = arith.constant 8 : index
    %116 = vector.load %arg31[%c0_70, %c8] : memref<8x32xbf16, #tpu.memory_space<vmem>>, vector<8x8xbf16>
    tpu.vector_store %arg31[%c0_70, %c8], %115 {strides = array<i32>} : memref<8x32xbf16, #tpu.memory_space<vmem>>, vector<8x8xbf16>,
    %117 = vector.extract_strided_slice %108 {offsets = [2, 0, 0], sizes = [1, 8, 8], strides = [1, 1, 1]} : vector<4x8x8xf32> to vector<1x8x8xf32>
    %118 = vector.shape_cast %117 : vector<1x8x8xf32> to vector<8x8xf32>
    %119 = arith.truncf %118 : vector<8x8xf32> to vector<8x8xbf16>
    %c0_71 = arith.constant 0 : index
    %c16 = arith.constant 16 : index
    %120 = vector.load %arg31[%c0_71, %c16] : memref<8x32xbf16, #tpu.memory_space<vmem>>, vector<8x8xbf16>
    tpu.vector_store %arg31[%c0_71, %c16], %119 {strides = array<i32>} : memref<8x32xbf16, #tpu.memory_space<vmem>>, vector<8x8xbf16>,
    %121 = vector.extract_strided_slice %108 {offsets = [3, 0, 0], sizes = [1, 8, 8], strides = [1, 1, 1]} : vector<4x8x8xf32> to vector<1x8x8xf32>
    %122 = vector.shape_cast %121 : vector<1x8x8xf32> to vector<8x8xf32>
    %123 = arith.truncf %122 : vector<8x8xf32> to vector<8x8xbf16>
    %c0_72 = arith.constant 0 : index
    %c24 = arith.constant 24 : index
    %124 = vector.load %arg31[%c0_72, %c24] : memref<8x32xbf16, #tpu.memory_space<vmem>>, vector<8x8xbf16>
    tpu.vector_store %arg31[%c0_72, %c24], %123 {strides = array<i32>} : memref<8x32xbf16, #tpu.memory_space<vmem>>, vector<8x8xbf16>,
    %c0_73 = arith.constant 0 : index
    %c0_74 = arith.constant 0 : index
    %125 = vector.load %arg31[%c0_73, %c0_74] : memref<8x32xbf16, #tpu.memory_space<vmem>>, vector<8x32xbf16>
    %cst_75 = arith.constant dense<0.000000e+00> : vector<8x32xf32>
    %126 = tpu.matmul %125, %70, %cst_75 {dimension_numbers = #tpu.dot_dimension_numbers<[1], [0], [0], [1], [0, 0, 1, 1], [], []>} : vector<8x32xbf16>, vector<32x32xbf16>, vector<8x32xf32> -> vector<8x32xf32>
    %127 = vector.broadcast %72 : vector<1x32xf32> to vector<8x32xf32>
    %128 = arith.addf %126, %127 : vector<8x32xf32>
    %129 = arith.addf %1, %128 : vector<8x32xf32>
    %c0_76 = arith.constant 0 : index
    %c0_77 = arith.constant 0 : index
    %c0_78 = arith.constant 0 : index
    %130 = vector.load %arg8[%c0_76, %c0_77, %c0_78] : memref<2x1x32xf32, #tpu.memory_space<vmem>>, vector<1x1x32xf32>
    %131 = vector.shape_cast %130 : vector<1x1x32xf32> to vector<1x32xf32>
    %c0_79 = arith.constant 0 : index
    %c0_80 = arith.constant 0 : index
    %c0_81 = arith.constant 0 : index
    %132 = vector.load %arg9[%c0_79, %c0_80, %c0_81] : memref<2x1x32xf32, #tpu.memory_space<vmem>>, vector<1x1x32xf32>
    %133 = vector.shape_cast %132 : vector<1x1x32xf32> to vector<1x32xf32>
    %cst_82 = arith.constant dense<0.000000e+00> : vector<8xf32>
    %134 = vector.multi_reduction <add>, %129, %cst_82 [1] : vector<8x32xf32> to vector<8xf32>
    %135 = vector.shape_cast %134 : vector<8xf32> to vector<8x1xf32>
    %cst_83 = arith.constant 3.200000e+01 : f32
    %136 = vector.broadcast %cst_83 : f32 to vector<8x1xf32>
    %137 = arith.divf %135, %136 : vector<8x1xf32>
    %138 = arith.mulf %129, %129 : vector<8x32xf32>
    %cst_84 = arith.constant dense<0.000000e+00> : vector<8xf32>
    %139 = vector.multi_reduction <add>, %138, %cst_84 [1] : vector<8x32xf32> to vector<8xf32>
    %140 = vector.shape_cast %139 : vector<8xf32> to vector<8x1xf32>
    %cst_85 = arith.constant 3.200000e+01 : f32
    %141 = vector.broadcast %cst_85 : f32 to vector<8x1xf32>
    %142 = arith.divf %140, %141 : vector<8x1xf32>
    %143 = arith.mulf %137, %137 : vector<8x1xf32>
    %144 = arith.subf %142, %143 : vector<8x1xf32>
    %145 = vector.broadcast %137 : vector<8x1xf32> to vector<8x32xf32>
    %146 = arith.subf %129, %145 : vector<8x32xf32>
    %cst_86 = arith.constant 9.99999974E-6 : f32
    %147 = vector.broadcast %cst_86 : f32 to vector<8x1xf32>
    %148 = arith.addf %144, %147 : vector<8x1xf32>
    %149 = math.rsqrt %148 : vector<8x1xf32>
    %150 = vector.broadcast %149 : vector<8x1xf32> to vector<8x32xf32>
    %151 = arith.mulf %146, %150 : vector<8x32xf32>
    %152 = vector.broadcast %131 : vector<1x32xf32> to vector<8x32xf32>
    %153 = arith.mulf %151, %152 : vector<8x32xf32>
    %154 = vector.broadcast %133 : vector<1x32xf32> to vector<8x32xf32>
    %155 = arith.addf %153, %154 : vector<8x32xf32>
    %156 = arith.truncf %155 : vector<8x32xf32> to vector<8x32xbf16>
    %c0_87 = arith.constant 0 : index
    %c0_88 = arith.constant 0 : index
    %c0_89 = arith.constant 0 : index
    %157 = vector.load %arg10[%c0_87, %c0_88, %c0_89] : memref<2x32x32xbf16, #tpu.memory_space<vmem>>, vector<1x32x32xbf16>
    %158 = vector.shape_cast %157 : vector<1x32x32xbf16> to vector<32x32xbf16>
    %cst_90 = arith.constant dense<0.000000e+00> : vector<8x32xf32>
    %159 = tpu.matmul %156, %158, %cst_90 {dimension_numbers = #tpu.dot_dimension_numbers<[1], [0], [0], [1], [0, 0, 1, 1], [], []>} : vector<8x32xbf16>, vector<32x32xbf16>, vector<8x32xf32> -> vector<8x32xf32>
    %c0_91 = arith.constant 0 : index
    %c0_92 = arith.constant 0 : index
    %c0_93 = arith.constant 0 : index
    %160 = vector.load %arg11[%c0_91, %c0_92, %c0_93] : memref<2x1x32xf32, #tpu.memory_space<vmem>>, vector<1x1x32xf32>
    %161 = vector.shape_cast %160 : vector<1x1x32xf32> to vector<1x32xf32>
    %162 = vector.broadcast %161 : vector<1x32xf32> to vector<8x32xf32>
    %163 = arith.addf %159, %162 : vector<8x32xf32>
    %c0_94 = arith.constant 0 : index
    %c0_95 = arith.constant 0 : index
    %c0_96 = arith.constant 0 : index
    %164 = vector.load %arg12[%c0_94, %c0_95, %c0_96] : memref<2x32x64xbf16, #tpu.memory_space<vmem>>, vector<1x32x64xbf16>
    %165 = vector.shape_cast %164 : vector<1x32x64xbf16> to vector<32x64xbf16>
    %cst_97 = arith.constant dense<0.000000e+00> : vector<16x64xf32>
    %166 = tpu.matmul %4, %165, %cst_97 {dimension_numbers = #tpu.dot_dimension_numbers<[1], [0], [0], [1], [0, 0, 1, 1], [], []>} : vector<16x32xbf16>, vector<32x64xbf16>, vector<16x64xf32> -> vector<16x64xf32>
    %c0_98 = arith.constant 0 : index
    %c0_99 = arith.constant 0 : index
    %c0_100 = arith.constant 0 : index
    %167 = vector.load %arg13[%c0_98, %c0_99, %c0_100] : memref<2x1x64xf32, #tpu.memory_space<vmem>>, vector<1x1x64xf32>
    %168 = vector.shape_cast %167 : vector<1x1x64xf32> to vector<1x64xf32>
    %169 = vector.broadcast %168 : vector<1x64xf32> to vector<16x64xf32>
    %170 = arith.addf %166, %169 : vector<16x64xf32>
    %171 = vector.extract_strided_slice %170 {offsets = [0, 0], sizes = [16, 32], strides = [1, 1]} : vector<16x64xf32> to vector<16x32xf32>
    %172 = vector.extract_strided_slice %171 {offsets = [0, 0], sizes = [16, 8], strides = [1, 1]} : vector<16x32xf32> to vector<16x8xf32>
    %173 = arith.truncf %172 : vector<16x8xf32> to vector<16x8xbf16>
    %c0_101 = arith.constant 0 : index
    %c0_102 = arith.constant 0 : index
    %c0_103 = arith.constant 0 : index
    %174 = vector.load %arg29[%c0_101, %c0_102, %c0_103] : memref<4x16x8xbf16, #tpu.memory_space<vmem>>, vector<1x16x8xbf16>
    %175 = vector.shape_cast %174 : vector<1x16x8xbf16> to vector<16x8xbf16>
    %176 = vector.shape_cast %173 : vector<16x8xbf16> to vector<1x16x8xbf16>
    tpu.vector_store %arg29[%c0_101, %c0_102, %c0_103], %176 {strides = array<i32>} : memref<4x16x8xbf16, #tpu.memory_space<vmem>>, vector<1x16x8xbf16>,
    %177 = vector.extract_strided_slice %171 {offsets = [0, 8], sizes = [16, 8], strides = [1, 1]} : vector<16x32xf32> to vector<16x8xf32>
    %178 = arith.truncf %177 : vector<16x8xf32> to vector<16x8xbf16>
    %c1_104 = arith.constant 1 : index
    %c0_105 = arith.constant 0 : index
    %c0_106 = arith.constant 0 : index
    %179 = vector.load %arg29[%c1_104, %c0_105, %c0_106] : memref<4x16x8xbf16, #tpu.memory_space<vmem>>, vector<1x16x8xbf16>
    %180 = vector.shape_cast %179 : vector<1x16x8xbf16> to vector<16x8xbf16>
    %181 = vector.shape_cast %178 : vector<16x8xbf16> to vector<1x16x8xbf16>
    tpu.vector_store %arg29[%c1_104, %c0_105, %c0_106], %181 {strides = array<i32>} : memref<4x16x8xbf16, #tpu.memory_space<vmem>>, vector<1x16x8xbf16>,
    %182 = vector.extract_strided_slice %171 {offsets = [0, 16], sizes = [16, 8], strides = [1, 1]} : vector<16x32xf32> to vector<16x8xf32>
    %183 = arith.truncf %182 : vector<16x8xf32> to vector<16x8xbf16>
    %c2_107 = arith.constant 2 : index
    %c0_108 = arith.constant 0 : index
    %c0_109 = arith.constant 0 : index
    %184 = vector.load %arg29[%c2_107, %c0_108, %c0_109] : memref<4x16x8xbf16, #tpu.memory_space<vmem>>, vector<1x16x8xbf16>
    %185 = vector.shape_cast %184 : vector<1x16x8xbf16> to vector<16x8xbf16>
    %186 = vector.shape_cast %183 : vector<16x8xbf16> to vector<1x16x8xbf16>
    tpu.vector_store %arg29[%c2_107, %c0_108, %c0_109], %186 {strides = array<i32>} : memref<4x16x8xbf16, #tpu.memory_space<vmem>>, vector<1x16x8xbf16>,
    %187 = vector.extract_strided_slice %171 {offsets = [0, 24], sizes = [16, 8], strides = [1, 1]} : vector<16x32xf32> to vector<16x8xf32>
    %188 = arith.truncf %187 : vector<16x8xf32> to vector<16x8xbf16>
    %c3_110 = arith.constant 3 : index
    %c0_111 = arith.constant 0 : index
    %c0_112 = arith.constant 0 : index
    %189 = vector.load %arg29[%c3_110, %c0_111, %c0_112] : memref<4x16x8xbf16, #tpu.memory_space<vmem>>, vector<1x16x8xbf16>
    %190 = vector.shape_cast %189 : vector<1x16x8xbf16> to vector<16x8xbf16>
    %191 = vector.shape_cast %188 : vector<16x8xbf16> to vector<1x16x8xbf16>
    tpu.vector_store %arg29[%c3_110, %c0_111, %c0_112], %191 {strides = array<i32>} : memref<4x16x8xbf16, #tpu.memory_space<vmem>>, vector<1x16x8xbf16>,
    %c0_113 = arith.constant 0 : index
    %c0_114 = arith.constant 0 : index
    %c0_115 = arith.constant 0 : index
    %192 = vector.load %arg29[%c0_113, %c0_114, %c0_115] : memref<4x16x8xbf16, #tpu.memory_space<vmem>>, vector<4x16x8xbf16>
    %193 = vector.extract_strided_slice %170 {offsets = [0, 32], sizes = [16, 32], strides = [1, 1]} : vector<16x64xf32> to vector<16x32xf32>
    %194 = vector.extract_strided_slice %193 {offsets = [0, 0], sizes = [16, 8], strides = [1, 1]} : vector<16x32xf32> to vector<16x8xf32>
    %195 = arith.truncf %194 : vector<16x8xf32> to vector<16x8xbf16>
    %c0_116 = arith.constant 0 : index
    %c0_117 = arith.constant 0 : index
    %c0_118 = arith.constant 0 : index
    %196 = vector.load %arg30[%c0_116, %c0_117, %c0_118] : memref<4x16x8xbf16, #tpu.memory_space<vmem>>, vector<1x16x8xbf16>
    %197 = vector.shape_cast %196 : vector<1x16x8xbf16> to vector<16x8xbf16>
    %198 = vector.shape_cast %195 : vector<16x8xbf16> to vector<1x16x8xbf16>
    tpu.vector_store %arg30[%c0_116, %c0_117, %c0_118], %198 {strides = array<i32>} : memref<4x16x8xbf16, #tpu.memory_space<vmem>>, vector<1x16x8xbf16>,
    %199 = vector.extract_strided_slice %193 {offsets = [0, 8], sizes = [16, 8], strides = [1, 1]} : vector<16x32xf32> to vector<16x8xf32>
    %200 = arith.truncf %199 : vector<16x8xf32> to vector<16x8xbf16>
    %c1_119 = arith.constant 1 : index
    %c0_120 = arith.constant 0 : index
    %c0_121 = arith.constant 0 : index
    %201 = vector.load %arg30[%c1_119, %c0_120, %c0_121] : memref<4x16x8xbf16, #tpu.memory_space<vmem>>, vector<1x16x8xbf16>
    %202 = vector.shape_cast %201 : vector<1x16x8xbf16> to vector<16x8xbf16>
    %203 = vector.shape_cast %200 : vector<16x8xbf16> to vector<1x16x8xbf16>
    tpu.vector_store %arg30[%c1_119, %c0_120, %c0_121], %203 {strides = array<i32>} : memref<4x16x8xbf16, #tpu.memory_space<vmem>>, vector<1x16x8xbf16>,
    %204 = vector.extract_strided_slice %193 {offsets = [0, 16], sizes = [16, 8], strides = [1, 1]} : vector<16x32xf32> to vector<16x8xf32>
    %205 = arith.truncf %204 : vector<16x8xf32> to vector<16x8xbf16>
    %c2_122 = arith.constant 2 : index
    %c0_123 = arith.constant 0 : index
    %c0_124 = arith.constant 0 : index
    %206 = vector.load %arg30[%c2_122, %c0_123, %c0_124] : memref<4x16x8xbf16, #tpu.memory_space<vmem>>, vector<1x16x8xbf16>
    %207 = vector.shape_cast %206 : vector<1x16x8xbf16> to vector<16x8xbf16>
    %208 = vector.shape_cast %205 : vector<16x8xbf16> to vector<1x16x8xbf16>
    tpu.vector_store %arg30[%c2_122, %c0_123, %c0_124], %208 {strides = array<i32>} : memref<4x16x8xbf16, #tpu.memory_space<vmem>>, vector<1x16x8xbf16>,
    %209 = vector.extract_strided_slice %193 {offsets = [0, 24], sizes = [16, 8], strides = [1, 1]} : vector<16x32xf32> to vector<16x8xf32>
    %210 = arith.truncf %209 : vector<16x8xf32> to vector<16x8xbf16>
    %c3_125 = arith.constant 3 : index
    %c0_126 = arith.constant 0 : index
    %c0_127 = arith.constant 0 : index
    %211 = vector.load %arg30[%c3_125, %c0_126, %c0_127] : memref<4x16x8xbf16, #tpu.memory_space<vmem>>, vector<1x16x8xbf16>
    %212 = vector.shape_cast %211 : vector<1x16x8xbf16> to vector<16x8xbf16>
    %213 = vector.shape_cast %210 : vector<16x8xbf16> to vector<1x16x8xbf16>
    tpu.vector_store %arg30[%c3_125, %c0_126, %c0_127], %213 {strides = array<i32>} : memref<4x16x8xbf16, #tpu.memory_space<vmem>>, vector<1x16x8xbf16>,
    %c0_128 = arith.constant 0 : index
    %c0_129 = arith.constant 0 : index
    %c0_130 = arith.constant 0 : index
    %214 = vector.load %arg30[%c0_128, %c0_129, %c0_130] : memref<4x16x8xbf16, #tpu.memory_space<vmem>>, vector<4x16x8xbf16>
    %c0_131 = arith.constant 0 : index
    %c0_132 = arith.constant 0 : index
    %c0_133 = arith.constant 0 : index
    %215 = vector.load %arg14[%c0_131, %c0_132, %c0_133] : memref<2x32x32xbf16, #tpu.memory_space<vmem>>, vector<1x32x32xbf16>
    %216 = vector.shape_cast %215 : vector<1x32x32xbf16> to vector<32x32xbf16>
    %c0_134 = arith.constant 0 : index
    %c0_135 = arith.constant 0 : index
    %c0_136 = arith.constant 0 : index
    %217 = vector.load %arg15[%c0_134, %c0_135, %c0_136] : memref<2x1x32xf32, #tpu.memory_space<vmem>>, vector<1x1x32xf32>
    %218 = vector.shape_cast %217 : vector<1x1x32xf32> to vector<1x32xf32>
    %219 = vector.extract_strided_slice %163 {offsets = [0, 0], sizes = [8, 8], strides = [1, 1]} : vector<8x32xf32> to vector<8x8xf32>
    %220 = arith.truncf %219 : vector<8x8xf32> to vector<8x8xbf16>
    %c0_137 = arith.constant 0 : index
    %c0_138 = arith.constant 0 : index
    %c0_139 = arith.constant 0 : index
    %221 = vector.load %arg26[%c0_137, %c0_138, %c0_139] : memref<4x8x8xbf16, #tpu.memory_space<vmem>>, vector<1x8x8xbf16>
    %222 = vector.shape_cast %221 : vector<1x8x8xbf16> to vector<8x8xbf16>
    %223 = vector.shape_cast %220 : vector<8x8xbf16> to vector<1x8x8xbf16>
    tpu.vector_store %arg26[%c0_137, %c0_138, %c0_139], %223 {strides = array<i32>} : memref<4x8x8xbf16, #tpu.memory_space<vmem>>, vector<1x8x8xbf16>,
    %224 = vector.extract_strided_slice %163 {offsets = [0, 8], sizes = [8, 8], strides = [1, 1]} : vector<8x32xf32> to vector<8x8xf32>
    %225 = arith.truncf %224 : vector<8x8xf32> to vector<8x8xbf16>
    %c1_140 = arith.constant 1 : index
    %c0_141 = arith.constant 0 : index
    %c0_142 = arith.constant 0 : index
    %226 = vector.load %arg26[%c1_140, %c0_141, %c0_142] : memref<4x8x8xbf16, #tpu.memory_space<vmem>>, vector<1x8x8xbf16>
    %227 = vector.shape_cast %226 : vector<1x8x8xbf16> to vector<8x8xbf16>
    %228 = vector.shape_cast %225 : vector<8x8xbf16> to vector<1x8x8xbf16>
    tpu.vector_store %arg26[%c1_140, %c0_141, %c0_142], %228 {strides = array<i32>} : memref<4x8x8xbf16, #tpu.memory_space<vmem>>, vector<1x8x8xbf16>,
    %229 = vector.extract_strided_slice %163 {offsets = [0, 16], sizes = [8, 8], strides = [1, 1]} : vector<8x32xf32> to vector<8x8xf32>
    %230 = arith.truncf %229 : vector<8x8xf32> to vector<8x8xbf16>
    %c2_143 = arith.constant 2 : index
    %c0_144 = arith.constant 0 : index
    %c0_145 = arith.constant 0 : index
    %231 = vector.load %arg26[%c2_143, %c0_144, %c0_145] : memref<4x8x8xbf16, #tpu.memory_space<vmem>>, vector<1x8x8xbf16>
    %232 = vector.shape_cast %231 : vector<1x8x8xbf16> to vector<8x8xbf16>
    %233 = vector.shape_cast %230 : vector<8x8xbf16> to vector<1x8x8xbf16>
    tpu.vector_store %arg26[%c2_143, %c0_144, %c0_145], %233 {strides = array<i32>} : memref<4x8x8xbf16, #tpu.memory_space<vmem>>, vector<1x8x8xbf16>,
    %234 = vector.extract_strided_slice %163 {offsets = [0, 24], sizes = [8, 8], strides = [1, 1]} : vector<8x32xf32> to vector<8x8xf32>
    %235 = arith.truncf %234 : vector<8x8xf32> to vector<8x8xbf16>
    %c3_146 = arith.constant 3 : index
    %c0_147 = arith.constant 0 : index
    %c0_148 = arith.constant 0 : index
    %236 = vector.load %arg26[%c3_146, %c0_147, %c0_148] : memref<4x8x8xbf16, #tpu.memory_space<vmem>>, vector<1x8x8xbf16>
    %237 = vector.shape_cast %236 : vector<1x8x8xbf16> to vector<8x8xbf16>
    %238 = vector.shape_cast %235 : vector<8x8xbf16> to vector<1x8x8xbf16>
    tpu.vector_store %arg26[%c3_146, %c0_147, %c0_148], %238 {strides = array<i32>} : memref<4x8x8xbf16, #tpu.memory_space<vmem>>, vector<1x8x8xbf16>,
    %c0_149 = arith.constant 0 : index
    %c0_150 = arith.constant 0 : index
    %c0_151 = arith.constant 0 : index
    %239 = vector.load %arg26[%c0_149, %c0_150, %c0_151] : memref<4x8x8xbf16, #tpu.memory_space<vmem>>, vector<4x8x8xbf16>
    "tpu.trace_start"() <{level = 10 : i32, message = "hqd,hkd->hqk"}> : () -> ()
    %cst_152 = arith.constant dense<0.000000e+00> : vector<4x8x16xf32>
    %240 = tpu.matmul %239, %192, %cst_152 {dimension_numbers = #tpu.dot_dimension_numbers<[2], [2], [1], [1], [0, 0, 0, 1, 1, 1], [0], [0]>} : vector<4x8x8xbf16>, vector<4x16x8xbf16>, vector<4x8x16xf32> -> vector<4x8x16xf32>
    "tpu.trace_stop"() : () -> ()
    %cst_153 = arith.constant dense<0xFF800000> : vector<4x8xf32>
    %241 = vector.multi_reduction <maximumf>, %240, %cst_153 [2] : vector<4x8x16xf32> to vector<4x8xf32>
    %242 = vector.shape_cast %241 : vector<4x8xf32> to vector<4x8x1xf32>
    %243 = vector.broadcast %242 : vector<4x8x1xf32> to vector<4x8x16xf32>
    %244 = arith.subf %240, %243 : vector<4x8x16xf32>
    %245 = math.exp %244 : vector<4x8x16xf32>
    %cst_154 = arith.constant dense<0.000000e+00> : vector<4x8xf32>
    %246 = vector.multi_reduction <add>, %245, %cst_154 [2] : vector<4x8x16xf32> to vector<4x8xf32>
    %247 = vector.shape_cast %246 : vector<4x8xf32> to vector<4x8x1xf32>
    %248 = vector.broadcast %247 : vector<4x8x1xf32> to vector<4x8x16xf32>
    %249 = arith.divf %245, %248 : vector<4x8x16xf32>
    %c0_155 = arith.constant 0 : index
    %c0_156 = arith.constant 0 : index
    %c0_157 = arith.constant 0 : index
    %c0_158 = arith.constant 0 : index
    %c0_159 = arith.constant 0 : index
    %250 = vector.load %arg25[%c0_155, %c0_156, %c0_157, %c0_158, %c0_159] : memref<2x1x4x8x16xf32, #tpu.memory_space<vmem>>, vector<1x1x4x8x16xf32>
    %251 = vector.shape_cast %250 : vector<1x1x4x8x16xf32> to vector<4x8x16xf32>
    %252 = vector.shape_cast %249 : vector<4x8x16xf32> to vector<1x1x4x8x16xf32>
    tpu.vector_store %arg25[%c0_155, %c0_156, %c0_157, %c0_158, %c0_159], %252 {strides = array<i32>} : memref<2x1x4x8x16xf32, #tpu.memory_space<vmem>>, vector<1x1x4x8x16xf32>,
    %253 = arith.truncf %249 : vector<4x8x16xf32> to vector<4x8x16xbf16>
    "tpu.trace_start"() <{level = 10 : i32, message = "hqk,hkd->hqd"}> : () -> ()
    %cst_160 = arith.constant dense<0.000000e+00> : vector<4x8x8xf32>
    %254 = tpu.matmul %253, %214, %cst_160 {dimension_numbers = #tpu.dot_dimension_numbers<[2], [1], [1], [2], [0, 0, 0, 1, 1, 2], [0], [0]>} : vector<4x8x16xbf16>, vector<4x16x8xbf16>, vector<4x8x8xf32> -> vector<4x8x8xf32>
    "tpu.trace_stop"() : () -> ()
    %255 = vector.extract_strided_slice %254 {offsets = [0, 0, 0], sizes = [1, 8, 8], strides = [1, 1, 1]} : vector<4x8x8xf32> to vector<1x8x8xf32>
    %256 = vector.shape_cast %255 : vector<1x8x8xf32> to vector<8x8xf32>
    %257 = arith.truncf %256 : vector<8x8xf32> to vector<8x8xbf16>
    %c0_161 = arith.constant 0 : index
    %c0_162 = arith.constant 0 : index
    %258 = vector.load %arg31[%c0_161, %c0_162] : memref<8x32xbf16, #tpu.memory_space<vmem>>, vector<8x8xbf16>
    tpu.vector_store %arg31[%c0_161, %c0_162], %257 {strides = array<i32>} : memref<8x32xbf16, #tpu.memory_space<vmem>>, vector<8x8xbf16>,
    %259 = vector.extract_strided_slice %254 {offsets = [1, 0, 0], sizes = [1, 8, 8], strides = [1, 1, 1]} : vector<4x8x8xf32> to vector<1x8x8xf32>
    %260 = vector.shape_cast %259 : vector<1x8x8xf32> to vector<8x8xf32>
    %261 = arith.truncf %260 : vector<8x8xf32> to vector<8x8xbf16>
    %c0_163 = arith.constant 0 : index
    %c8_164 = arith.constant 8 : index
    %262 = vector.load %arg31[%c0_163, %c8_164] : memref<8x32xbf16, #tpu.memory_space<vmem>>, vector<8x8xbf16>
    tpu.vector_store %arg31[%c0_163, %c8_164], %261 {strides = array<i32>} : memref<8x32xbf16, #tpu.memory_space<vmem>>, vector<8x8xbf16>,
    %263 = vector.extract_strided_slice %254 {offsets = [2, 0, 0], sizes = [1, 8, 8], strides = [1, 1, 1]} : vector<4x8x8xf32> to vector<1x8x8xf32>
    %264 = vector.shape_cast %263 : vector<1x8x8xf32> to vector<8x8xf32>
    %265 = arith.truncf %264 : vector<8x8xf32> to vector<8x8xbf16>
    %c0_165 = arith.constant 0 : index
    %c16_166 = arith.constant 16 : index
    %266 = vector.load %arg31[%c0_165, %c16_166] : memref<8x32xbf16, #tpu.memory_space<vmem>>, vector<8x8xbf16>
    tpu.vector_store %arg31[%c0_165, %c16_166], %265 {strides = array<i32>} : memref<8x32xbf16, #tpu.memory_space<vmem>>, vector<8x8xbf16>,
    %267 = vector.extract_strided_slice %254 {offsets = [3, 0, 0], sizes = [1, 8, 8], strides = [1, 1, 1]} : vector<4x8x8xf32> to vector<1x8x8xf32>
    %268 = vector.shape_cast %267 : vector<1x8x8xf32> to vector<8x8xf32>
    %269 = arith.truncf %268 : vector<8x8xf32> to vector<8x8xbf16>
    %c0_167 = arith.constant 0 : index
    %c24_168 = arith.constant 24 : index
    %270 = vector.load %arg31[%c0_167, %c24_168] : memref<8x32xbf16, #tpu.memory_space<vmem>>, vector<8x8xbf16>
    tpu.vector_store %arg31[%c0_167, %c24_168], %269 {strides = array<i32>} : memref<8x32xbf16, #tpu.memory_space<vmem>>, vector<8x8xbf16>,
    %c0_169 = arith.constant 0 : index
    %c0_170 = arith.constant 0 : index
    %271 = vector.load %arg31[%c0_169, %c0_170] : memref<8x32xbf16, #tpu.memory_space<vmem>>, vector<8x32xbf16>
    %cst_171 = arith.constant dense<0.000000e+00> : vector<8x32xf32>
    %272 = tpu.matmul %271, %216, %cst_171 {dimension_numbers = #tpu.dot_dimension_numbers<[1], [0], [0], [1], [0, 0, 1, 1], [], []>} : vector<8x32xbf16>, vector<32x32xbf16>, vector<8x32xf32> -> vector<8x32xf32>
    %273 = vector.broadcast %218 : vector<1x32xf32> to vector<8x32xf32>
    %274 = arith.addf %272, %273 : vector<8x32xf32>
    %275 = arith.addf %155, %274 : vector<8x32xf32>
    %c0_172 = arith.constant 0 : index
    %c0_173 = arith.constant 0 : index
    %c0_174 = arith.constant 0 : index
    %276 = vector.load %arg16[%c0_172, %c0_173, %c0_174] : memref<2x1x32xf32, #tpu.memory_space<vmem>>, vector<1x1x32xf32>
    %277 = vector.shape_cast %276 : vector<1x1x32xf32> to vector<1x32xf32>
    %c0_175 = arith.constant 0 : index
    %c0_176 = arith.constant 0 : index
    %c0_177 = arith.constant 0 : index
    %278 = vector.load %arg17[%c0_175, %c0_176, %c0_177] : memref<2x1x32xf32, #tpu.memory_space<vmem>>, vector<1x1x32xf32>
    %279 = vector.shape_cast %278 : vector<1x1x32xf32> to vector<1x32xf32>
    %cst_178 = arith.constant dense<0.000000e+00> : vector<8xf32>
    %280 = vector.multi_reduction <add>, %275, %cst_178 [1] : vector<8x32xf32> to vector<8xf32>
    %281 = vector.shape_cast %280 : vector<8xf32> to vector<8x1xf32>
    %cst_179 = arith.constant 3.200000e+01 : f32
    %282 = vector.broadcast %cst_179 : f32 to vector<8x1xf32>
    %283 = arith.divf %281, %282 : vector<8x1xf32>
    %284 = arith.mulf %275, %275 : vector<8x32xf32>
    %cst_180 = arith.constant dense<0.000000e+00> : vector<8xf32>
    %285 = vector.multi_reduction <add>, %284, %cst_180 [1] : vector<8x32xf32> to vector<8xf32>
    %286 = vector.shape_cast %285 : vector<8xf32> to vector<8x1xf32>
    %cst_181 = arith.constant 3.200000e+01 : f32
    %287 = vector.broadcast %cst_181 : f32 to vector<8x1xf32>
    %288 = arith.divf %286, %287 : vector<8x1xf32>
    %289 = arith.mulf %283, %283 : vector<8x1xf32>
    %290 = arith.subf %288, %289 : vector<8x1xf32>
    %291 = vector.broadcast %283 : vector<8x1xf32> to vector<8x32xf32>
    %292 = arith.subf %275, %291 : vector<8x32xf32>
    %cst_182 = arith.constant 9.99999974E-6 : f32
    %293 = vector.broadcast %cst_182 : f32 to vector<8x1xf32>
    %294 = arith.addf %290, %293 : vector<8x1xf32>
    %295 = math.rsqrt %294 : vector<8x1xf32>
    %296 = vector.broadcast %295 : vector<8x1xf32> to vector<8x32xf32>
    %297 = arith.mulf %292, %296 : vector<8x32xf32>
    %298 = vector.broadcast %277 : vector<1x32xf32> to vector<8x32xf32>
    %299 = arith.mulf %297, %298 : vector<8x32xf32>
    %300 = vector.broadcast %279 : vector<1x32xf32> to vector<8x32xf32>
    %301 = arith.addf %299, %300 : vector<8x32xf32>
    %302 = arith.truncf %301 : vector<8x32xf32> to vector<8x32xbf16>
    %c0_183 = arith.constant 0 : index
    %c0_184 = arith.constant 0 : index
    %c0_185 = arith.constant 0 : index
    %303 = vector.load %arg18[%c0_183, %c0_184, %c0_185] : memref<2x32x64xbf16, #tpu.memory_space<vmem>>, vector<1x32x64xbf16>
    %304 = vector.shape_cast %303 : vector<1x32x64xbf16> to vector<32x64xbf16>
    %cst_186 = arith.constant dense<0.000000e+00> : vector<8x64xf32>
    %305 = tpu.matmul %302, %304, %cst_186 {dimension_numbers = #tpu.dot_dimension_numbers<[1], [0], [0], [1], [0, 0, 1, 1], [], []>} : vector<8x32xbf16>, vector<32x64xbf16>, vector<8x64xf32> -> vector<8x64xf32>
    %c0_187 = arith.constant 0 : index
    %c0_188 = arith.constant 0 : index
    %c0_189 = arith.constant 0 : index
    %306 = vector.load %arg19[%c0_187, %c0_188, %c0_189] : memref<2x1x64xf32, #tpu.memory_space<vmem>>, vector<1x1x64xf32>
    %307 = vector.shape_cast %306 : vector<1x1x64xf32> to vector<1x64xf32>
    %308 = vector.broadcast %307 : vector<1x64xf32> to vector<8x64xf32>
    %309 = arith.addf %305, %308 : vector<8x64xf32>
    %cst_190 = arith.constant 0.000000e+00 : f32
    %310 = vector.broadcast %cst_190 : f32 to vector<8x64xf32>
    %311 = arith.maximumf %309, %310 : vector<8x64xf32>
    %312 = arith.truncf %311 : vector<8x64xf32> to vector<8x64xbf16>
    %c0_191 = arith.constant 0 : index
    %c0_192 = arith.constant 0 : index
    %c0_193 = arith.constant 0 : index
    %313 = vector.load %arg20[%c0_191, %c0_192, %c0_193] : memref<2x64x32xbf16, #tpu.memory_space<vmem>>, vector<1x64x32xbf16>
    %314 = vector.shape_cast %313 : vector<1x64x32xbf16> to vector<64x32xbf16>
    %cst_194 = arith.constant dense<0.000000e+00> : vector<8x32xf32>
    %315 = tpu.matmul %312, %314, %cst_194 {dimension_numbers = #tpu.dot_dimension_numbers<[1], [0], [0], [1], [0, 0, 1, 1], [], []>} : vector<8x64xbf16>, vector<64x32xbf16>, vector<8x32xf32> -> vector<8x32xf32>
    %c0_195 = arith.constant 0 : index
    %c0_196 = arith.constant 0 : index
    %c0_197 = arith.constant 0 : index
    %316 = vector.load %arg21[%c0_195, %c0_196, %c0_197] : memref<2x1x32xf32, #tpu.memory_space<vmem>>, vector<1x1x32xf32>
    %317 = vector.shape_cast %316 : vector<1x1x32xf32> to vector<1x32xf32>
    %318 = vector.broadcast %317 : vector<1x32xf32> to vector<8x32xf32>
    %319 = arith.addf %315, %318 : vector<8x32xf32>
    %320 = arith.addf %301, %319 : vector<8x32xf32>
    %c0_198 = arith.constant 0 : index
    %c0_199 = arith.constant 0 : index
    %c0_200 = arith.constant 0 : index
    %321 = vector.load %arg22[%c0_198, %c0_199, %c0_200] : memref<2x1x32xf32, #tpu.memory_space<vmem>>, vector<1x1x32xf32>
    %322 = vector.shape_cast %321 : vector<1x1x32xf32> to vector<1x32xf32>
    %c0_201 = arith.constant 0 : index
    %c0_202 = arith.constant 0 : index
    %c0_203 = arith.constant 0 : index
    %323 = vector.load %arg23[%c0_201, %c0_202, %c0_203] : memref<2x1x32xf32, #tpu.memory_space<vmem>>, vector<1x1x32xf32>
    %324 = vector.shape_cast %323 : vector<1x1x32xf32> to vector<1x32xf32>
    %cst_204 = arith.constant dense<0.000000e+00> : vector<8xf32>
    %325 = vector.multi_reduction <add>, %320, %cst_204 [1] : vector<8x32xf32> to vector<8xf32>
    %326 = vector.shape_cast %325 : vector<8xf32> to vector<8x1xf32>
    %cst_205 = arith.constant 3.200000e+01 : f32
    %327 = vector.broadcast %cst_205 : f32 to vector<8x1xf32>
    %328 = arith.divf %326, %327 : vector<8x1xf32>
    %329 = arith.mulf %320, %320 : vector<8x32xf32>
    %cst_206 = arith.constant dense<0.000000e+00> : vector<8xf32>
    %330 = vector.multi_reduction <add>, %329, %cst_206 [1] : vector<8x32xf32> to vector<8xf32>
    %331 = vector.shape_cast %330 : vector<8xf32> to vector<8x1xf32>
    %cst_207 = arith.constant 3.200000e+01 : f32
    %332 = vector.broadcast %cst_207 : f32 to vector<8x1xf32>
    %333 = arith.divf %331, %332 : vector<8x1xf32>
    %334 = arith.mulf %328, %328 : vector<8x1xf32>
    %335 = arith.subf %333, %334 : vector<8x1xf32>
    %336 = vector.broadcast %328 : vector<8x1xf32> to vector<8x32xf32>
    %337 = arith.subf %320, %336 : vector<8x32xf32>
    %cst_208 = arith.constant 9.99999974E-6 : f32
    %338 = vector.broadcast %cst_208 : f32 to vector<8x1xf32>
    %339 = arith.addf %335, %338 : vector<8x1xf32>
    %340 = math.rsqrt %339 : vector<8x1xf32>
    %341 = vector.broadcast %340 : vector<8x1xf32> to vector<8x32xf32>
    %342 = arith.mulf %337, %341 : vector<8x32xf32>
    %343 = vector.broadcast %322 : vector<1x32xf32> to vector<8x32xf32>
    %344 = arith.mulf %342, %343 : vector<8x32xf32>
    %345 = vector.broadcast %324 : vector<1x32xf32> to vector<8x32xf32>
    %346 = arith.addf %344, %345 : vector<8x32xf32>
    %347 = arith.truncf %346 : vector<8x32xf32> to vector<8x32xbf16>
    %c1_209 = arith.constant 1 : index
    %c0_210 = arith.constant 0 : index
    %c0_211 = arith.constant 0 : index
    %348 = vector.load %arg4[%c1_209, %c0_210, %c0_211] : memref<2x32x96xbf16, #tpu.memory_space<vmem>>, vector<1x32x96xbf16>
    %349 = vector.shape_cast %348 : vector<1x32x96xbf16> to vector<32x96xbf16>
    %cst_212 = arith.constant dense<0.000000e+00> : vector<8x96xf32>
    %350 = tpu.matmul %347, %349, %cst_212 {dimension_numbers = #tpu.dot_dimension_numbers<[1], [0], [0], [1], [0, 0, 1, 1], [], []>} : vector<8x32xbf16>, vector<32x96xbf16>, vector<8x96xf32> -> vector<8x96xf32>
    %c1_213 = arith.constant 1 : index
    %c0_214 = arith.constant 0 : index
    %c0_215 = arith.constant 0 : index
    %351 = vector.load %arg5[%c1_213, %c0_214, %c0_215] : memref<2x1x96xf32, #tpu.memory_space<vmem>>, vector<1x1x96xf32>
    %352 = vector.shape_cast %351 : vector<1x1x96xf32> to vector<1x96xf32>
    %353 = vector.broadcast %352 : vector<1x96xf32> to vector<8x96xf32>
    %354 = arith.addf %350, %353 : vector<8x96xf32>
    %355 = vector.extract_strided_slice %354 {offsets = [0, 32], sizes = [8, 32], strides = [1, 1]} : vector<8x96xf32> to vector<8x32xf32>
    %356 = vector.extract_strided_slice %355 {offsets = [0, 0], sizes = [8, 8], strides = [1, 1]} : vector<8x32xf32> to vector<8x8xf32>
    %357 = arith.truncf %356 : vector<8x8xf32> to vector<8x8xbf16>
    %c0_216 = arith.constant 0 : index
    %c0_217 = arith.constant 0 : index
    %c0_218 = arith.constant 0 : index
    %358 = vector.load %arg27[%c0_216, %c0_217, %c0_218] : memref<4x8x8xbf16, #tpu.memory_space<vmem>>, vector<1x8x8xbf16>
    %359 = vector.shape_cast %358 : vector<1x8x8xbf16> to vector<8x8xbf16>
    %360 = vector.shape_cast %357 : vector<8x8xbf16> to vector<1x8x8xbf16>
    tpu.vector_store %arg27[%c0_216, %c0_217, %c0_218], %360 {strides = array<i32>} : memref<4x8x8xbf16, #tpu.memory_space<vmem>>, vector<1x8x8xbf16>,
    %361 = vector.extract_strided_slice %355 {offsets = [0, 8], sizes = [8, 8], strides = [1, 1]} : vector<8x32xf32> to vector<8x8xf32>
    %362 = arith.truncf %361 : vector<8x8xf32> to vector<8x8xbf16>
    %c1_219 = arith.constant 1 : index
    %c0_220 = arith.constant 0 : index
    %c0_221 = arith.constant 0 : index
    %363 = vector.load %arg27[%c1_219, %c0_220, %c0_221] : memref<4x8x8xbf16, #tpu.memory_space<vmem>>, vector<1x8x8xbf16>
    %364 = vector.shape_cast %363 : vector<1x8x8xbf16> to vector<8x8xbf16>
    %365 = vector.shape_cast %362 : vector<8x8xbf16> to vector<1x8x8xbf16>
    tpu.vector_store %arg27[%c1_219, %c0_220, %c0_221], %365 {strides = array<i32>} : memref<4x8x8xbf16, #tpu.memory_space<vmem>>, vector<1x8x8xbf16>,
    %366 = vector.extract_strided_slice %355 {offsets = [0, 16], sizes = [8, 8], strides = [1, 1]} : vector<8x32xf32> to vector<8x8xf32>
    %367 = arith.truncf %366 : vector<8x8xf32> to vector<8x8xbf16>
    %c2_222 = arith.constant 2 : index
    %c0_223 = arith.constant 0 : index
    %c0_224 = arith.constant 0 : index
    %368 = vector.load %arg27[%c2_222, %c0_223, %c0_224] : memref<4x8x8xbf16, #tpu.memory_space<vmem>>, vector<1x8x8xbf16>
    %369 = vector.shape_cast %368 : vector<1x8x8xbf16> to vector<8x8xbf16>
    %370 = vector.shape_cast %367 : vector<8x8xbf16> to vector<1x8x8xbf16>
    tpu.vector_store %arg27[%c2_222, %c0_223, %c0_224], %370 {strides = array<i32>} : memref<4x8x8xbf16, #tpu.memory_space<vmem>>, vector<1x8x8xbf16>,
    %371 = vector.extract_strided_slice %355 {offsets = [0, 24], sizes = [8, 8], strides = [1, 1]} : vector<8x32xf32> to vector<8x8xf32>
    %372 = arith.truncf %371 : vector<8x8xf32> to vector<8x8xbf16>
    %c3_225 = arith.constant 3 : index
    %c0_226 = arith.constant 0 : index
    %c0_227 = arith.constant 0 : index
    %373 = vector.load %arg27[%c3_225, %c0_226, %c0_227] : memref<4x8x8xbf16, #tpu.memory_space<vmem>>, vector<1x8x8xbf16>
    %374 = vector.shape_cast %373 : vector<1x8x8xbf16> to vector<8x8xbf16>
    %375 = vector.shape_cast %372 : vector<8x8xbf16> to vector<1x8x8xbf16>
    tpu.vector_store %arg27[%c3_225, %c0_226, %c0_227], %375 {strides = array<i32>} : memref<4x8x8xbf16, #tpu.memory_space<vmem>>, vector<1x8x8xbf16>,
    %c0_228 = arith.constant 0 : index
    %c0_229 = arith.constant 0 : index
    %c0_230 = arith.constant 0 : index
    %376 = vector.load %arg27[%c0_228, %c0_229, %c0_230] : memref<4x8x8xbf16, #tpu.memory_space<vmem>>, vector<4x8x8xbf16>
    %377 = vector.extract_strided_slice %354 {offsets = [0, 64], sizes = [8, 32], strides = [1, 1]} : vector<8x96xf32> to vector<8x32xf32>
    %378 = vector.extract_strided_slice %377 {offsets = [0, 0], sizes = [8, 8], strides = [1, 1]} : vector<8x32xf32> to vector<8x8xf32>
    %379 = arith.truncf %378 : vector<8x8xf32> to vector<8x8xbf16>
    %c0_231 = arith.constant 0 : index
    %c0_232 = arith.constant 0 : index
    %c0_233 = arith.constant 0 : index
    %380 = vector.load %arg28[%c0_231, %c0_232, %c0_233] : memref<4x8x8xbf16, #tpu.memory_space<vmem>>, vector<1x8x8xbf16>
    %381 = vector.shape_cast %380 : vector<1x8x8xbf16> to vector<8x8xbf16>
    %382 = vector.shape_cast %379 : vector<8x8xbf16> to vector<1x8x8xbf16>
    tpu.vector_store %arg28[%c0_231, %c0_232, %c0_233], %382 {strides = array<i32>} : memref<4x8x8xbf16, #tpu.memory_space<vmem>>, vector<1x8x8xbf16>,
    %383 = vector.extract_strided_slice %377 {offsets = [0, 8], sizes = [8, 8], strides = [1, 1]} : vector<8x32xf32> to vector<8x8xf32>
    %384 = arith.truncf %383 : vector<8x8xf32> to vector<8x8xbf16>
    %c1_234 = arith.constant 1 : index
    %c0_235 = arith.constant 0 : index
    %c0_236 = arith.constant 0 : index
    %385 = vector.load %arg28[%c1_234, %c0_235, %c0_236] : memref<4x8x8xbf16, #tpu.memory_space<vmem>>, vector<1x8x8xbf16>
    %386 = vector.shape_cast %385 : vector<1x8x8xbf16> to vector<8x8xbf16>
    %387 = vector.shape_cast %384 : vector<8x8xbf16> to vector<1x8x8xbf16>
    tpu.vector_store %arg28[%c1_234, %c0_235, %c0_236], %387 {strides = array<i32>} : memref<4x8x8xbf16, #tpu.memory_space<vmem>>, vector<1x8x8xbf16>,
    %388 = vector.extract_strided_slice %377 {offsets = [0, 16], sizes = [8, 8], strides = [1, 1]} : vector<8x32xf32> to vector<8x8xf32>
    %389 = arith.truncf %388 : vector<8x8xf32> to vector<8x8xbf16>
    %c2_237 = arith.constant 2 : index
    %c0_238 = arith.constant 0 : index
    %c0_239 = arith.constant 0 : index
    %390 = vector.load %arg28[%c2_237, %c0_238, %c0_239] : memref<4x8x8xbf16, #tpu.memory_space<vmem>>, vector<1x8x8xbf16>
    %391 = vector.shape_cast %390 : vector<1x8x8xbf16> to vector<8x8xbf16>
    %392 = vector.shape_cast %389 : vector<8x8xbf16> to vector<1x8x8xbf16>
    tpu.vector_store %arg28[%c2_237, %c0_238, %c0_239], %392 {strides = array<i32>} : memref<4x8x8xbf16, #tpu.memory_space<vmem>>, vector<1x8x8xbf16>,
    %393 = vector.extract_strided_slice %377 {offsets = [0, 24], sizes = [8, 8], strides = [1, 1]} : vector<8x32xf32> to vector<8x8xf32>
    %394 = arith.truncf %393 : vector<8x8xf32> to vector<8x8xbf16>
    %c3_240 = arith.constant 3 : index
    %c0_241 = arith.constant 0 : index
    %c0_242 = arith.constant 0 : index
    %395 = vector.load %arg28[%c3_240, %c0_241, %c0_242] : memref<4x8x8xbf16, #tpu.memory_space<vmem>>, vector<1x8x8xbf16>
    %396 = vector.shape_cast %395 : vector<1x8x8xbf16> to vector<8x8xbf16>
    %397 = vector.shape_cast %394 : vector<8x8xbf16> to vector<1x8x8xbf16>
    tpu.vector_store %arg28[%c3_240, %c0_241, %c0_242], %397 {strides = array<i32>} : memref<4x8x8xbf16, #tpu.memory_space<vmem>>, vector<1x8x8xbf16>,
    %c0_243 = arith.constant 0 : index
    %c0_244 = arith.constant 0 : index
    %c0_245 = arith.constant 0 : index
    %398 = vector.load %arg28[%c0_243, %c0_244, %c0_245] : memref<4x8x8xbf16, #tpu.memory_space<vmem>>, vector<4x8x8xbf16>
    %399 = vector.extract_strided_slice %354 {offsets = [0, 0], sizes = [8, 32], strides = [1, 1]} : vector<8x96xf32> to vector<8x32xf32>
    %c1_246 = arith.constant 1 : index
    %c0_247 = arith.constant 0 : index
    %c0_248 = arith.constant 0 : index
    %400 = vector.load %arg6[%c1_246, %c0_247, %c0_248] : memref<2x32x32xbf16, #tpu.memory_space<vmem>>, vector<1x32x32xbf16>
    %401 = vector.shape_cast %400 : vector<1x32x32xbf16> to vector<32x32xbf16>
    %c1_249 = arith.constant 1 : index
    %c0_250 = arith.constant 0 : index
    %c0_251 = arith.constant 0 : index
    %402 = vector.load %arg7[%c1_249, %c0_250, %c0_251] : memref<2x1x32xf32, #tpu.memory_space<vmem>>, vector<1x1x32xf32>
    %403 = vector.shape_cast %402 : vector<1x1x32xf32> to vector<1x32xf32>
    %404 = vector.extract_strided_slice %399 {offsets = [0, 0], sizes = [8, 8], strides = [1, 1]} : vector<8x32xf32> to vector<8x8xf32>
    %405 = arith.truncf %404 : vector<8x8xf32> to vector<8x8xbf16>
    %c0_252 = arith.constant 0 : index
    %c0_253 = arith.constant 0 : index
    %c0_254 = arith.constant 0 : index
    %406 = vector.load %arg26[%c0_252, %c0_253, %c0_254] : memref<4x8x8xbf16, #tpu.memory_space<vmem>>, vector<1x8x8xbf16>
    %407 = vector.shape_cast %406 : vector<1x8x8xbf16> to vector<8x8xbf16>
    %408 = vector.shape_cast %405 : vector<8x8xbf16> to vector<1x8x8xbf16>
    tpu.vector_store %arg26[%c0_252, %c0_253, %c0_254], %408 {strides = array<i32>} : memref<4x8x8xbf16, #tpu.memory_space<vmem>>, vector<1x8x8xbf16>,
    %409 = vector.extract_strided_slice %399 {offsets = [0, 8], sizes = [8, 8], strides = [1, 1]} : vector<8x32xf32> to vector<8x8xf32>
    %410 = arith.truncf %409 : vector<8x8xf32> to vector<8x8xbf16>
    %c1_255 = arith.constant 1 : index
    %c0_256 = arith.constant 0 : index
    %c0_257 = arith.constant 0 : index
    %411 = vector.load %arg26[%c1_255, %c0_256, %c0_257] : memref<4x8x8xbf16, #tpu.memory_space<vmem>>, vector<1x8x8xbf16>
    %412 = vector.shape_cast %411 : vector<1x8x8xbf16> to vector<8x8xbf16>
    %413 = vector.shape_cast %410 : vector<8x8xbf16> to vector<1x8x8xbf16>
    tpu.vector_store %arg26[%c1_255, %c0_256, %c0_257], %413 {strides = array<i32>} : memref<4x8x8xbf16, #tpu.memory_space<vmem>>, vector<1x8x8xbf16>,
    %414 = vector.extract_strided_slice %399 {offsets = [0, 16], sizes = [8, 8], strides = [1, 1]} : vector<8x32xf32> to vector<8x8xf32>
    %415 = arith.truncf %414 : vector<8x8xf32> to vector<8x8xbf16>
    %c2_258 = arith.constant 2 : index
    %c0_259 = arith.constant 0 : index
    %c0_260 = arith.constant 0 : index
    %416 = vector.load %arg26[%c2_258, %c0_259, %c0_260] : memref<4x8x8xbf16, #tpu.memory_space<vmem>>, vector<1x8x8xbf16>
    %417 = vector.shape_cast %416 : vector<1x8x8xbf16> to vector<8x8xbf16>
    %418 = vector.shape_cast %415 : vector<8x8xbf16> to vector<1x8x8xbf16>
    tpu.vector_store %arg26[%c2_258, %c0_259, %c0_260], %418 {strides = array<i32>} : memref<4x8x8xbf16, #tpu.memory_space<vmem>>, vector<1x8x8xbf16>,
    %419 = vector.extract_strided_slice %399 {offsets = [0, 24], sizes = [8, 8], strides = [1, 1]} : vector<8x32xf32> to vector<8x8xf32>
    %420 = arith.truncf %419 : vector<8x8xf32> to vector<8x8xbf16>
    %c3_261 = arith.constant 3 : index
    %c0_262 = arith.constant 0 : index
    %c0_263 = arith.constant 0 : index
    %421 = vector.load %arg26[%c3_261, %c0_262, %c0_263] : memref<4x8x8xbf16, #tpu.memory_space<vmem>>, vector<1x8x8xbf16>
    %422 = vector.shape_cast %421 : vector<1x8x8xbf16> to vector<8x8xbf16>
    %423 = vector.shape_cast %420 : vector<8x8xbf16> to vector<1x8x8xbf16>
    tpu.vector_store %arg26[%c3_261, %c0_262, %c0_263], %423 {strides = array<i32>} : memref<4x8x8xbf16, #tpu.memory_space<vmem>>, vector<1x8x8xbf16>,
    %c0_264 = arith.constant 0 : index
    %c0_265 = arith.constant 0 : index
    %c0_266 = arith.constant 0 : index
    %424 = vector.load %arg26[%c0_264, %c0_265, %c0_266] : memref<4x8x8xbf16, #tpu.memory_space<vmem>>, vector<4x8x8xbf16>
    "tpu.trace_start"() <{level = 10 : i32, message = "hqd,hkd->hqk"}> : () -> ()
    %cst_267 = arith.constant dense<0.000000e+00> : vector<4x8x8xf32>
    %425 = tpu.matmul %424, %376, %cst_267 {dimension_numbers = #tpu.dot_dimension_numbers<[2], [2], [1], [1], [0, 0, 0, 1, 1, 1], [0], [0]>} : vector<4x8x8xbf16>, vector<4x8x8xbf16>, vector<4x8x8xf32> -> vector<4x8x8xf32>
    "tpu.trace_stop"() : () -> ()
    %426 = vector.broadcast %15 : vector<1x8x8xf32> to vector<4x8x8xf32>
    %427 = arith.addf %425, %426 : vector<4x8x8xf32>
    %cst_268 = arith.constant dense<0xFF800000> : vector<4x8xf32>
    %428 = vector.multi_reduction <maximumf>, %427, %cst_268 [2] : vector<4x8x8xf32> to vector<4x8xf32>
    %429 = vector.shape_cast %428 : vector<4x8xf32> to vector<4x8x1xf32>
    %430 = vector.broadcast %429 : vector<4x8x1xf32> to vector<4x8x8xf32>
    %431 = arith.subf %427, %430 : vector<4x8x8xf32>
    %432 = math.exp %431 : vector<4x8x8xf32>
    %cst_269 = arith.constant dense<0.000000e+00> : vector<4x8xf32>
    %433 = vector.multi_reduction <add>, %432, %cst_269 [2] : vector<4x8x8xf32> to vector<4x8xf32>
    %434 = vector.shape_cast %433 : vector<4x8xf32> to vector<4x8x1xf32>
    %435 = tpu.reciprocal %434 {approx = true} : vector<4x8x1xf32> -> vector<4x8x1xf32>
    %436 = vector.broadcast %435 : vector<4x8x1xf32> to vector<4x8x8xf32>
    %437 = arith.mulf %432, %436 : vector<4x8x8xf32>
    %438 = arith.truncf %437 : vector<4x8x8xf32> to vector<4x8x8xbf16>
    "tpu.trace_start"() <{level = 10 : i32, message = "hqk,hkd->hqd"}> : () -> ()
    %cst_270 = arith.constant dense<0.000000e+00> : vector<4x8x8xf32>
    %439 = tpu.matmul %438, %398, %cst_270 {dimension_numbers = #tpu.dot_dimension_numbers<[2], [1], [1], [2], [0, 0, 0, 1, 1, 2], [0], [0]>} : vector<4x8x8xbf16>, vector<4x8x8xbf16>, vector<4x8x8xf32> -> vector<4x8x8xf32>
    "tpu.trace_stop"() : () -> ()
    %440 = vector.extract_strided_slice %439 {offsets = [0, 0, 0], sizes = [1, 8, 8], strides = [1, 1, 1]} : vector<4x8x8xf32> to vector<1x8x8xf32>
    %441 = vector.shape_cast %440 : vector<1x8x8xf32> to vector<8x8xf32>
    %442 = arith.truncf %441 : vector<8x8xf32> to vector<8x8xbf16>
    %c0_271 = arith.constant 0 : index
    %c0_272 = arith.constant 0 : index
    %443 = vector.load %arg31[%c0_271, %c0_272] : memref<8x32xbf16, #tpu.memory_space<vmem>>, vector<8x8xbf16>
    tpu.vector_store %arg31[%c0_271, %c0_272], %442 {strides = array<i32>} : memref<8x32xbf16, #tpu.memory_space<vmem>>, vector<8x8xbf16>,
    %444 = vector.extract_strided_slice %439 {offsets = [1, 0, 0], sizes = [1, 8, 8], strides = [1, 1, 1]} : vector<4x8x8xf32> to vector<1x8x8xf32>
    %445 = vector.shape_cast %444 : vector<1x8x8xf32> to vector<8x8xf32>
    %446 = arith.truncf %445 : vector<8x8xf32> to vector<8x8xbf16>
    %c0_273 = arith.constant 0 : index
    %c8_274 = arith.constant 8 : index
    %447 = vector.load %arg31[%c0_273, %c8_274] : memref<8x32xbf16, #tpu.memory_space<vmem>>, vector<8x8xbf16>
    tpu.vector_store %arg31[%c0_273, %c8_274], %446 {strides = array<i32>} : memref<8x32xbf16, #tpu.memory_space<vmem>>, vector<8x8xbf16>,
    %448 = vector.extract_strided_slice %439 {offsets = [2, 0, 0], sizes = [1, 8, 8], strides = [1, 1, 1]} : vector<4x8x8xf32> to vector<1x8x8xf32>
    %449 = vector.shape_cast %448 : vector<1x8x8xf32> to vector<8x8xf32>
    %450 = arith.truncf %449 : vector<8x8xf32> to vector<8x8xbf16>
    %c0_275 = arith.constant 0 : index
    %c16_276 = arith.constant 16 : index
    %451 = vector.load %arg31[%c0_275, %c16_276] : memref<8x32xbf16, #tpu.memory_space<vmem>>, vector<8x8xbf16>
    tpu.vector_store %arg31[%c0_275, %c16_276], %450 {strides = array<i32>} : memref<8x32xbf16, #tpu.memory_space<vmem>>, vector<8x8xbf16>,
    %452 = vector.extract_strided_slice %439 {offsets = [3, 0, 0], sizes = [1, 8, 8], strides = [1, 1, 1]} : vector<4x8x8xf32> to vector<1x8x8xf32>
    %453 = vector.shape_cast %452 : vector<1x8x8xf32> to vector<8x8xf32>
    %454 = arith.truncf %453 : vector<8x8xf32> to vector<8x8xbf16>
    %c0_277 = arith.constant 0 : index
    %c24_278 = arith.constant 24 : index
    %455 = vector.load %arg31[%c0_277, %c24_278] : memref<8x32xbf16, #tpu.memory_space<vmem>>, vector<8x8xbf16>
    tpu.vector_store %arg31[%c0_277, %c24_278], %454 {strides = array<i32>} : memref<8x32xbf16, #tpu.memory_space<vmem>>, vector<8x8xbf16>,
    %c0_279 = arith.constant 0 : index
    %c0_280 = arith.constant 0 : index
    %456 = vector.load %arg31[%c0_279, %c0_280] : memref<8x32xbf16, #tpu.memory_space<vmem>>, vector<8x32xbf16>
    %cst_281 = arith.constant dense<0.000000e+00> : vector<8x32xf32>
    %457 = tpu.matmul %456, %401, %cst_281 {dimension_numbers = #tpu.dot_dimension_numbers<[1], [0], [0], [1], [0, 0, 1, 1], [], []>} : vector<8x32xbf16>, vector<32x32xbf16>, vector<8x32xf32> -> vector<8x32xf32>
    %458 = vector.broadcast %403 : vector<1x32xf32> to vector<8x32xf32>
    %459 = arith.addf %457, %458 : vector<8x32xf32>
    %460 = arith.addf %346, %459 : vector<8x32xf32>
    %c1_282 = arith.constant 1 : index
    %c0_283 = arith.constant 0 : index
    %c0_284 = arith.constant 0 : index
    %461 = vector.load %arg8[%c1_282, %c0_283, %c0_284] : memref<2x1x32xf32, #tpu.memory_space<vmem>>, vector<1x1x32xf32>
    %462 = vector.shape_cast %461 : vector<1x1x32xf32> to vector<1x32xf32>
    %c1_285 = arith.constant 1 : index
    %c0_286 = arith.constant 0 : index
    %c0_287 = arith.constant 0 : index
    %463 = vector.load %arg9[%c1_285, %c0_286, %c0_287] : memref<2x1x32xf32, #tpu.memory_space<vmem>>, vector<1x1x32xf32>
    %464 = vector.shape_cast %463 : vector<1x1x32xf32> to vector<1x32xf32>
    %cst_288 = arith.constant dense<0.000000e+00> : vector<8xf32>
    %465 = vector.multi_reduction <add>, %460, %cst_288 [1] : vector<8x32xf32> to vector<8xf32>
    %466 = vector.shape_cast %465 : vector<8xf32> to vector<8x1xf32>
    %cst_289 = arith.constant 3.200000e+01 : f32
    %467 = vector.broadcast %cst_289 : f32 to vector<8x1xf32>
    %468 = arith.divf %466, %467 : vector<8x1xf32>
    %469 = arith.mulf %460, %460 : vector<8x32xf32>
    %cst_290 = arith.constant dense<0.000000e+00> : vector<8xf32>
    %470 = vector.multi_reduction <add>, %469, %cst_290 [1] : vector<8x32xf32> to vector<8xf32>
    %471 = vector.shape_cast %470 : vector<8xf32> to vector<8x1xf32>
    %cst_291 = arith.constant 3.200000e+01 : f32
    %472 = vector.broadcast %cst_291 : f32 to vector<8x1xf32>
    %473 = arith.divf %471, %472 : vector<8x1xf32>
    %474 = arith.mulf %468, %468 : vector<8x1xf32>
    %475 = arith.subf %473, %474 : vector<8x1xf32>
    %476 = vector.broadcast %468 : vector<8x1xf32> to vector<8x32xf32>
    %477 = arith.subf %460, %476 : vector<8x32xf32>
    %cst_292 = arith.constant 9.99999974E-6 : f32
    %478 = vector.broadcast %cst_292 : f32 to vector<8x1xf32>
    %479 = arith.addf %475, %478 : vector<8x1xf32>
    %480 = math.rsqrt %479 : vector<8x1xf32>
    %481 = vector.broadcast %480 : vector<8x1xf32> to vector<8x32xf32>
    %482 = arith.mulf %477, %481 : vector<8x32xf32>
    %483 = vector.broadcast %462 : vector<1x32xf32> to vector<8x32xf32>
    %484 = arith.mulf %482, %483 : vector<8x32xf32>
    %485 = vector.broadcast %464 : vector<1x32xf32> to vector<8x32xf32>
    %486 = arith.addf %484, %485 : vector<8x32xf32>
    %487 = arith.truncf %486 : vector<8x32xf32> to vector<8x32xbf16>
    %c1_293 = arith.constant 1 : index
    %c0_294 = arith.constant 0 : index
    %c0_295 = arith.constant 0 : index
    %488 = vector.load %arg10[%c1_293, %c0_294, %c0_295] : memref<2x32x32xbf16, #tpu.memory_space<vmem>>, vector<1x32x32xbf16>
    %489 = vector.shape_cast %488 : vector<1x32x32xbf16> to vector<32x32xbf16>
    %cst_296 = arith.constant dense<0.000000e+00> : vector<8x32xf32>
    %490 = tpu.matmul %487, %489, %cst_296 {dimension_numbers = #tpu.dot_dimension_numbers<[1], [0], [0], [1], [0, 0, 1, 1], [], []>} : vector<8x32xbf16>, vector<32x32xbf16>, vector<8x32xf32> -> vector<8x32xf32>
    %c1_297 = arith.constant 1 : index
    %c0_298 = arith.constant 0 : index
    %c0_299 = arith.constant 0 : index
    %491 = vector.load %arg11[%c1_297, %c0_298, %c0_299] : memref<2x1x32xf32, #tpu.memory_space<vmem>>, vector<1x1x32xf32>
    %492 = vector.shape_cast %491 : vector<1x1x32xf32> to vector<1x32xf32>
    %493 = vector.broadcast %492 : vector<1x32xf32> to vector<8x32xf32>
    %494 = arith.addf %490, %493 : vector<8x32xf32>
    %c1_300 = arith.constant 1 : index
    %c0_301 = arith.constant 0 : index
    %c0_302 = arith.constant 0 : index
    %495 = vector.load %arg12[%c1_300, %c0_301, %c0_302] : memref<2x32x64xbf16, #tpu.memory_space<vmem>>, vector<1x32x64xbf16>
    %496 = vector.shape_cast %495 : vector<1x32x64xbf16> to vector<32x64xbf16>
    %cst_303 = arith.constant dense<0.000000e+00> : vector<16x64xf32>
    %497 = tpu.matmul %4, %496, %cst_303 {dimension_numbers = #tpu.dot_dimension_numbers<[1], [0], [0], [1], [0, 0, 1, 1], [], []>} : vector<16x32xbf16>, vector<32x64xbf16>, vector<16x64xf32> -> vector<16x64xf32>
    %c1_304 = arith.constant 1 : index
    %c0_305 = arith.constant 0 : index
    %c0_306 = arith.constant 0 : index
    %498 = vector.load %arg13[%c1_304, %c0_305, %c0_306] : memref<2x1x64xf32, #tpu.memory_space<vmem>>, vector<1x1x64xf32>
    %499 = vector.shape_cast %498 : vector<1x1x64xf32> to vector<1x64xf32>
    %500 = vector.broadcast %499 : vector<1x64xf32> to vector<16x64xf32>
    %501 = arith.addf %497, %500 : vector<16x64xf32>
    %502 = vector.extract_strided_slice %501 {offsets = [0, 0], sizes = [16, 32], strides = [1, 1]} : vector<16x64xf32> to vector<16x32xf32>
    %503 = vector.extract_strided_slice %502 {offsets = [0, 0], sizes = [16, 8], strides = [1, 1]} : vector<16x32xf32> to vector<16x8xf32>
    %504 = arith.truncf %503 : vector<16x8xf32> to vector<16x8xbf16>
    %c0_307 = arith.constant 0 : index
    %c0_308 = arith.constant 0 : index
    %c0_309 = arith.constant 0 : index
    %505 = vector.load %arg29[%c0_307, %c0_308, %c0_309] : memref<4x16x8xbf16, #tpu.memory_space<vmem>>, vector<1x16x8xbf16>
    %506 = vector.shape_cast %505 : vector<1x16x8xbf16> to vector<16x8xbf16>
    %507 = vector.shape_cast %504 : vector<16x8xbf16> to vector<1x16x8xbf16>
    tpu.vector_store %arg29[%c0_307, %c0_308, %c0_309], %507 {strides = array<i32>} : memref<4x16x8xbf16, #tpu.memory_space<vmem>>, vector<1x16x8xbf16>,
    %508 = vector.extract_strided_slice %502 {offsets = [0, 8], sizes = [16, 8], strides = [1, 1]} : vector<16x32xf32> to vector<16x8xf32>
    %509 = arith.truncf %508 : vector<16x8xf32> to vector<16x8xbf16>
    %c1_310 = arith.constant 1 : index
    %c0_311 = arith.constant 0 : index
    %c0_312 = arith.constant 0 : index
    %510 = vector.load %arg29[%c1_310, %c0_311, %c0_312] : memref<4x16x8xbf16, #tpu.memory_space<vmem>>, vector<1x16x8xbf16>
    %511 = vector.shape_cast %510 : vector<1x16x8xbf16> to vector<16x8xbf16>
    %512 = vector.shape_cast %509 : vector<16x8xbf16> to vector<1x16x8xbf16>
    tpu.vector_store %arg29[%c1_310, %c0_311, %c0_312], %512 {strides = array<i32>} : memref<4x16x8xbf16, #tpu.memory_space<vmem>>, vector<1x16x8xbf16>,
    %513 = vector.extract_strided_slice %502 {offsets = [0, 16], sizes = [16, 8], strides = [1, 1]} : vector<16x32xf32> to vector<16x8xf32>
    %514 = arith.truncf %513 : vector<16x8xf32> to vector<16x8xbf16>
    %c2_313 = arith.constant 2 : index
    %c0_314 = arith.constant 0 : index
    %c0_315 = arith.constant 0 : index
    %515 = vector.load %arg29[%c2_313, %c0_314, %c0_315] : memref<4x16x8xbf16, #tpu.memory_space<vmem>>, vector<1x16x8xbf16>
    %516 = vector.shape_cast %515 : vector<1x16x8xbf16> to vector<16x8xbf16>
    %517 = vector.shape_cast %514 : vector<16x8xbf16> to vector<1x16x8xbf16>
    tpu.vector_store %arg29[%c2_313, %c0_314, %c0_315], %517 {strides = array<i32>} : memref<4x16x8xbf16, #tpu.memory_space<vmem>>, vector<1x16x8xbf16>,
    %518 = vector.extract_strided_slice %502 {offsets = [0, 24], sizes = [16, 8], strides = [1, 1]} : vector<16x32xf32> to vector<16x8xf32>
    %519 = arith.truncf %518 : vector<16x8xf32> to vector<16x8xbf16>
    %c3_316 = arith.constant 3 : index
    %c0_317 = arith.constant 0 : index
    %c0_318 = arith.constant 0 : index
    %520 = vector.load %arg29[%c3_316, %c0_317, %c0_318] : memref<4x16x8xbf16, #tpu.memory_space<vmem>>, vector<1x16x8xbf16>
    %521 = vector.shape_cast %520 : vector<1x16x8xbf16> to vector<16x8xbf16>
    %522 = vector.shape_cast %519 : vector<16x8xbf16> to vector<1x16x8xbf16>
    tpu.vector_store %arg29[%c3_316, %c0_317, %c0_318], %522 {strides = array<i32>} : memref<4x16x8xbf16, #tpu.memory_space<vmem>>, vector<1x16x8xbf16>,
    %c0_319 = arith.constant 0 : index
    %c0_320 = arith.constant 0 : index
    %c0_321 = arith.constant 0 : index
    %523 = vector.load %arg29[%c0_319, %c0_320, %c0_321] : memref<4x16x8xbf16, #tpu.memory_space<vmem>>, vector<4x16x8xbf16>
    %524 = vector.extract_strided_slice %501 {offsets = [0, 32], sizes = [16, 32], strides = [1, 1]} : vector<16x64xf32> to vector<16x32xf32>
    %525 = vector.extract_strided_slice %524 {offsets = [0, 0], sizes = [16, 8], strides = [1, 1]} : vector<16x32xf32> to vector<16x8xf32>
    %526 = arith.truncf %525 : vector<16x8xf32> to vector<16x8xbf16>
    %c0_322 = arith.constant 0 : index
    %c0_323 = arith.constant 0 : index
    %c0_324 = arith.constant 0 : index
    %527 = vector.load %arg30[%c0_322, %c0_323, %c0_324] : memref<4x16x8xbf16, #tpu.memory_space<vmem>>, vector<1x16x8xbf16>
    %528 = vector.shape_cast %527 : vector<1x16x8xbf16> to vector<16x8xbf16>
    %529 = vector.shape_cast %526 : vector<16x8xbf16> to vector<1x16x8xbf16>
    tpu.vector_store %arg30[%c0_322, %c0_323, %c0_324], %529 {strides = array<i32>} : memref<4x16x8xbf16, #tpu.memory_space<vmem>>, vector<1x16x8xbf16>,
    %530 = vector.extract_strided_slice %524 {offsets = [0, 8], sizes = [16, 8], strides = [1, 1]} : vector<16x32xf32> to vector<16x8xf32>
    %531 = arith.truncf %530 : vector<16x8xf32> to vector<16x8xbf16>
    %c1_325 = arith.constant 1 : index
    %c0_326 = arith.constant 0 : index
    %c0_327 = arith.constant 0 : index
    %532 = vector.load %arg30[%c1_325, %c0_326, %c0_327] : memref<4x16x8xbf16, #tpu.memory_space<vmem>>, vector<1x16x8xbf16>
    %533 = vector.shape_cast %532 : vector<1x16x8xbf16> to vector<16x8xbf16>
    %534 = vector.shape_cast %531 : vector<16x8xbf16> to vector<1x16x8xbf16>
    tpu.vector_store %arg30[%c1_325, %c0_326, %c0_327], %534 {strides = array<i32>} : memref<4x16x8xbf16, #tpu.memory_space<vmem>>, vector<1x16x8xbf16>,
    %535 = vector.extract_strided_slice %524 {offsets = [0, 16], sizes = [16, 8], strides = [1, 1]} : vector<16x32xf32> to vector<16x8xf32>
    %536 = arith.truncf %535 : vector<16x8xf32> to vector<16x8xbf16>
    %c2_328 = arith.constant 2 : index
    %c0_329 = arith.constant 0 : index
    %c0_330 = arith.constant 0 : index
    %537 = vector.load %arg30[%c2_328, %c0_329, %c0_330] : memref<4x16x8xbf16, #tpu.memory_space<vmem>>, vector<1x16x8xbf16>
    %538 = vector.shape_cast %537 : vector<1x16x8xbf16> to vector<16x8xbf16>
    %539 = vector.shape_cast %536 : vector<16x8xbf16> to vector<1x16x8xbf16>
    tpu.vector_store %arg30[%c2_328, %c0_329, %c0_330], %539 {strides = array<i32>} : memref<4x16x8xbf16, #tpu.memory_space<vmem>>, vector<1x16x8xbf16>,
    %540 = vector.extract_strided_slice %524 {offsets = [0, 24], sizes = [16, 8], strides = [1, 1]} : vector<16x32xf32> to vector<16x8xf32>
    %541 = arith.truncf %540 : vector<16x8xf32> to vector<16x8xbf16>
    %c3_331 = arith.constant 3 : index
    %c0_332 = arith.constant 0 : index
    %c0_333 = arith.constant 0 : index
    %542 = vector.load %arg30[%c3_331, %c0_332, %c0_333] : memref<4x16x8xbf16, #tpu.memory_space<vmem>>, vector<1x16x8xbf16>
    %543 = vector.shape_cast %542 : vector<1x16x8xbf16> to vector<16x8xbf16>
    %544 = vector.shape_cast %541 : vector<16x8xbf16> to vector<1x16x8xbf16>
    tpu.vector_store %arg30[%c3_331, %c0_332, %c0_333], %544 {strides = array<i32>} : memref<4x16x8xbf16, #tpu.memory_space<vmem>>, vector<1x16x8xbf16>,
    %c0_334 = arith.constant 0 : index
    %c0_335 = arith.constant 0 : index
    %c0_336 = arith.constant 0 : index
    %545 = vector.load %arg30[%c0_334, %c0_335, %c0_336] : memref<4x16x8xbf16, #tpu.memory_space<vmem>>, vector<4x16x8xbf16>
    %c1_337 = arith.constant 1 : index
    %c0_338 = arith.constant 0 : index
    %c0_339 = arith.constant 0 : index
    %546 = vector.load %arg14[%c1_337, %c0_338, %c0_339] : memref<2x32x32xbf16, #tpu.memory_space<vmem>>, vector<1x32x32xbf16>
    %547 = vector.shape_cast %546 : vector<1x32x32xbf16> to vector<32x32xbf16>
    %c1_340 = arith.constant 1 : index
    %c0_341 = arith.constant 0 : index
    %c0_342 = arith.constant 0 : index
    %548 = vector.load %arg15[%c1_340, %c0_341, %c0_342] : memref<2x1x32xf32, #tpu.memory_space<vmem>>, vector<1x1x32xf32>
    %549 = vector.shape_cast %548 : vector<1x1x32xf32> to vector<1x32xf32>
    %550 = vector.extract_strided_slice %494 {offsets = [0, 0], sizes = [8, 8], strides = [1, 1]} : vector<8x32xf32> to vector<8x8xf32>
    %551 = arith.truncf %550 : vector<8x8xf32> to vector<8x8xbf16>
    %c0_343 = arith.constant 0 : index
    %c0_344 = arith.constant 0 : index
    %c0_345 = arith.constant 0 : index
    %552 = vector.load %arg26[%c0_343, %c0_344, %c0_345] : memref<4x8x8xbf16, #tpu.memory_space<vmem>>, vector<1x8x8xbf16>
    %553 = vector.shape_cast %552 : vector<1x8x8xbf16> to vector<8x8xbf16>
    %554 = vector.shape_cast %551 : vector<8x8xbf16> to vector<1x8x8xbf16>
    tpu.vector_store %arg26[%c0_343, %c0_344, %c0_345], %554 {strides = array<i32>} : memref<4x8x8xbf16, #tpu.memory_space<vmem>>, vector<1x8x8xbf16>,
    %555 = vector.extract_strided_slice %494 {offsets = [0, 8], sizes = [8, 8], strides = [1, 1]} : vector<8x32xf32> to vector<8x8xf32>
    %556 = arith.truncf %555 : vector<8x8xf32> to vector<8x8xbf16>
    %c1_346 = arith.constant 1 : index
    %c0_347 = arith.constant 0 : index
    %c0_348 = arith.constant 0 : index
    %557 = vector.load %arg26[%c1_346, %c0_347, %c0_348] : memref<4x8x8xbf16, #tpu.memory_space<vmem>>, vector<1x8x8xbf16>
    %558 = vector.shape_cast %557 : vector<1x8x8xbf16> to vector<8x8xbf16>
    %559 = vector.shape_cast %556 : vector<8x8xbf16> to vector<1x8x8xbf16>
    tpu.vector_store %arg26[%c1_346, %c0_347, %c0_348], %559 {strides = array<i32>} : memref<4x8x8xbf16, #tpu.memory_space<vmem>>, vector<1x8x8xbf16>,
    %560 = vector.extract_strided_slice %494 {offsets = [0, 16], sizes = [8, 8], strides = [1, 1]} : vector<8x32xf32> to vector<8x8xf32>
    %561 = arith.truncf %560 : vector<8x8xf32> to vector<8x8xbf16>
    %c2_349 = arith.constant 2 : index
    %c0_350 = arith.constant 0 : index
    %c0_351 = arith.constant 0 : index
    %562 = vector.load %arg26[%c2_349, %c0_350, %c0_351] : memref<4x8x8xbf16, #tpu.memory_space<vmem>>, vector<1x8x8xbf16>
    %563 = vector.shape_cast %562 : vector<1x8x8xbf16> to vector<8x8xbf16>
    %564 = vector.shape_cast %561 : vector<8x8xbf16> to vector<1x8x8xbf16>
    tpu.vector_store %arg26[%c2_349, %c0_350, %c0_351], %564 {strides = array<i32>} : memref<4x8x8xbf16, #tpu.memory_space<vmem>>, vector<1x8x8xbf16>,
    %565 = vector.extract_strided_slice %494 {offsets = [0, 24], sizes = [8, 8], strides = [1, 1]} : vector<8x32xf32> to vector<8x8xf32>
    %566 = arith.truncf %565 : vector<8x8xf32> to vector<8x8xbf16>
    %c3_352 = arith.constant 3 : index
    %c0_353 = arith.constant 0 : index
    %c0_354 = arith.constant 0 : index
    %567 = vector.load %arg26[%c3_352, %c0_353, %c0_354] : memref<4x8x8xbf16, #tpu.memory_space<vmem>>, vector<1x8x8xbf16>
    %568 = vector.shape_cast %567 : vector<1x8x8xbf16> to vector<8x8xbf16>
    %569 = vector.shape_cast %566 : vector<8x8xbf16> to vector<1x8x8xbf16>
    tpu.vector_store %arg26[%c3_352, %c0_353, %c0_354], %569 {strides = array<i32>} : memref<4x8x8xbf16, #tpu.memory_space<vmem>>, vector<1x8x8xbf16>,
    %c0_355 = arith.constant 0 : index
    %c0_356 = arith.constant 0 : index
    %c0_357 = arith.constant 0 : index
    %570 = vector.load %arg26[%c0_355, %c0_356, %c0_357] : memref<4x8x8xbf16, #tpu.memory_space<vmem>>, vector<4x8x8xbf16>
    "tpu.trace_start"() <{level = 10 : i32, message = "hqd,hkd->hqk"}> : () -> ()
    %cst_358 = arith.constant dense<0.000000e+00> : vector<4x8x16xf32>
    %571 = tpu.matmul %570, %523, %cst_358 {dimension_numbers = #tpu.dot_dimension_numbers<[2], [2], [1], [1], [0, 0, 0, 1, 1, 1], [0], [0]>} : vector<4x8x8xbf16>, vector<4x16x8xbf16>, vector<4x8x16xf32> -> vector<4x8x16xf32>
    "tpu.trace_stop"() : () -> ()
    %cst_359 = arith.constant dense<0xFF800000> : vector<4x8xf32>
    %572 = vector.multi_reduction <maximumf>, %571, %cst_359 [2] : vector<4x8x16xf32> to vector<4x8xf32>
    %573 = vector.shape_cast %572 : vector<4x8xf32> to vector<4x8x1xf32>
    %574 = vector.broadcast %573 : vector<4x8x1xf32> to vector<4x8x16xf32>
    %575 = arith.subf %571, %574 : vector<4x8x16xf32>
    %576 = math.exp %575 : vector<4x8x16xf32>
    %cst_360 = arith.constant dense<0.000000e+00> : vector<4x8xf32>
    %577 = vector.multi_reduction <add>, %576, %cst_360 [2] : vector<4x8x16xf32> to vector<4x8xf32>
    %578 = vector.shape_cast %577 : vector<4x8xf32> to vector<4x8x1xf32>
    %579 = vector.broadcast %578 : vector<4x8x1xf32> to vector<4x8x16xf32>
    %580 = arith.divf %576, %579 : vector<4x8x16xf32>
    %c1_361 = arith.constant 1 : index
    %c0_362 = arith.constant 0 : index
    %c0_363 = arith.constant 0 : index
    %c0_364 = arith.constant 0 : index
    %c0_365 = arith.constant 0 : index
    %581 = vector.load %arg25[%c1_361, %c0_362, %c0_363, %c0_364, %c0_365] : memref<2x1x4x8x16xf32, #tpu.memory_space<vmem>>, vector<1x1x4x8x16xf32>
    %582 = vector.shape_cast %581 : vector<1x1x4x8x16xf32> to vector<4x8x16xf32>
    %583 = vector.shape_cast %580 : vector<4x8x16xf32> to vector<1x1x4x8x16xf32>
    tpu.vector_store %arg25[%c1_361, %c0_362, %c0_363, %c0_364, %c0_365], %583 {strides = array<i32>} : memref<2x1x4x8x16xf32, #tpu.memory_space<vmem>>, vector<1x1x4x8x16xf32>,
    %584 = arith.truncf %580 : vector<4x8x16xf32> to vector<4x8x16xbf16>
    "tpu.trace_start"() <{level = 10 : i32, message = "hqk,hkd->hqd"}> : () -> ()
    %cst_366 = arith.constant dense<0.000000e+00> : vector<4x8x8xf32>
    %585 = tpu.matmul %584, %545, %cst_366 {dimension_numbers = #tpu.dot_dimension_numbers<[2], [1], [1], [2], [0, 0, 0, 1, 1, 2], [0], [0]>} : vector<4x8x16xbf16>, vector<4x16x8xbf16>, vector<4x8x8xf32> -> vector<4x8x8xf32>
    "tpu.trace_stop"() : () -> ()
    %586 = vector.extract_strided_slice %585 {offsets = [0, 0, 0], sizes = [1, 8, 8], strides = [1, 1, 1]} : vector<4x8x8xf32> to vector<1x8x8xf32>
    %587 = vector.shape_cast %586 : vector<1x8x8xf32> to vector<8x8xf32>
    %588 = arith.truncf %587 : vector<8x8xf32> to vector<8x8xbf16>
    %c0_367 = arith.constant 0 : index
    %c0_368 = arith.constant 0 : index
    %589 = vector.load %arg31[%c0_367, %c0_368] : memref<8x32xbf16, #tpu.memory_space<vmem>>, vector<8x8xbf16>
    tpu.vector_store %arg31[%c0_367, %c0_368], %588 {strides = array<i32>} : memref<8x32xbf16, #tpu.memory_space<vmem>>, vector<8x8xbf16>,
    %590 = vector.extract_strided_slice %585 {offsets = [1, 0, 0], sizes = [1, 8, 8], strides = [1, 1, 1]} : vector<4x8x8xf32> to vector<1x8x8xf32>
    %591 = vector.shape_cast %590 : vector<1x8x8xf32> to vector<8x8xf32>
    %592 = arith.truncf %591 : vector<8x8xf32> to vector<8x8xbf16>
    %c0_369 = arith.constant 0 : index
    %c8_370 = arith.constant 8 : index
    %593 = vector.load %arg31[%c0_369, %c8_370] : memref<8x32xbf16, #tpu.memory_space<vmem>>, vector<8x8xbf16>
    tpu.vector_store %arg31[%c0_369, %c8_370], %592 {strides = array<i32>} : memref<8x32xbf16, #tpu.memory_space<vmem>>, vector<8x8xbf16>,
    %594 = vector.extract_strided_slice %585 {offsets = [2, 0, 0], sizes = [1, 8, 8], strides = [1, 1, 1]} : vector<4x8x8xf32> to vector<1x8x8xf32>
    %595 = vector.shape_cast %594 : vector<1x8x8xf32> to vector<8x8xf32>
    %596 = arith.truncf %595 : vector<8x8xf32> to vector<8x8xbf16>
    %c0_371 = arith.constant 0 : index
    %c16_372 = arith.constant 16 : index
    %597 = vector.load %arg31[%c0_371, %c16_372] : memref<8x32xbf16, #tpu.memory_space<vmem>>, vector<8x8xbf16>
    tpu.vector_store %arg31[%c0_371, %c16_372], %596 {strides = array<i32>} : memref<8x32xbf16, #tpu.memory_space<vmem>>, vector<8x8xbf16>,
    %598 = vector.extract_strided_slice %585 {offsets = [3, 0, 0], sizes = [1, 8, 8], strides = [1, 1, 1]} : vector<4x8x8xf32> to vector<1x8x8xf32>
    %599 = vector.shape_cast %598 : vector<1x8x8xf32> to vector<8x8xf32>
    %600 = arith.truncf %599 : vector<8x8xf32> to vector<8x8xbf16>
    %c0_373 = arith.constant 0 : index
    %c24_374 = arith.constant 24 : index
    %601 = vector.load %arg31[%c0_373, %c24_374] : memref<8x32xbf16, #tpu.memory_space<vmem>>, vector<8x8xbf16>
    tpu.vector_store %arg31[%c0_373, %c24_374], %600 {strides = array<i32>} : memref<8x32xbf16, #tpu.memory_space<vmem>>, vector<8x8xbf16>,
    %c0_375 = arith.constant 0 : index
    %c0_376 = arith.constant 0 : index
    %602 = vector.load %arg31[%c0_375, %c0_376] : memref<8x32xbf16, #tpu.memory_space<vmem>>, vector<8x32xbf16>
    %cst_377 = arith.constant dense<0.000000e+00> : vector<8x32xf32>
    %603 = tpu.matmul %602, %547, %cst_377 {dimension_numbers = #tpu.dot_dimension_numbers<[1], [0], [0], [1], [0, 0, 1, 1], [], []>} : vector<8x32xbf16>, vector<32x32xbf16>, vector<8x32xf32> -> vector<8x32xf32>
    %604 = vector.broadcast %549 : vector<1x32xf32> to vector<8x32xf32>
    %605 = arith.addf %603, %604 : vector<8x32xf32>
    %606 = arith.addf %486, %605 : vector<8x32xf32>
    %c1_378 = arith.constant 1 : index
    %c0_379 = arith.constant 0 : index
    %c0_380 = arith.constant 0 : index
    %607 = vector.load %arg16[%c1_378, %c0_379, %c0_380] : memref<2x1x32xf32, #tpu.memory_space<vmem>>, vector<1x1x32xf32>
    %608 = vector.shape_cast %607 : vector<1x1x32xf32> to vector<1x32xf32>
    %c1_381 = arith.constant 1 : index
    %c0_382 = arith.constant 0 : index
    %c0_383 = arith.constant 0 : index
    %609 = vector.load %arg17[%c1_381, %c0_382, %c0_383] : memref<2x1x32xf32, #tpu.memory_space<vmem>>, vector<1x1x32xf32>
    %610 = vector.shape_cast %609 : vector<1x1x32xf32> to vector<1x32xf32>
    %cst_384 = arith.constant dense<0.000000e+00> : vector<8xf32>
    %611 = vector.multi_reduction <add>, %606, %cst_384 [1] : vector<8x32xf32> to vector<8xf32>
    %612 = vector.shape_cast %611 : vector<8xf32> to vector<8x1xf32>
    %cst_385 = arith.constant 3.200000e+01 : f32
    %613 = vector.broadcast %cst_385 : f32 to vector<8x1xf32>
    %614 = arith.divf %612, %613 : vector<8x1xf32>
    %615 = arith.mulf %606, %606 : vector<8x32xf32>
    %cst_386 = arith.constant dense<0.000000e+00> : vector<8xf32>
    %616 = vector.multi_reduction <add>, %615, %cst_386 [1] : vector<8x32xf32> to vector<8xf32>
    %617 = vector.shape_cast %616 : vector<8xf32> to vector<8x1xf32>
    %cst_387 = arith.constant 3.200000e+01 : f32
    %618 = vector.broadcast %cst_387 : f32 to vector<8x1xf32>
    %619 = arith.divf %617, %618 : vector<8x1xf32>
    %620 = arith.mulf %614, %614 : vector<8x1xf32>
    %621 = arith.subf %619, %620 : vector<8x1xf32>
    %622 = vector.broadcast %614 : vector<8x1xf32> to vector<8x32xf32>
    %623 = arith.subf %606, %622 : vector<8x32xf32>
    %cst_388 = arith.constant 9.99999974E-6 : f32
    %624 = vector.broadcast %cst_388 : f32 to vector<8x1xf32>
    %625 = arith.addf %621, %624 : vector<8x1xf32>
    %626 = math.rsqrt %625 : vector<8x1xf32>
    %627 = vector.broadcast %626 : vector<8x1xf32> to vector<8x32xf32>
    %628 = arith.mulf %623, %627 : vector<8x32xf32>
    %629 = vector.broadcast %608 : vector<1x32xf32> to vector<8x32xf32>
    %630 = arith.mulf %628, %629 : vector<8x32xf32>
    %631 = vector.broadcast %610 : vector<1x32xf32> to vector<8x32xf32>
    %632 = arith.addf %630, %631 : vector<8x32xf32>
    %633 = arith.truncf %632 : vector<8x32xf32> to vector<8x32xbf16>
    %c1_389 = arith.constant 1 : index
    %c0_390 = arith.constant 0 : index
    %c0_391 = arith.constant 0 : index
    %634 = vector.load %arg18[%c1_389, %c0_390, %c0_391] : memref<2x32x64xbf16, #tpu.memory_space<vmem>>, vector<1x32x64xbf16>
    %635 = vector.shape_cast %634 : vector<1x32x64xbf16> to vector<32x64xbf16>
    %cst_392 = arith.constant dense<0.000000e+00> : vector<8x64xf32>
    %636 = tpu.matmul %633, %635, %cst_392 {dimension_numbers = #tpu.dot_dimension_numbers<[1], [0], [0], [1], [0, 0, 1, 1], [], []>} : vector<8x32xbf16>, vector<32x64xbf16>, vector<8x64xf32> -> vector<8x64xf32>
    %c1_393 = arith.constant 1 : index
    %c0_394 = arith.constant 0 : index
    %c0_395 = arith.constant 0 : index
    %637 = vector.load %arg19[%c1_393, %c0_394, %c0_395] : memref<2x1x64xf32, #tpu.memory_space<vmem>>, vector<1x1x64xf32>
    %638 = vector.shape_cast %637 : vector<1x1x64xf32> to vector<1x64xf32>
    %639 = vector.broadcast %638 : vector<1x64xf32> to vector<8x64xf32>
    %640 = arith.addf %636, %639 : vector<8x64xf32>
    %cst_396 = arith.constant 0.000000e+00 : f32
    %641 = vector.broadcast %cst_396 : f32 to vector<8x64xf32>
    %642 = arith.maximumf %640, %641 : vector<8x64xf32>
    %643 = arith.truncf %642 : vector<8x64xf32> to vector<8x64xbf16>
    %c1_397 = arith.constant 1 : index
    %c0_398 = arith.constant 0 : index
    %c0_399 = arith.constant 0 : index
    %644 = vector.load %arg20[%c1_397, %c0_398, %c0_399] : memref<2x64x32xbf16, #tpu.memory_space<vmem>>, vector<1x64x32xbf16>
    %645 = vector.shape_cast %644 : vector<1x64x32xbf16> to vector<64x32xbf16>
    %cst_400 = arith.constant dense<0.000000e+00> : vector<8x32xf32>
    %646 = tpu.matmul %643, %645, %cst_400 {dimension_numbers = #tpu.dot_dimension_numbers<[1], [0], [0], [1], [0, 0, 1, 1], [], []>} : vector<8x64xbf16>, vector<64x32xbf16>, vector<8x32xf32> -> vector<8x32xf32>
    %c1_401 = arith.constant 1 : index
    %c0_402 = arith.constant 0 : index
    %c0_403 = arith.constant 0 : index
    %647 = vector.load %arg21[%c1_401, %c0_402, %c0_403] : memref<2x1x32xf32, #tpu.memory_space<vmem>>, vector<1x1x32xf32>
    %648 = vector.shape_cast %647 : vector<1x1x32xf32> to vector<1x32xf32>
    %649 = vector.broadcast %648 : vector<1x32xf32> to vector<8x32xf32>
    %650 = arith.addf %646, %649 : vector<8x32xf32>
    %651 = arith.addf %632, %650 : vector<8x32xf32>
    %c1_404 = arith.constant 1 : index
    %c0_405 = arith.constant 0 : index
    %c0_406 = arith.constant 0 : index
    %652 = vector.load %arg22[%c1_404, %c0_405, %c0_406] : memref<2x1x32xf32, #tpu.memory_space<vmem>>, vector<1x1x32xf32>
    %653 = vector.shape_cast %652 : vector<1x1x32xf32> to vector<1x32xf32>
    %c1_407 = arith.constant 1 : index
    %c0_408 = arith.constant 0 : index
    %c0_409 = arith.constant 0 : index
    %654 = vector.load %arg23[%c1_407, %c0_408, %c0_409] : memref<2x1x32xf32, #tpu.memory_space<vmem>>, vector<1x1x32xf32>
    %655 = vector.shape_cast %654 : vector<1x1x32xf32> to vector<1x32xf32>
    %cst_410 = arith.constant dense<0.000000e+00> : vector<8xf32>
    %656 = vector.multi_reduction <add>, %651, %cst_410 [1] : vector<8x32xf32> to vector<8xf32>
    %657 = vector.shape_cast %656 : vector<8xf32> to vector<8x1xf32>
    %cst_411 = arith.constant 3.200000e+01 : f32
    %658 = vector.broadcast %cst_411 : f32 to vector<8x1xf32>
    %659 = arith.divf %657, %658 : vector<8x1xf32>
    %660 = arith.mulf %651, %651 : vector<8x32xf32>
    %cst_412 = arith.constant dense<0.000000e+00> : vector<8xf32>
    %661 = vector.multi_reduction <add>, %660, %cst_412 [1] : vector<8x32xf32> to vector<8xf32>
    %662 = vector.shape_cast %661 : vector<8xf32> to vector<8x1xf32>
    %cst_413 = arith.constant 3.200000e+01 : f32
    %663 = vector.broadcast %cst_413 : f32 to vector<8x1xf32>
    %664 = arith.divf %662, %663 : vector<8x1xf32>
    %665 = arith.mulf %659, %659 : vector<8x1xf32>
    %666 = arith.subf %664, %665 : vector<8x1xf32>
    %667 = vector.broadcast %659 : vector<8x1xf32> to vector<8x32xf32>
    %668 = arith.subf %651, %667 : vector<8x32xf32>
    %cst_414 = arith.constant 9.99999974E-6 : f32
    %669 = vector.broadcast %cst_414 : f32 to vector<8x1xf32>
    %670 = arith.addf %666, %669 : vector<8x1xf32>
    %671 = math.rsqrt %670 : vector<8x1xf32>
    %672 = vector.broadcast %671 : vector<8x1xf32> to vector<8x32xf32>
    %673 = arith.mulf %668, %672 : vector<8x32xf32>
    %674 = vector.broadcast %653 : vector<1x32xf32> to vector<8x32xf32>
    %675 = arith.mulf %673, %674 : vector<8x32xf32>
    %676 = vector.broadcast %655 : vector<1x32xf32> to vector<8x32xf32>
    %677 = arith.addf %675, %676 : vector<8x32xf32>
    %c0_415 = arith.constant 0 : index
    %c0_416 = arith.constant 0 : index
    %c0_417 = arith.constant 0 : index
    %678 = vector.load %arg24[%c0_415, %c0_416, %c0_417] : memref<1x8x32xf32, #tpu.memory_space<vmem>>, vector<1x8x32xf32>
    %679 = vector.shape_cast %678 : vector<1x8x32xf32> to vector<8x32xf32>
    %680 = vector.shape_cast %677 : vector<8x32xf32> to vector<1x8x32xf32>
    tpu.vector_store %arg24[%c0_415, %c0_416, %c0_417], %680 {strides = array<i32>} : memref<1x8x32xf32, #tpu.memory_space<vmem>>, vector<1x8x32xf32>,
    return
  }
  func.func @transform_0(%arg0: i32) -> (i32, i32, i32) {
    %c0_i32 = arith.constant 0 : i32
    %c0_i32_0 = arith.constant 0 : i32
    %c0_i32_1 = arith.constant 0 : i32
    return %arg0, %c0_i32, %c0_i32_0 : i32, i32, i32
  }
  func.func @transform_1(%arg0: i32) -> (i32, i32, i32) {
    %c0_i32 = arith.constant 0 : i32
    %c0_i32_0 = arith.constant 0 : i32
    %c0_i32_1 = arith.constant 0 : i32
    return %arg0, %c0_i32, %c0_i32_0 : i32, i32, i32
  }
  func.func @transform_2(%arg0: i32) -> (i32, i32, i32) {
    %c0_i32 = arith.constant 0 : i32
    %c0_i32_0 = arith.constant 0 : i32
    %c0_i32_1 = arith.constant 0 : i32
    return %arg0, %c0_i32, %c0_i32_0 : i32, i32, i32
  }
  func.func @transform_3(%arg0: i32) -> (i32, i32, i32) {
    %c0_i32 = arith.constant 0 : i32
    %c0_i32_0 = arith.constant 0 : i32
    %c0_i32_1 = arith.constant 0 : i32
    %c0_i32_2 = arith.constant 0 : i32
    return %c0_i32, %c0_i32_0, %c0_i32_1 : i32, i32, i32
  }
  func.func @transform_4(%arg0: i32) -> (i32, i32, i32) {
    %c0_i32 = arith.constant 0 : i32
    %c0_i32_0 = arith.constant 0 : i32
    %c0_i32_1 = arith.constant 0 : i32
    %c0_i32_2 = arith.constant 0 : i32
    return %c0_i32, %c0_i32_0, %c0_i32_1 : i32, i32, i32
  }
  func.func @transform_5(%arg0: i32) -> (i32, i32, i32) {
    %c0_i32 = arith.constant 0 : i32
    %c0_i32_0 = arith.constant 0 : i32
    %c0_i32_1 = arith.constant 0 : i32
    %c0_i32_2 = arith.constant 0 : i32
    return %c0_i32, %c0_i32_0, %c0_i32_1 : i32, i32, i32
  }
  func.func @transform_6(%arg0: i32) -> (i32, i32, i32) {
    %c0_i32 = arith.constant 0 : i32
    %c0_i32_0 = arith.constant 0 : i32
    %c0_i32_1 = arith.constant 0 : i32
    %c0_i32_2 = arith.constant 0 : i32
    return %c0_i32, %c0_i32_0, %c0_i32_1 : i32, i32, i32
  }
  func.func @transform_7(%arg0: i32) -> (i32, i32, i32) {
    %c0_i32 = arith.constant 0 : i32
    %c0_i32_0 = arith.constant 0 : i32
    %c0_i32_1 = arith.constant 0 : i32
    %c0_i32_2 = arith.constant 0 : i32
    return %c0_i32, %c0_i32_0, %c0_i32_1 : i32, i32, i32
  }
  func.func @transform_8(%arg0: i32) -> (i32, i32, i32) {
    %c0_i32 = arith.constant 0 : i32
    %c0_i32_0 = arith.constant 0 : i32
    %c0_i32_1 = arith.constant 0 : i32
    %c0_i32_2 = arith.constant 0 : i32
    return %c0_i32, %c0_i32_0, %c0_i32_1 : i32, i32, i32
  }
  func.func @transform_9(%arg0: i32) -> (i32, i32, i32) {
    %c0_i32 = arith.constant 0 : i32
    %c0_i32_0 = arith.constant 0 : i32
    %c0_i32_1 = arith.constant 0 : i32
    %c0_i32_2 = arith.constant 0 : i32
    return %c0_i32, %c0_i32_0, %c0_i32_1 : i32, i32, i32
  }
  func.func @transform_10(%arg0: i32) -> (i32, i32, i32) {
    %c0_i32 = arith.constant 0 : i32
    %c0_i32_0 = arith.constant 0 : i32
    %c0_i32_1 = arith.constant 0 : i32
    %c0_i32_2 = arith.constant 0 : i32
    return %c0_i32, %c0_i32_0, %c0_i32_1 : i32, i32, i32
  }
  func.func @transform_11(%arg0: i32) -> (i32, i32, i32) {
    %c0_i32 = arith.constant 0 : i32
    %c0_i32_0 = arith.constant 0 : i32
    %c0_i32_1 = arith.constant 0 : i32
    %c0_i32_2 = arith.constant 0 : i32
    return %c0_i32, %c0_i32_0, %c0_i32_1 : i32, i32, i32
  }
  func.func @transform_12(%arg0: i32) -> (i32, i32, i32) {
    %c0_i32 = arith.constant 0 : i32
    %c0_i32_0 = arith.constant 0 : i32
    %c0_i32_1 = arith.constant 0 : i32
    %c0_i32_2 = arith.constant 0 : i32
    return %c0_i32, %c0_i32_0, %c0_i32_1 : i32, i32, i32
  }
  func.func @transform_13(%arg0: i32) -> (i32, i32, i32) {
    %c0_i32 = arith.constant 0 : i32
    %c0_i32_0 = arith.constant 0 : i32
    %c0_i32_1 = arith.constant 0 : i32
    %c0_i32_2 = arith.constant 0 : i32
    return %c0_i32, %c0_i32_0, %c0_i32_1 : i32, i32, i32
  }
  func.func @transform_14(%arg0: i32) -> (i32, i32, i32) {
    %c0_i32 = arith.constant 0 : i32
    %c0_i32_0 = arith.constant 0 : i32
    %c0_i32_1 = arith.constant 0 : i32
    %c0_i32_2 = arith.constant 0 : i32
    return %c0_i32, %c0_i32_0, %c0_i32_1 : i32, i32, i32
  }
  func.func @transform_15(%arg0: i32) -> (i32, i32, i32) {
    %c0_i32 = arith.constant 0 : i32
    %c0_i32_0 = arith.constant 0 : i32
    %c0_i32_1 = arith.constant 0 : i32
    %c0_i32_2 = arith.constant 0 : i32
    return %c0_i32, %c0_i32_0, %c0_i32_1 : i32, i32, i32
  }
  func.func @transform_16(%arg0: i32) -> (i32, i32, i32) {
    %c0_i32 = arith.constant 0 : i32
    %c0_i32_0 = arith.constant 0 : i32
    %c0_i32_1 = arith.constant 0 : i32
    %c0_i32_2 = arith.constant 0 : i32
    return %c0_i32, %c0_i32_0, %c0_i32_1 : i32, i32, i32
  }
  func.func @transform_17(%arg0: i32) -> (i32, i32, i32) {
    %c0_i32 = arith.constant 0 : i32
    %c0_i32_0 = arith.constant 0 : i32
    %c0_i32_1 = arith.constant 0 : i32
    %c0_i32_2 = arith.constant 0 : i32
    return %c0_i32, %c0_i32_0, %c0_i32_1 : i32, i32, i32
  }
  func.func @transform_18(%arg0: i32) -> (i32, i32, i32) {
    %c0_i32 = arith.constant 0 : i32
    %c0_i32_0 = arith.constant 0 : i32
    %c0_i32_1 = arith.constant 0 : i32
    %c0_i32_2 = arith.constant 0 : i32
    return %c0_i32, %c0_i32_0, %c0_i32_1 : i32, i32, i32
  }
  func.func @transform_19(%arg0: i32) -> (i32, i32, i32) {
    %c0_i32 = arith.constant 0 : i32
    %c0_i32_0 = arith.constant 0 : i32
    %c0_i32_1 = arith.constant 0 : i32
    %c0_i32_2 = arith.constant 0 : i32
    return %c0_i32, %c0_i32_0, %c0_i32_1 : i32, i32, i32
  }
  func.func @transform_20(%arg0: i32) -> (i32, i32, i32) {
    %c0_i32 = arith.constant 0 : i32
    %c0_i32_0 = arith.constant 0 : i32
    %c0_i32_1 = arith.constant 0 : i32
    %c0_i32_2 = arith.constant 0 : i32
    return %c0_i32, %c0_i32_0, %c0_i32_1 : i32, i32, i32
  }
  func.func @transform_21(%arg0: i32) -> (i32, i32, i32) {
    %c0_i32 = arith.constant 0 : i32
    %c0_i32_0 = arith.constant 0 : i32
    %c0_i32_1 = arith.constant 0 : i32
    %c0_i32_2 = arith.constant 0 : i32
    return %c0_i32, %c0_i32_0, %c0_i32_1 : i32, i32, i32
  }
  func.func @transform_22(%arg0: i32) -> (i32, i32, i32) {
    %c0_i32 = arith.constant 0 : i32
    %c0_i32_0 = arith.constant 0 : i32
    %c0_i32_1 = arith.constant 0 : i32
    %c0_i32_2 = arith.constant 0 : i32
    return %c0_i32, %c0_i32_0, %c0_i32_1 : i32, i32, i32
  }
  func.func @transform_23(%arg0: i32) -> (i32, i32, i32) {
    %c0_i32 = arith.constant 0 : i32
    %c0_i32_0 = arith.constant 0 : i32
    %c0_i32_1 = arith.constant 0 : i32
    return %arg0, %c0_i32, %c0_i32_0 : i32, i32, i32
  }
  func.func @transform_24(%arg0: i32) -> (i32, i32, i32, i32, i32) {
    %c0_i32 = arith.constant 0 : i32
    %c0_i32_0 = arith.constant 0 : i32
    %c0_i32_1 = arith.constant 0 : i32
    %c0_i32_2 = arith.constant 0 : i32
    %c0_i32_3 = arith.constant 0 : i32
    return %c0_i32, %arg0, %c0_i32_0, %c0_i32_1, %c0_i32_2 : i32, i32, i32, i32, i32
  }
}

</mosaic_0001>

<llo_original>
// kernel: _lambda_.1
$region0: #{_lambda_.1}
  #allocation0 [shape = 'u32[]', space=smem, size = 0x4, offset = 0x4, fixed_abs, tag = 'smem constant byte address 0x4 - core index']
  #allocation1 [shape = 'u32[144,128]{1,0:T(1,128)}', space=vmem, size = 0x12000, scoped, tag = 'internal scratch']
  #allocation2 [shape = 'bf16[4,8,8]{2,1,0:T(8,128)(2,1)}', space=vmem, size = 0x2000, scoped, tag = 'scratch operand']
  #allocation3 [shape = 'bf16[4,8,8]{2,1,0:T(8,128)(2,1)}', space=vmem, size = 0x2000, scoped, tag = 'scratch operand']
  #allocation4 [shape = 'bf16[4,8,8]{2,1,0:T(8,128)(2,1)}', space=vmem, size = 0x2000, scoped, tag = 'scratch operand']
  #allocation5 [shape = 'bf16[4,16,8]{2,1,0:T(8,128)(2,1)}', space=vmem, size = 0x4000, scoped, tag = 'scratch operand']
  #allocation6 [shape = 'bf16[4,16,8]{2,1,0:T(8,128)(2,1)}', space=vmem, size = 0x4000, scoped, tag = 'scratch operand']
  #allocation7 [shape = 'bf16[8,32]{1,0:T(8,128)(2,1)}', space=vmem, size = 0x800, scoped, tag = 'scratch operand']
  #allocation10 [shape = 's32[]', space=sflag, size = 0x4, offset = 0, fixed_abs, tag = 'sflag constant byte address 0x0 - dummy sync flag']
  %s0 = inlined_call_operand.vmem [shape: f32[2,8,32], index: 0, kind: input, shape index: {}]
  %s1 = inlined_call_operand.vmem [shape: f32[2,16,32], index: 1, kind: input, shape index: {}]
  %s2 = inlined_call_operand.vmem [shape: f32[2,1,8], index: 2, kind: input, shape index: {}]
  %s3 = inlined_call_operand.vmem [shape: bf16[2,32,96], index: 3, kind: input, shape index: {}]
  %s4 = inlined_call_operand.vmem [shape: f32[2,1,96], index: 4, kind: input, shape index: {}]
  %s5 = inlined_call_operand.vmem [shape: bf16[2,32,32], index: 5, kind: input, shape index: {}]
  %s6 = inlined_call_operand.vmem [shape: f32[2,1,32], index: 6, kind: input, shape index: {}]
  %s7 = inlined_call_operand.vmem [shape: f32[2,1,32], index: 7, kind: input, shape index: {}]
  %s8 = inlined_call_operand.vmem [shape: f32[2,1,32], index: 8, kind: input, shape index: {}]
  %s9 = inlined_call_operand.vmem [shape: bf16[2,32,32], index: 9, kind: input, shape index: {}]
  %s10 = inlined_call_operand.vmem [shape: f32[2,1,32], index: 10, kind: input, shape index: {}]
  %s11 = inlined_call_operand.vmem [shape: bf16[2,32,64], index: 11, kind: input, shape index: {}]
  %s12 = inlined_call_operand.vmem [shape: f32[2,1,64], index: 12, kind: input, shape index: {}]
  %s13 = inlined_call_operand.vmem [shape: bf16[2,32,32], index: 13, kind: input, shape index: {}]
  %s14 = inlined_call_operand.vmem [shape: f32[2,1,32], index: 14, kind: input, shape index: {}]
  %s15 = inlined_call_operand.vmem [shape: f32[2,1,32], index: 15, kind: input, shape index: {}]
  %s16 = inlined_call_operand.vmem [shape: f32[2,1,32], index: 16, kind: input, shape index: {}]
  %s17 = inlined_call_operand.vmem [shape: bf16[2,32,64], index: 17, kind: input, shape index: {}]
  %s18 = inlined_call_operand.vmem [shape: f32[2,1,64], index: 18, kind: input, shape index: {}]
  %s19 = inlined_call_operand.vmem [shape: bf16[2,64,32], index: 19, kind: input, shape index: {}]
  %s20 = inlined_call_operand.vmem [shape: f32[2,1,32], index: 20, kind: input, shape index: {}]
  %s21 = inlined_call_operand.vmem [shape: f32[2,1,32], index: 21, kind: input, shape index: {}]
  %s22 = inlined_call_operand.vmem [shape: f32[2,1,32], index: 22, kind: input, shape index: {}]
  %s23 = inlined_call_operand.vmem [shape: f32[2,8,32], index: 23, kind: output, shape index: {0}]
  %s24 = inlined_call_operand.hbm [shape: f32[2,2,4,8,16], index: 24, kind: output, shape index: {1}]
  %25 = xla_tuple %s23, %s24
  %s26 = sld [smem:[#allocation0]]
  $region133: #{_lambda_.1} parent=0
    _
  %s28 = ssub.s32 1, %s26
  %s29 = scalar_select 0, %s28, %s26
  $region1: #{_lambda_.1} parent=0
    #allocation8 [shape = 'u8[65536]{0}', space=vmem, size = 0x10000, scoped, tag = 'output window, operand 1']
    #allocation9 [shape = 's32[2]{0}', space=sflag, size = 0x8, scoped, tag = 'scoped memory for _lambda_.1']
    %30 = vsyncpa [#allocation9], 0
    %s31 = scalar_lea.sflag [#allocation9], 1
    %32 = vsyncpa %s31, 0
    loop: start=0, step=1, limit=4
    $region2: #{_lambda_.1} parent=1 // loop_pre_header
      _
    $region3: #{_lambda_.1} parent=1 // loop_header
      %s34 = sphi 0, %s38
      %p35 = scmp.ge.s32.totalorder %s34, 4
      %s44 = sphi 0, %s46
      %s47 = sphi 0, %s44
      %s48 = sphi 0, %s47
      %s64 = sphi 0, %s48
      %s70 = sphi 0, %s72
      %s73 = sphi 0, %s70
      %s74 = sphi 0, %s73
      %s90 = sphi 0, %s74
      %s96 = sphi 0, %s98
      %s99 = sphi 0, %s96
      %s100 = sphi 0, %s99
      %s116 = sphi 0, %s100
      %s120 = sphi 0, %s120
      %s122 = sphi 0, %s120
      %s123 = sphi 0, %s122
      %s137 = sphi 0, %s123
      %s141 = sphi 0, %s141
      %s143 = sphi 0, %s141
      %s144 = sphi 0, %s143
      %s158 = sphi 0, %s144
      %s162 = sphi 0, %s162
      %s164 = sphi 0, %s162
      %s165 = sphi 0, %s164
      %s179 = sphi 0, %s165
      %s183 = sphi 0, %s183
      %s185 = sphi 0, %s183
      %s186 = sphi 0, %s185
      %s200 = sphi 0, %s186
      %s204 = sphi 0, %s204
      %s206 = sphi 0, %s204
      %s207 = sphi 0, %s206
      %s221 = sphi 0, %s207
      %s225 = sphi 0, %s225
      %s227 = sphi 0, %s225
      %s228 = sphi 0, %s227
      %s242 = sphi 0, %s228
      %s246 = sphi 0, %s246
      %s248 = sphi 0, %s246
      %s249 = sphi 0, %s248
      %s263 = sphi 0, %s249
      %s267 = sphi 0, %s267
      %s269 = sphi 0, %s267
      %s270 = sphi 0, %s269
      %s284 = sphi 0, %s270
      %s288 = sphi 0, %s288
      %s290 = sphi 0, %s288
      %s291 = sphi 0, %s290
      %s305 = sphi 0, %s291
      %s309 = sphi 0, %s309
      %s311 = sphi 0, %s309
      %s312 = sphi 0, %s311
      %s326 = sphi 0, %s312
      %s330 = sphi 0, %s330
      %s332 = sphi 0, %s330
      %s333 = sphi 0, %s332
      %s347 = sphi 0, %s333
      %s351 = sphi 0, %s351
      %s353 = sphi 0, %s351
      %s354 = sphi 0, %s353
      %s368 = sphi 0, %s354
      %s372 = sphi 0, %s372
      %s374 = sphi 0, %s372
      %s375 = sphi 0, %s374
      %s389 = sphi 0, %s375
      %s393 = sphi 0, %s393
      %s395 = sphi 0, %s393
      %s396 = sphi 0, %s395
      %s410 = sphi 0, %s396
      %s414 = sphi 0, %s414
      %s416 = sphi 0, %s414
      %s417 = sphi 0, %s416
      %s431 = sphi 0, %s417
      %s435 = sphi 0, %s435
      %s437 = sphi 0, %s435
      %s438 = sphi 0, %s437
      %s452 = sphi 0, %s438
      %s456 = sphi 0, %s456
      %s458 = sphi 0, %s456
      %s459 = sphi 0, %s458
      %s473 = sphi 0, %s459
      %s477 = sphi 0, %s477
      %s479 = sphi 0, %s477
      %s480 = sphi 0, %s479
      %s494 = sphi 0, %s480
      %s498 = sphi 0, %s498
      %s500 = sphi 0, %s498
      %s501 = sphi 0, %s500
      %s515 = sphi 0, %s501
      %s519 = sphi 0, %s519
      %s521 = sphi 0, %s519
      %s522 = sphi 0, %s521
      %s536 = sphi 0, %s522
      %s542 = sphi 0, %s544
      %s545 = sphi 0, %s542
      %s546 = sphi 0, %s545
      %s562 = sphi 0, %s546
      %s568 = sphi 0, %s570
      %s571 = sphi 0, %s568
      %s572 = sphi 0, %s571
      %s588 = sphi 0, %s572
    $region4: #{_lambda_.1} parent=1 // loop_header_branch
      %37 = sbr.rel (%p35) target = $region8
    $region5: #{_lambda_.1} parent=1 // loop_body
      %s39 = ssub.s32 %s34, 1
      %s40 = ssub.s32 %s34, 2
      %s41 = sadd.s32 %s34, 1
      %s42 = ssub.s32 %s34, %s41
      %p43 = scmp.eq.s32.totalorder %s42, 0
      %s45 = sadd.s32 %s44, 1
      %s46 = scalar_select %p43, %s44, %s45
      %p49 = pneg %p43
      %p50 = scmp.eq.s32.totalorder %s34, 1
      %p51 = por %p49, %p50
      %p52 = scmp.ne.s32.totalorder %s44, %s47
      %p53 = scmp.eq.s32.totalorder %s34, 0
      %p54 = por %p52, %p53
      %p55 = scmp.ne.s32.totalorder %s44, %s47
      %p56 = scmp.eq.s32.totalorder %s39, 1
      %p57 = por %p55, %p56
      %p58 = scmp.ne.s32.totalorder %s47, %s48
      %p59 = scmp.eq.s32.totalorder %s39, 0
      %p60 = por %p58, %p59
      %p61 = scmp.ne.s32.totalorder %s47, %s48
      %p62 = scmp.eq.s32.totalorder %s40, 1
      %p63 = por %p61, %p62
      %p65 = scmp.ne.s32.totalorder %s48, %s64
      %p66 = scmp.eq.s32.totalorder %s40, 0
      %p67 = por %p65, %p66
      %s68 = ssub.s32 %s34, %s41
      %p69 = scmp.eq.s32.totalorder %s68, 0
      %s71 = sadd.s32 %s70, 1
      %s72 = scalar_select %p69, %s70, %s71
      %p75 = pneg %p69
      %p76 = scmp.eq.s32.totalorder %s34, 1
      %p77 = por %p75, %p76
      %p78 = scmp.ne.s32.totalorder %s70, %s73
      %p79 = scmp.eq.s32.totalorder %s34, 0
      %p80 = por %p78, %p79
      %p81 = scmp.ne.s32.totalorder %s70, %s73
      %p82 = scmp.eq.s32.totalorder %s39, 1
      %p83 = por %p81, %p82
      %p84 = scmp.ne.s32.totalorder %s73, %s74
      %p85 = scmp.eq.s32.totalorder %s39, 0
      %p86 = por %p84, %p85
      %p87 = scmp.ne.s32.totalorder %s73, %s74
      %p88 = scmp.eq.s32.totalorder %s40, 1
      %p89 = por %p87, %p88
      %p91 = scmp.ne.s32.totalorder %s74, %s90
      %p92 = scmp.eq.s32.totalorder %s40, 0
      %p93 = por %p91, %p92
      %s94 = ssub.s32 %s34, %s41
      %p95 = scmp.eq.s32.totalorder %s94, 0
      %s97 = sadd.s32 %s96, 1
      %s98 = scalar_select %p95, %s96, %s97
      %p101 = pneg %p95
      %p102 = scmp.eq.s32.totalorder %s34, 1
      %p103 = por %p101, %p102
      %p104 = scmp.ne.s32.totalorder %s96, %s99
      %p105 = scmp.eq.s32.totalorder %s34, 0
      %p106 = por %p104, %p105
      %p107 = scmp.ne.s32.totalorder %s96, %s99
      %p108 = scmp.eq.s32.totalorder %s39, 1
      %p109 = por %p107, %p108
      %p110 = scmp.ne.s32.totalorder %s99, %s100
      %p111 = scmp.eq.s32.totalorder %s39, 0
      %p112 = por %p110, %p111
      %p113 = scmp.ne.s32.totalorder %s99, %s100
      %p114 = scmp.eq.s32.totalorder %s40, 1
      %p115 = por %p113, %p114
      %p117 = scmp.ne.s32.totalorder %s100, %s116
      %p118 = scmp.eq.s32.totalorder %s40, 0
      %p119 = por %p117, %p118
      %s121 = sadd.s32 %s120, 1
      %p124 = scmp.eq.s32.totalorder %s34, 1
      %p125 = scmp.ne.s32.totalorder %s120, %s122
      %p126 = scmp.eq.s32.totalorder %s34, 0
      %p127 = por %p125, %p126
      %p128 = scmp.ne.s32.totalorder %s120, %s122
      %p129 = scmp.eq.s32.totalorder %s39, 1
      %p130 = por %p128, %p129
      %p131 = scmp.ne.s32.totalorder %s122, %s123
      %p132 = scmp.eq.s32.totalorder %s39, 0
      %p133 = por %p131, %p132
      %p134 = scmp.ne.s32.totalorder %s122, %s123
      %p135 = scmp.eq.s32.totalorder %s40, 1
      %p136 = por %p134, %p135
      %p138 = scmp.ne.s32.totalorder %s123, %s137
      %p139 = scmp.eq.s32.totalorder %s40, 0
      %p140 = por %p138, %p139
      %s142 = sadd.s32 %s141, 1
      %p145 = scmp.eq.s32.totalorder %s34, 1
      %p146 = scmp.ne.s32.totalorder %s141, %s143
      %p147 = scmp.eq.s32.totalorder %s34, 0
      %p148 = por %p146, %p147
      %p149 = scmp.ne.s32.totalorder %s141, %s143
      %p150 = scmp.eq.s32.totalorder %s39, 1
      %p151 = por %p149, %p150
      %p152 = scmp.ne.s32.totalorder %s143, %s144
      %p153 = scmp.eq.s32.totalorder %s39, 0
      %p154 = por %p152, %p153
      %p155 = scmp.ne.s32.totalorder %s143, %s144
      %p156 = scmp.eq.s32.totalorder %s40, 1
      %p157 = por %p155, %p156
      %p159 = scmp.ne.s32.totalorder %s144, %s158
      %p160 = scmp.eq.s32.totalorder %s40, 0
      %p161 = por %p159, %p160
      %s163 = sadd.s32 %s162, 1
      %p166 = scmp.eq.s32.totalorder %s34, 1
      %p167 = scmp.ne.s32.totalorder %s162, %s164
      %p168 = scmp.eq.s32.totalorder %s34, 0
      %p169 = por %p167, %p168
      %p170 = scmp.ne.s32.totalorder %s162, %s164
      %p171 = scmp.eq.s32.totalorder %s39, 1
      %p172 = por %p170, %p171
      %p173 = scmp.ne.s32.totalorder %s164, %s165
      %p174 = scmp.eq.s32.totalorder %s39, 0
      %p175 = por %p173, %p174
      %p176 = scmp.ne.s32.totalorder %s164, %s165
      %p177 = scmp.eq.s32.totalorder %s40, 1
      %p178 = por %p176, %p177
      %p180 = scmp.ne.s32.totalorder %s165, %s179
      %p181 = scmp.eq.s32.totalorder %s40, 0
      %p182 = por %p180, %p181
      %s184 = sadd.s32 %s183, 1
      %p187 = scmp.eq.s32.totalorder %s34, 1
      %p188 = scmp.ne.s32.totalorder %s183, %s185
      %p189 = scmp.eq.s32.totalorder %s34, 0
      %p190 = por %p188, %p189
      %p191 = scmp.ne.s32.totalorder %s183, %s185
      %p192 = scmp.eq.s32.totalorder %s39, 1
      %p193 = por %p191, %p192
      %p194 = scmp.ne.s32.totalorder %s185, %s186
      %p195 = scmp.eq.s32.totalorder %s39, 0
      %p196 = por %p194, %p195
      %p197 = scmp.ne.s32.totalorder %s185, %s186
      %p198 = scmp.eq.s32.totalorder %s40, 1
      %p199 = por %p197, %p198
      %p201 = scmp.ne.s32.totalorder %s186, %s200
      %p202 = scmp.eq.s32.totalorder %s40, 0
      %p203 = por %p201, %p202
      %s205 = sadd.s32 %s204, 1
      %p208 = scmp.eq.s32.totalorder %s34, 1
      %p209 = scmp.ne.s32.totalorder %s204, %s206
      %p210 = scmp.eq.s32.totalorder %s34, 0
      %p211 = por %p209, %p210
      %p212 = scmp.ne.s32.totalorder %s204, %s206
      %p213 = scmp.eq.s32.totalorder %s39, 1
      %p214 = por %p212, %p213
      %p215 = scmp.ne.s32.totalorder %s206, %s207
      %p216 = scmp.eq.s32.totalorder %s39, 0
      %p217 = por %p215, %p216
      %p218 = scmp.ne.s32.totalorder %s206, %s207
      %p219 = scmp.eq.s32.totalorder %s40, 1
      %p220 = por %p218, %p219
      %p222 = scmp.ne.s32.totalorder %s207, %s221
      %p223 = scmp.eq.s32.totalorder %s40, 0
      %p224 = por %p222, %p223
      %s226 = sadd.s32 %s225, 1
      %p229 = scmp.eq.s32.totalorder %s34, 1
      %p230 = scmp.ne.s32.totalorder %s225, %s227
      %p231 = scmp.eq.s32.totalorder %s34, 0
      %p232 = por %p230, %p231
      %p233 = scmp.ne.s32.totalorder %s225, %s227
      %p234 = scmp.eq.s32.totalorder %s39, 1
      %p235 = por %p233, %p234
      %p236 = scmp.ne.s32.totalorder %s227, %s228
      %p237 = scmp.eq.s32.totalorder %s39, 0
      %p238 = por %p236, %p237
      %p239 = scmp.ne.s32.totalorder %s227, %s228
      %p240 = scmp.eq.s32.totalorder %s40, 1
      %p241 = por %p239, %p240
      %p243 = scmp.ne.s32.totalorder %s228, %s242
      %p244 = scmp.eq.s32.totalorder %s40, 0
      %p245 = por %p243, %p244
      %s247 = sadd.s32 %s246, 1
      %p250 = scmp.eq.s32.totalorder %s34, 1
      %p251 = scmp.ne.s32.totalorder %s246, %s248
      %p252 = scmp.eq.s32.totalorder %s34, 0
      %p253 = por %p251, %p252
      %p254 = scmp.ne.s32.totalorder %s246, %s248
      %p255 = scmp.eq.s32.totalorder %s39, 1
      %p256 = por %p254, %p255
      %p257 = scmp.ne.s32.totalorder %s248, %s249
      %p258 = scmp.eq.s32.totalorder %s39, 0
      %p259 = por %p257, %p258
      %p260 = scmp.ne.s32.totalorder %s248, %s249
      %p261 = scmp.eq.s32.totalorder %s40, 1
      %p262 = por %p260, %p261
      %p264 = scmp.ne.s32.totalorder %s249, %s263
      %p265 = scmp.eq.s32.totalorder %s40, 0
      %p266 = por %p264, %p265
      %s268 = sadd.s32 %s267, 1
      %p271 = scmp.eq.s32.totalorder %s34, 1
      %p272 = scmp.ne.s32.totalorder %s267, %s269
      %p273 = scmp.eq.s32.totalorder %s34, 0
      %p274 = por %p272, %p273
      %p275 = scmp.ne.s32.totalorder %s267, %s269
      %p276 = scmp.eq.s32.totalorder %s39, 1
      %p277 = por %p275, %p276
      %p278 = scmp.ne.s32.totalorder %s269, %s270
      %p279 = scmp.eq.s32.totalorder %s39, 0
      %p280 = por %p278, %p279
      %p281 = scmp.ne.s32.totalorder %s269, %s270
      %p282 = scmp.eq.s32.totalorder %s40, 1
      %p283 = por %p281, %p282
      %p285 = scmp.ne.s32.totalorder %s270, %s284
      %p286 = scmp.eq.s32.totalorder %s40, 0
      %p287 = por %p285, %p286
      %s289 = sadd.s32 %s288, 1
      %p292 = scmp.eq.s32.totalorder %s34, 1
      %p293 = scmp.ne.s32.totalorder %s288, %s290
      %p294 = scmp.eq.s32.totalorder %s34, 0
      %p295 = por %p293, %p294
      %p296 = scmp.ne.s32.totalorder %s288, %s290
      %p297 = scmp.eq.s32.totalorder %s39, 1
      %p298 = por %p296, %p297
      %p299 = scmp.ne.s32.totalorder %s290, %s291
      %p300 = scmp.eq.s32.totalorder %s39, 0
      %p301 = por %p299, %p300
      %p302 = scmp.ne.s32.totalorder %s290, %s291
      %p303 = scmp.eq.s32.totalorder %s40, 1
      %p304 = por %p302, %p303
      %p306 = scmp.ne.s32.totalorder %s291, %s305
      %p307 = scmp.eq.s32.totalorder %s40, 0
      %p308 = por %p306, %p307
      %s310 = sadd.s32 %s309, 1
      %p313 = scmp.eq.s32.totalorder %s34, 1
      %p314 = scmp.ne.s32.totalorder %s309, %s311
      %p315 = scmp.eq.s32.totalorder %s34, 0
      %p316 = por %p314, %p315
      %p317 = scmp.ne.s32.totalorder %s309, %s311
      %p318 = scmp.eq.s32.totalorder %s39, 1
      %p319 = por %p317, %p318
      %p320 = scmp.ne.s32.totalorder %s311, %s312
      %p321 = scmp.eq.s32.totalorder %s39, 0
      %p322 = por %p320, %p321
      %p323 = scmp.ne.s32.totalorder %s311, %s312
      %p324 = scmp.eq.s32.totalorder %s40, 1
      %p325 = por %p323, %p324
      %p327 = scmp.ne.s32.totalorder %s312, %s326
      %p328 = scmp.eq.s32.totalorder %s40, 0
      %p329 = por %p327, %p328
      %s331 = sadd.s32 %s330, 1
      %p334 = scmp.eq.s32.totalorder %s34, 1
      %p335 = scmp.ne.s32.totalorder %s330, %s332
      %p336 = scmp.eq.s32.totalorder %s34, 0
      %p337 = por %p335, %p336
      %p338 = scmp.ne.s32.totalorder %s330, %s332
      %p339 = scmp.eq.s32.totalorder %s39, 1
      %p340 = por %p338, %p339
      %p341 = scmp.ne.s32.totalorder %s332, %s333
      %p342 = scmp.eq.s32.totalorder %s39, 0
      %p343 = por %p341, %p342
      %p344 = scmp.ne.s32.totalorder %s332, %s333
      %p345 = scmp.eq.s32.totalorder %s40, 1
      %p346 = por %p344, %p345
      %p348 = scmp.ne.s32.totalorder %s333, %s347
      %p349 = scmp.eq.s32.totalorder %s40, 0
      %p350 = por %p348, %p349
      %s352 = sadd.s32 %s351, 1
      %p355 = scmp.eq.s32.totalorder %s34, 1
      %p356 = scmp.ne.s32.totalorder %s351, %s353
      %p357 = scmp.eq.s32.totalorder %s34, 0
      %p358 = por %p356, %p357
      %p359 = scmp.ne.s32.totalorder %s351, %s353
      %p360 = scmp.eq.s32.totalorder %s39, 1
      %p361 = por %p359, %p360
      %p362 = scmp.ne.s32.totalorder %s353, %s354
      %p363 = scmp.eq.s32.totalorder %s39, 0
      %p364 = por %p362, %p363
      %p365 = scmp.ne.s32.totalorder %s353, %s354
      %p366 = scmp.eq.s32.totalorder %s40, 1
      %p367 = por %p365, %p366
      %p369 = scmp.ne.s32.totalorder %s354, %s368
      %p370 = scmp.eq.s32.totalorder %s40, 0
      %p371 = por %p369, %p370
      %s373 = sadd.s32 %s372, 1
      %p376 = scmp.eq.s32.totalorder %s34, 1
      %p377 = scmp.ne.s32.totalorder %s372, %s374
      %p378 = scmp.eq.s32.totalorder %s34, 0
      %p379 = por %p377, %p378
      %p380 = scmp.ne.s32.totalorder %s372, %s374
      %p381 = scmp.eq.s32.totalorder %s39, 1
      %p382 = por %p380, %p381
      %p383 = scmp.ne.s32.totalorder %s374, %s375
      %p384 = scmp.eq.s32.totalorder %s39, 0
      %p385 = por %p383, %p384
      %p386 = scmp.ne.s32.totalorder %s374, %s375
      %p387 = scmp.eq.s32.totalorder %s40, 1
      %p388 = por %p386, %p387
      %p390 = scmp.ne.s32.totalorder %s375, %s389
      %p391 = scmp.eq.s32.totalorder %s40, 0
      %p392 = por %p390, %p391
      %s394 = sadd.s32 %s393, 1
      %p397 = scmp.eq.s32.totalorder %s34, 1
      %p398 = scmp.ne.s32.totalorder %s393, %s395
      %p399 = scmp.eq.s32.totalorder %s34, 0
      %p400 = por %p398, %p399
      %p401 = scmp.ne.s32.totalorder %s393, %s395
      %p402 = scmp.eq.s32.totalorder %s39, 1
      %p403 = por %p401, %p402
      %p404 = scmp.ne.s32.totalorder %s395, %s396
      %p405 = scmp.eq.s32.totalorder %s39, 0
      %p406 = por %p404, %p405
      %p407 = scmp.ne.s32.totalorder %s395, %s396
      %p408 = scmp.eq.s32.totalorder %s40, 1
      %p409 = por %p407, %p408
      %p411 = scmp.ne.s32.totalorder %s396, %s410
      %p412 = scmp.eq.s32.totalorder %s40, 0
      %p413 = por %p411, %p412
      %s415 = sadd.s32 %s414, 1
      %p418 = scmp.eq.s32.totalorder %s34, 1
      %p419 = scmp.ne.s32.totalorder %s414, %s416
      %p420 = scmp.eq.s32.totalorder %s34, 0
      %p421 = por %p419, %p420
      %p422 = scmp.ne.s32.totalorder %s414, %s416
      %p423 = scmp.eq.s32.totalorder %s39, 1
      %p424 = por %p422, %p423
      %p425 = scmp.ne.s32.totalorder %s416, %s417
      %p426 = scmp.eq.s32.totalorder %s39, 0
      %p427 = por %p425, %p426
      %p428 = scmp.ne.s32.totalorder %s416, %s417
      %p429 = scmp.eq.s32.totalorder %s40, 1
      %p430 = por %p428, %p429
      %p432 = scmp.ne.s32.totalorder %s417, %s431
      %p433 = scmp.eq.s32.totalorder %s40, 0
      %p434 = por %p432, %p433
      %s436 = sadd.s32 %s435, 1
      %p439 = scmp.eq.s32.totalorder %s34, 1
      %p440 = scmp.ne.s32.totalorder %s435, %s437
      %p441 = scmp.eq.s32.totalorder %s34, 0
      %p442 = por %p440, %p441
      %p443 = scmp.ne.s32.totalorder %s435, %s437
      %p444 = scmp.eq.s32.totalorder %s39, 1
      %p445 = por %p443, %p444
      %p446 = scmp.ne.s32.totalorder %s437, %s438
      %p447 = scmp.eq.s32.totalorder %s39, 0
      %p448 = por %p446, %p447
      %p449 = scmp.ne.s32.totalorder %s437, %s438
      %p450 = scmp.eq.s32.totalorder %s40, 1
      %p451 = por %p449, %p450
      %p453 = scmp.ne.s32.totalorder %s438, %s452
      %p454 = scmp.eq.s32.totalorder %s40, 0
      %p455 = por %p453, %p454
      %s457 = sadd.s32 %s456, 1
      %p460 = scmp.eq.s32.totalorder %s34, 1
      %p461 = scmp.ne.s32.totalorder %s456, %s458
      %p462 = scmp.eq.s32.totalorder %s34, 0
      %p463 = por %p461, %p462
      %p464 = scmp.ne.s32.totalorder %s456, %s458
      %p465 = scmp.eq.s32.totalorder %s39, 1
      %p466 = por %p464, %p465
      %p467 = scmp.ne.s32.totalorder %s458, %s459
      %p468 = scmp.eq.s32.totalorder %s39, 0
      %p469 = por %p467, %p468
      %p470 = scmp.ne.s32.totalorder %s458, %s459
      %p471 = scmp.eq.s32.totalorder %s40, 1
      %p472 = por %p470, %p471
      %p474 = scmp.ne.s32.totalorder %s459, %s473
      %p475 = scmp.eq.s32.totalorder %s40, 0
      %p476 = por %p474, %p475
      %s478 = sadd.s32 %s477, 1
      %p481 = scmp.eq.s32.totalorder %s34, 1
      %p482 = scmp.ne.s32.totalorder %s477, %s479
      %p483 = scmp.eq.s32.totalorder %s34, 0
      %p484 = por %p482, %p483
      %p485 = scmp.ne.s32.totalorder %s477, %s479
      %p486 = scmp.eq.s32.totalorder %s39, 1
      %p487 = por %p485, %p486
      %p488 = scmp.ne.s32.totalorder %s479, %s480
      %p489 = scmp.eq.s32.totalorder %s39, 0
      %p490 = por %p488, %p489
      %p491 = scmp.ne.s32.totalorder %s479, %s480
      %p492 = scmp.eq.s32.totalorder %s40, 1
      %p493 = por %p491, %p492
      %p495 = scmp.ne.s32.totalorder %s480, %s494
      %p496 = scmp.eq.s32.totalorder %s40, 0
      %p497 = por %p495, %p496
      %s499 = sadd.s32 %s498, 1
      %p502 = scmp.eq.s32.totalorder %s34, 1
      %p503 = scmp.ne.s32.totalorder %s498, %s500
      %p504 = scmp.eq.s32.totalorder %s34, 0
      %p505 = por %p503, %p504
      %p506 = scmp.ne.s32.totalorder %s498, %s500
      %p507 = scmp.eq.s32.totalorder %s39, 1
      %p508 = por %p506, %p507
      %p509 = scmp.ne.s32.totalorder %s500, %s501
      %p510 = scmp.eq.s32.totalorder %s39, 0
      %p511 = por %p509, %p510
      %p512 = scmp.ne.s32.totalorder %s500, %s501
      %p513 = scmp.eq.s32.totalorder %s40, 1
      %p514 = por %p512, %p513
      %p516 = scmp.ne.s32.totalorder %s501, %s515
      %p517 = scmp.eq.s32.totalorder %s40, 0
      %p518 = por %p516, %p517
      %s520 = sadd.s32 %s519, 1
      %p523 = scmp.eq.s32.totalorder %s34, 1
      %p524 = scmp.ne.s32.totalorder %s519, %s521
      %p525 = scmp.eq.s32.totalorder %s34, 0
      %p526 = por %p524, %p525
      %p527 = scmp.ne.s32.totalorder %s519, %s521
      %p528 = scmp.eq.s32.totalorder %s39, 1
      %p529 = por %p527, %p528
      %p530 = scmp.ne.s32.totalorder %s521, %s522
      %p531 = scmp.eq.s32.totalorder %s39, 0
      %p532 = por %p530, %p531
      %p533 = scmp.ne.s32.totalorder %s521, %s522
      %p534 = scmp.eq.s32.totalorder %s40, 1
      %p535 = por %p533, %p534
      %p537 = scmp.ne.s32.totalorder %s522, %s536
      %p538 = scmp.eq.s32.totalorder %s40, 0
      %p539 = por %p537, %p538
      %s540 = ssub.s32 %s34, %s41
      %p541 = scmp.eq.s32.totalorder %s540, 0
      %s543 = sadd.s32 %s542, 1
      %s544 = scalar_select %p541, %s542, %s543
      %p547 = pneg %p541
      %p548 = scmp.eq.s32.totalorder %s34, 1
      %p549 = por %p547, %p548
      %p550 = scmp.ne.s32.totalorder %s542, %s545
      %p551 = scmp.eq.s32.totalorder %s34, 0
      %p552 = por %p550, %p551
      %p553 = scmp.ne.s32.totalorder %s542, %s545
      %p554 = scmp.eq.s32.totalorder %s39, 1
      %p555 = por %p553, %p554
      %p556 = scmp.ne.s32.totalorder %s545, %s546
      %p557 = scmp.eq.s32.totalorder %s39, 0
      %p558 = por %p556, %p557
      %p559 = scmp.ne.s32.totalorder %s545, %s546
      %p560 = scmp.eq.s32.totalorder %s40, 1
      %p561 = por %p559, %p560
      %p563 = scmp.ne.s32.totalorder %s546, %s562
      %p564 = scmp.eq.s32.totalorder %s40, 0
      %p565 = por %p563, %p564
      %s566 = ssub.s32 %s34, %s41
      %p567 = scmp.eq.s32.totalorder %s566, 0
      %s569 = sadd.s32 %s568, 1
      %s570 = scalar_select %p567, %s568, %s569
      %p573 = pneg %p567
      %p574 = scmp.eq.s32.totalorder %s34, 1
      %p575 = por %p573, %p574
      %p576 = scmp.ne.s32.totalorder %s568, %s571
      %p577 = scmp.eq.s32.totalorder %s34, 0
      %p578 = por %p576, %p577
      %p579 = scmp.ne.s32.totalorder %s568, %s571
      %p580 = scmp.eq.s32.totalorder %s39, 1
      %p581 = por %p579, %p580
      %p582 = scmp.ne.s32.totalorder %s571, %s572
      %p583 = scmp.eq.s32.totalorder %s39, 0
      %p584 = por %p582, %p583
      %p585 = scmp.ne.s32.totalorder %s571, %s572
      %p586 = scmp.eq.s32.totalorder %s40, 1
      %p587 = por %p585, %p586
      %p589 = scmp.ne.s32.totalorder %s572, %s588
      %p590 = scmp.eq.s32.totalorder %s40, 0
      %p591 = por %p589, %p590
      %p592 = scmp.le.s32.totalorder 1, %s34
      %p593 = scmp.lt.s32.totalorder %s34, 3
      %p594 = pnand %p592, %p593
      %p595 = pneg %p594
      // Predicated region
      $region9: #{_lambda_.1} parent=5 // pred_check
        _
      $region10: #{_lambda_.1} parent=5 // pred_check_branch
        %597 = sbr.rel (%p594) target = $region12
      $region11: #{_lambda_.1} parent=5 // pred_region
        %s598 = ssub.s32 %s34, 1
        // Predicated region
        $region13: #{_lambda_.1} parent=11 // pred_check
          %p599 = pneg %p133
        $region14: #{_lambda_.1} parent=11 // pred_check_branch
          %601 = sbr.rel (%p599) target = $region16
        $region15: #{_lambda_.1} parent=11 // pred_region
          _
        $region16: #{_lambda_.1} parent=11 // pred_fallthru
          _
        // Predicated region
        $region17: #{_lambda_.1} parent=11 // pred_check
          %p602 = pneg %p154
        $region18: #{_lambda_.1} parent=11 // pred_check_branch
          %604 = sbr.rel (%p602) target = $region20
        $region19: #{_lambda_.1} parent=11 // pred_region
          _
        $region20: #{_lambda_.1} parent=11 // pred_fallthru
          _
        // Predicated region
        $region21: #{_lambda_.1} parent=11 // pred_check
          %p605 = pneg %p175
        $region22: #{_lambda_.1} parent=11 // pred_check_branch
          %607 = sbr.rel (%p605) target = $region24
        $region23: #{_lambda_.1} parent=11 // pred_region
          _
        $region24: #{_lambda_.1} parent=11 // pred_fallthru
          _
        // Predicated region
        $region25: #{_lambda_.1} parent=11 // pred_check
          %p608 = pneg %p196
        $region26: #{_lambda_.1} parent=11 // pred_check_branch
          %610 = sbr.rel (%p608) target = $region28
        $region27: #{_lambda_.1} parent=11 // pred_region
          _
        $region28: #{_lambda_.1} parent=11 // pred_fallthru
          _
        // Predicated region
        $region29: #{_lambda_.1} parent=11 // pred_check
          %p611 = pneg %p217
        $region30: #{_lambda_.1} parent=11 // pred_check_branch
          %613 = sbr.rel (%p611) target = $region32
        $region31: #{_lambda_.1} parent=11 // pred_region
          _
        $region32: #{_lambda_.1} parent=11 // pred_fallthru
          _
        // Predicated region
        $region33: #{_lambda_.1} parent=11 // pred_check
          %p614 = pneg %p238
        $region34: #{_lambda_.1} parent=11 // pred_check_branch
          %616 = sbr.rel (%p614) target = $region36
        $region35: #{_lambda_.1} parent=11 // pred_region
          _
        $region36: #{_lambda_.1} parent=11 // pred_fallthru
          _
        // Predicated region
        $region37: #{_lambda_.1} parent=11 // pred_check
          %p617 = pneg %p259
        $region38: #{_lambda_.1} parent=11 // pred_check_branch
          %619 = sbr.rel (%p617) target = $region40
        $region39: #{_lambda_.1} parent=11 // pred_region
          _
        $region40: #{_lambda_.1} parent=11 // pred_fallthru
          _
        // Predicated region
        $region41: #{_lambda_.1} parent=11 // pred_check
          %p620 = pneg %p280
        $region42: #{_lambda_.1} parent=11 // pred_check_branch
          %622 = sbr.rel (%p620) target = $region44
        $region43: #{_lambda_.1} parent=11 // pred_region
          _
        $region44: #{_lambda_.1} parent=11 // pred_fallthru
          _
        // Predicated region
        $region45: #{_lambda_.1} parent=11 // pred_check
          %p623 = pneg %p301
        $region46: #{_lambda_.1} parent=11 // pred_check_branch
          %625 = sbr.rel (%p623) target = $region48
        $region47: #{_lambda_.1} parent=11 // pred_region
          _
        $region48: #{_lambda_.1} parent=11 // pred_fallthru
          _
        // Predicated region
        $region49: #{_lambda_.1} parent=11 // pred_check
          %p626 = pneg %p322
        $region50: #{_lambda_.1} parent=11 // pred_check_branch
          %628 = sbr.rel (%p626) target = $region52
        $region51: #{_lambda_.1} parent=11 // pred_region
          _
        $region52: #{_lambda_.1} parent=11 // pred_fallthru
          _
        // Predicated region
        $region53: #{_lambda_.1} parent=11 // pred_check
          %p629 = pneg %p343
        $region54: #{_lambda_.1} parent=11 // pred_check_branch
          %631 = sbr.rel (%p629) target = $region56
        $region55: #{_lambda_.1} parent=11 // pred_region
          _
        $region56: #{_lambda_.1} parent=11 // pred_fallthru
          _
        // Predicated region
        $region57: #{_lambda_.1} parent=11 // pred_check
          %p632 = pneg %p364
        $region58: #{_lambda_.1} parent=11 // pred_check_branch
          %634 = sbr.rel (%p632) target = $region60
        $region59: #{_lambda_.1} parent=11 // pred_region
          _
        $region60: #{_lambda_.1} parent=11 // pred_fallthru
          _
        // Predicated region
        $region61: #{_lambda_.1} parent=11 // pred_check
          %p635 = pneg %p385
        $region62: #{_lambda_.1} parent=11 // pred_check_branch
          %637 = sbr.rel (%p635) target = $region64
        $region63: #{_lambda_.1} parent=11 // pred_region
          _
        $region64: #{_lambda_.1} parent=11 // pred_fallthru
          _
        // Predicated region
        $region65: #{_lambda_.1} parent=11 // pred_check
          %p638 = pneg %p406
        $region66: #{_lambda_.1} parent=11 // pred_check_branch
          %640 = sbr.rel (%p638) target = $region68
        $region67: #{_lambda_.1} parent=11 // pred_region
          _
        $region68: #{_lambda_.1} parent=11 // pred_fallthru
          _
        // Predicated region
        $region69: #{_lambda_.1} parent=11 // pred_check
          %p641 = pneg %p427
        $region70: #{_lambda_.1} parent=11 // pred_check_branch
          %643 = sbr.rel (%p641) target = $region72
        $region71: #{_lambda_.1} parent=11 // pred_region
          _
        $region72: #{_lambda_.1} parent=11 // pred_fallthru
          _
        // Predicated region
        $region73: #{_lambda_.1} parent=11 // pred_check
          %p644 = pneg %p448
        $region74: #{_lambda_.1} parent=11 // pred_check_branch
          %646 = sbr.rel (%p644) target = $region76
        $region75: #{_lambda_.1} parent=11 // pred_region
          _
        $region76: #{_lambda_.1} parent=11 // pred_fallthru
          _
        // Predicated region
        $region77: #{_lambda_.1} parent=11 // pred_check
          %p647 = pneg %p469
        $region78: #{_lambda_.1} parent=11 // pred_check_branch
          %649 = sbr.rel (%p647) target = $region80
        $region79: #{_lambda_.1} parent=11 // pred_region
          _
        $region80: #{_lambda_.1} parent=11 // pred_fallthru
          _
        // Predicated region
        $region81: #{_lambda_.1} parent=11 // pred_check
          %p650 = pneg %p490
        $region82: #{_lambda_.1} parent=11 // pred_check_branch
          %652 = sbr.rel (%p650) target = $region84
        $region83: #{_lambda_.1} parent=11 // pred_region
          _
        $region84: #{_lambda_.1} parent=11 // pred_fallthru
          _
        // Predicated region
        $region85: #{_lambda_.1} parent=11 // pred_check
          %p653 = pneg %p511
        $region86: #{_lambda_.1} parent=11 // pred_check_branch
          %655 = sbr.rel (%p653) target = $region88
        $region87: #{_lambda_.1} parent=11 // pred_region
          _
        $region88: #{_lambda_.1} parent=11 // pred_fallthru
          _
        // Predicated region
        $region89: #{_lambda_.1} parent=11 // pred_check
          %p656 = pneg %p532
        $region90: #{_lambda_.1} parent=11 // pred_check_branch
          %658 = sbr.rel (%p656) target = $region92
        $region91: #{_lambda_.1} parent=11 // pred_region
          _
        $region92: #{_lambda_.1} parent=11 // pred_fallthru
          _
      $region12: #{_lambda_.1} parent=5 // pred_fallthru
        _
      %p659 = scmp.lt.s32.totalorder %s34, 2
      // Predicated region
      $region93: #{_lambda_.1} parent=5 // pred_check
        %p660 = pneg %p659
      $region94: #{_lambda_.1} parent=5 // pred_check_branch
        %662 = sbr.rel (%p660) target = $region96
      $region95: #{_lambda_.1} parent=5 // pred_region
        // Predicated region
        $region97: #{_lambda_.1} parent=95 // pred_check
          %p663 = pneg %p54
        $region98: #{_lambda_.1} parent=95 // pred_check_branch
          %665 = sbr.rel (%p663) target = $region100
        $region99: #{_lambda_.1} parent=95 // pred_region
          %p666 = scmp.lt.s32.totalorder %s34, 1
          %s667 = scalar_select %p666, %s34, 1
          %s668 = smul.addr %s667, 8
          %s669 = scalar_lea.vmem %s0, %s668
        $region100: #{_lambda_.1} parent=95 // pred_fallthru
          _
        // Predicated region
        $region101: #{_lambda_.1} parent=95 // pred_check
          %p670 = pneg %p80
        $region102: #{_lambda_.1} parent=95 // pred_check_branch
          %672 = sbr.rel (%p670) target = $region104
        $region103: #{_lambda_.1} parent=95 // pred_region
          %p673 = scmp.lt.s32.totalorder %s34, 1
          %s674 = scalar_select %p673, %s34, 1
          %s675 = smul.addr %s674, 2
          %s676 = smul.addr %s675, 8
          %s677 = scalar_lea.vmem %s1, %s676
        $region104: #{_lambda_.1} parent=95 // pred_fallthru
          _
        // Predicated region
        $region105: #{_lambda_.1} parent=95 // pred_check
          %p678 = pneg %p106
        $region106: #{_lambda_.1} parent=95 // pred_check_branch
          %680 = sbr.rel (%p678) target = $region108
        $region107: #{_lambda_.1} parent=95 // pred_region
          %p681 = scmp.lt.s32.totalorder %s34, 1
          %s682 = scalar_select %p681, %s34, 1
          %s683 = scalar_lea.vmem %s2, %s682
        $region108: #{_lambda_.1} parent=95 // pred_fallthru
          _
      $region96: #{_lambda_.1} parent=5 // pred_fallthru
        _
      %p684 = scmp.le.s32.totalorder 1, %s34
      %p685 = scmp.lt.s32.totalorder %s34, 3
      %p686 = pnand %p684, %p685
      %p687 = pneg %p686
      // Predicated region
      $region109: #{_lambda_.1} parent=5 // pred_check
        _
      $region110: #{_lambda_.1} parent=5 // pred_check_branch
        %689 = sbr.rel (%p686) target = $region112
      $region111: #{_lambda_.1} parent=5 // pred_region
        %s690 = ssub.s32 %s34, 1
        %p691 = scmp.lt.s32.totalorder %s39, 1
        %s692 = scalar_select %p691, %s39, 1
        %s693 = smul.addr %s692, 8
        %s694 = scalar_lea.vmem %s0, %s693
        %p695 = pneg %p60
        %p696 = pneg %p57
        %p697 = scmp.lt.s32.totalorder %s39, 1
        %s698 = scalar_select %p697, %s39, 1
        %s699 = smul.addr %s698, 2
        %s700 = smul.addr %s699, 8
        %s701 = scalar_lea.vmem %s1, %s700
        %p702 = pneg %p86
        %p703 = pneg %p83
        %p704 = scmp.lt.s32.totalorder %s39, 1
        %s705 = scalar_select %p704, %s39, 1
        %s706 = scalar_lea.vmem %s2, %s705
        %p707 = pneg %p112
        %p708 = pneg %p109
        %p709 = pneg %p133
        %p710 = pneg %p130
        %p711 = pneg %p154
        %p712 = pneg %p151
        %p713 = pneg %p175
        %p714 = pneg %p172
        %p715 = pneg %p196
        %p716 = pneg %p193
        %p717 = pneg %p217
        %p718 = pneg %p214
        %p719 = pneg %p238
        %p720 = pneg %p235
        %p721 = pneg %p259
        %p722 = pneg %p256
        %p723 = pneg %p280
        %p724 = pneg %p277
        %p725 = pneg %p301
        %p726 = pneg %p298
        %p727 = pneg %p322
        %p728 = pneg %p319
        %p729 = pneg %p343
        %p730 = pneg %p340
        %p731 = pneg %p364
        %p732 = pneg %p361
        %p733 = pneg %p385
        %p734 = pneg %p382
        %p735 = pneg %p406
        %p736 = pneg %p403
        %p737 = pneg %p427
        %p738 = pneg %p424
        %p739 = pneg %p448
        %p740 = pneg %p445
        %p741 = pneg %p469
        %p742 = pneg %p466
        %p743 = pneg %p490
        %p744 = pneg %p487
        %p745 = pneg %p511
        %p746 = pneg %p508
        %p747 = pneg %p532
        %p748 = pneg %p529
        %p749 = pneg %p558
        %p750 = pneg %p555
        %p751 = scmp.lt.s32.totalorder %s39, 1
        %s752 = scalar_select %p751, %s39, 1
        %s753 = smul.addr %s752, 8
        %s754 = scalar_lea.vmem %s23, %s753
        %p755 = pneg %p584
        %p756 = pneg %p581
        %s757 = sand.u32 %s571, 1
        %s758 = scalar_lea.sflag [#allocation9], %s757
        %s759 = sand.u32 %s571, 1
        %s760 = smul.addr %s759, 64
        %s761 = scalar_lea.vmem [#allocation8], %s760
        %p762 = scmp.lt.s32.totalorder %s39, 1
        %s763 = scalar_select %p762, %s39, 1
        %s764 = smul.addr %s763, 8
        %s765 = scalar_lea.vmem %s0, %s764
        %p766 = scmp.lt.s32.totalorder %s39, 1
        %s767 = scalar_select %p766, %s39, 1
        %s768 = smul.addr %s767, 2
        %s769 = smul.addr %s768, 8
        %s770 = scalar_lea.vmem %s1, %s769
        %p771 = scmp.lt.s32.totalorder %s39, 1
        %s772 = scalar_select %p771, %s39, 1
        %s773 = scalar_lea.vmem %s2, %s772
        %p774 = scmp.lt.s32.totalorder %s39, 1
        %s775 = scalar_select %p774, %s39, 1
        %s776 = smul.addr %s775, 8
        %s777 = scalar_lea.vmem %s23, %s776
        %v779 = vld [vmem:[%s765] sm:$0xff]
        %v780 = vld [vmem:[%s770] sm:$0xff]
        %v781 = vld [vmem:[%s770 + $0x8] sm:$0xff]
        %v782 = vpack.c.bf16 %v781, %v780
        %v783 = vlaneseq
        %v784 = vshrl.u32 %v783, 7
        %v785 = vlaneseq
        %v786 = vand.u32 %v785, 127
        %vm787 = vcmp.gt.s32.totalorder %v786, %v784
        %v788 = vsel %vm787, -1e+30, 0.0
        %v789 = vld [vmem:[%s773] sm:$0x1]
        %v791 = vlaneseq
        %v792 = vshrl.u32 %v791, 7
        %v793 = vsub.s32 0, %v792
        %v794 = vrot.slane %v789, %v793
        %v796 = vadd.f32 %v788, %v794
        %v797 = vpack.c.bf16 %v779, %v779
        %v798 = vld [vmem:[%s3] sm:$0xf]
        %v799 = vld [vmem:[%s3 + $0x4] sm:$0xf]
        %v800 = vld [vmem:[%s3 + $0x8] sm:$0xf]
        %v801 = vld [vmem:[%s3 + $0xc] sm:$0xf]
        %v802 = vld [vmem:[%s4] sm:$0x1]
        %v804 = vlaneseq
        %v805 = vshrl.u32 %v804, 7
        %v806 = vsub.s32 0, %v805
        %v807 = vrot.slane %v802, %v806
        %v813 = vunpack.c.l.b16 %v798
        %v814 = vunpack.c.l.b16 %v799
        %v815 = vunpack.c.l.b16 %v800
        %v816 = vunpack.c.l.b16 %v801
        %v817 = vpack.c.b16 %v814, %v813
        %v818 = vpack.c.b16 %v816, %v815
        %vm821 = vcmask 261120
        %v823 = vsel %vm821, %v797, 0
        %825 = vmatprep.subr.bf16.mxu0 0
        %826 = vmatpush1.bf16.msra.mxu0 0
        %827 = vmatprep.subr.bf16.mxu0 0
        %828 = vmatpush1.bf16.msra.mxu0 0
        %829 = vmatprep.subr.bf16.mxu0 0
        %830 = vmatpush1.bf16.msra.mxu0 0
        %831 = vmatprep.subr.bf16.mxu0 0
        %832 = vmatpush1.bf16.msra.mxu0 0
        %833 = vmatprep.subr.bf16.mxu0 0
        %834 = vmatpush1.bf16.msra.mxu0 0
        %835 = vmatprep.subr.bf16.mxu0 0
        %836 = vmatpush1.bf16.msra.mxu0 0
        %837 = vmatprep.subr.bf16.mxu0 0
        %838 = vmatpush1.bf16.msra.mxu0 %v818
        %839 = vmatprep.subr.bf16.mxu0 0
        %840 = vmatpush1.bf16.msra.mxu0 %v817
        %841 = vmatprep.subr.bf16.mxu0 0
        %842 = vmatpush2.bf16.msra.mxu0 0
        %843 = vmatprep.subr.bf16.mxu0 0
        %844 = vmatpush2.bf16.msra.mxu0 0
        %845 = vmatprep.subr.bf16.mxu0 0
        %846 = vmatpush2.bf16.msra.mxu0 0
        %847 = vmatprep.subr.bf16.mxu0 0
        %848 = vmatpush2.bf16.msra.mxu0 0
        %849 = vmatprep.subr.bf16.mxu0 0
        %850 = vmatpush2.bf16.msra.mxu0 0
        %851 = vmatprep.subr.bf16.mxu0 0
        %852 = vmatpush2.bf16.msra.mxu0 0
        %853 = vmatprep.subr.bf16.mxu0 0
        %854 = vmatpush2.bf16.msra.mxu0 0
        %855 = vmatprep.subr.bf16.mxu0 0
        %856 = vmatpush2.bf16.msra.mxu0 0
        %857 = vmatprep.mubr.bf16.mxu0 0
        %858 = vmatmul.mubr.bf16.gmra.mxu0 %v823
        %v859 = vpop.f32.mrf.mxu0
        %v860 = vadd.f32 %v807, %v859
        %v861 = vpop.f32.mrf.mxu0
        %v862 = vpop.f32.mrf.mxu0
        %v863 = vpop.f32.mrf.mxu0
        %864 = vdwg.mxu0
        %v865 = vpack.c.bf16 %v860, %v860
        %v867 = vunpack.c.l.b16 %v865
        %v868 = vpack.c.b16 %v867, %v867
        %869 = vrot.lane.b32.xlu0 %v868, 96
        %v870 = vpop.permute.xlu0 %869
        %vm872 = vcmask 60416
        %873 = vst.msk [vmem:[#allocation3] sm:$0xf] %vm872, %v870
        %874 = vrot.lane.b32.xlu0 %v868, 88
        %v875 = vpop.permute.xlu0 %874
        %s877 = scalar_lea.vmem [#allocation3], 4
        %878 = vst.msk [vmem:[%s877] sm:$0xf] %vm872, %v875
        %879 = vrot.lane.b32.xlu0 %v868, 80
        %v880 = vpop.permute.xlu0 %879
        %s882 = scalar_lea.vmem [#allocation3], 8
        %883 = vst.msk [vmem:[%s882] sm:$0xf] %vm872, %v880
        %884 = vrot.lane.b32.xlu0 %v868, 72
        %v885 = vpop.permute.xlu0 %884
        %s887 = scalar_lea.vmem [#allocation3], 12
        %888 = vst.msk [vmem:[%s887] sm:$0xf] %vm872, %v885
        %v889 = vld [vmem:[#allocation3] sm:$0xf]
        %v890 = vld [vmem:[#allocation3 + $0x4] sm:$0xf]
        %v891 = vld [vmem:[#allocation3 + $0x8] sm:$0xf]
        %v892 = vld [vmem:[#allocation3 + $0xc] sm:$0xf]
        %893 = vrot.lane.b32.xlu0 %v868, 64
        %v894 = vpop.permute.xlu0 %893
        %896 = vst.msk [vmem:[#allocation4] sm:$0xf] %vm872, %v894
        %897 = vrot.lane.b32.xlu0 %v868, 56
        %v898 = vpop.permute.xlu0 %897
        %s900 = scalar_lea.vmem [#allocation4], 4
        %901 = vst.msk [vmem:[%s900] sm:$0xf] %vm872, %v898
        %902 = vrot.lane.b32.xlu0 %v868, 48
        %v903 = vpop.permute.xlu0 %902
        %s905 = scalar_lea.vmem [#allocation4], 8
        %906 = vst.msk [vmem:[%s905] sm:$0xf] %vm872, %v903
        %907 = vrot.lane.b32.xlu0 %v868, 40
        %v908 = vpop.permute.xlu0 %907
        %s910 = scalar_lea.vmem [#allocation4], 12
        %911 = vst.msk [vmem:[%s910] sm:$0xf] %vm872, %v908
        %v912 = vld [vmem:[#allocation4] sm:$0xf]
        %v913 = vld [vmem:[#allocation4 + $0x4] sm:$0xf]
        %v914 = vld [vmem:[#allocation4 + $0x8] sm:$0xf]
        %v915 = vld [vmem:[#allocation4 + $0xc] sm:$0xf]
        %v916 = vld [vmem:[%s5] sm:$0xf]
        %v917 = vld [vmem:[%s5 + $0x4] sm:$0xf]
        %v918 = vld [vmem:[%s5 + $0x8] sm:$0xf]
        %v919 = vld [vmem:[%s5 + $0xc] sm:$0xf]
        %v920 = vld [vmem:[%s6] sm:$0x1]
        %921 = vst.msk [vmem:[#allocation2] sm:$0xf] %vm872, %v865
        %922 = vrot.lane.b32.xlu0 %v868, 120
        %v923 = vpop.permute.xlu0 %922
        %s925 = scalar_lea.vmem [#allocation2], 4
        %926 = vst.msk [vmem:[%s925] sm:$0xf] %vm872, %v923
        %927 = vrot.lane.b32.xlu0 %v868, 112
        %v928 = vpop.permute.xlu0 %927
        %s930 = scalar_lea.vmem [#allocation2], 8
        %931 = vst.msk [vmem:[%s930] sm:$0xf] %vm872, %v928
        %932 = vrot.lane.b32.xlu0 %v868, 104
        %v933 = vpop.permute.xlu0 %932
        %s935 = scalar_lea.vmem [#allocation2], 12
        %936 = vst.msk [vmem:[%s935] sm:$0xf] %vm872, %v933
        %v937 = vld [vmem:[#allocation2] sm:$0xf]
        %v938 = vld [vmem:[#allocation2 + $0x4] sm:$0xf]
        %v939 = vld [vmem:[#allocation2 + $0x8] sm:$0xf]
        %v940 = vld [vmem:[#allocation2 + $0xc] sm:$0xf]
        %vm941 = vcmask 64512
        %v943 = vsel %vm941, %v937, 0
        %v946 = vsel %vm941, %v889, 0
        %948 = vmatprep.subr.bf16.mxu0 0
        %949 = vmatpush1.bf16.xpose.msra.mxu0 0
        %950 = vmatprep.subr.bf16.mxu0 0
        %951 = vmatpush1.bf16.xpose.msra.mxu0 0
        %952 = vmatprep.subr.bf16.mxu0 0
        %953 = vmatpush1.bf16.xpose.msra.mxu0 0
        %954 = vmatprep.subr.bf16.mxu0 0
        %955 = vmatpush1.bf16.xpose.msra.mxu0 0
        %956 = vmatprep.subr.bf16.mxu0 0
        %957 = vmatpush1.bf16.xpose.msra.mxu0 0
        %958 = vmatprep.subr.bf16.mxu0 0
        %959 = vmatpush1.bf16.xpose.msra.mxu0 0
        %960 = vmatprep.subr.bf16.mxu0 0
        %961 = vmatpush1.bf16.xpose.msra.mxu0 0
        %962 = vmatprep.subr.bf16.mxu0 0
        %963 = vmatpush1.bf16.xpose.msra.mxu0 %v946
        %964 = vmatprep.subr.bf16.mxu0 0
        %965 = vmatpush2.bf16.xpose.msra.mxu0 0
        %966 = vmatprep.subr.bf16.mxu0 0
        %967 = vmatpush2.bf16.xpose.msra.mxu0 0
        %968 = vmatprep.subr.bf16.mxu0 0
        %969 = vmatpush2.bf16.xpose.msra.mxu0 0
        %970 = vmatprep.subr.bf16.mxu0 0
        %971 = vmatpush2.bf16.xpose.msra.mxu0 0
        %972 = vmatprep.subr.bf16.mxu0 0
        %973 = vmatpush2.bf16.xpose.msra.mxu0 0
        %974 = vmatprep.subr.bf16.mxu0 0
        %975 = vmatpush2.bf16.xpose.msra.mxu0 0
        %976 = vmatprep.subr.bf16.mxu0 0
        %977 = vmatpush2.bf16.xpose.msra.mxu0 0
        %978 = vmatprep.subr.bf16.mxu0 0
        %979 = vmatpush2.bf16.xpose.msra.mxu0 0
        %980 = vmatprep.mubr.bf16.mxu0 0
        %981 = vmatmul.mubr.bf16.gmra.mxu0 %v943
        %v982 = vpop.f32.mrf.mxu0
        %v983 = vadd.f32 %v796, %v982
        %v984 = vpop.f32.mrf.mxu0
        %v985 = vpop.f32.mrf.mxu0
        %v986 = vpop.f32.mrf.mxu0
        %987 = vdwg.mxu0
        %v989 = vsel %vm941, %v938, 0
        %v992 = vsel %vm941, %v890, 0
        %994 = vmatprep.subr.bf16.mxu0 0
        %995 = vmatpush1.bf16.xpose.msra.mxu0 0
        %996 = vmatprep.subr.bf16.mxu0 0
        %997 = vmatpush1.bf16.xpose.msra.mxu0 0
        %998 = vmatprep.subr.bf16.mxu0 0
        %999 = vmatpush1.bf16.xpose.msra.mxu0 0
        %1000 = vmatprep.subr.bf16.mxu0 0
        %1001 = vmatpush1.bf16.xpose.msra.mxu0 0
        %1002 = vmatprep.subr.bf16.mxu0 0
        %1003 = vmatpush1.bf16.xpose.msra.mxu0 0
        %1004 = vmatprep.subr.bf16.mxu0 0
        %1005 = vmatpush1.bf16.xpose.msra.mxu0 0
        %1006 = vmatprep.subr.bf16.mxu0 0
        %1007 = vmatpush1.bf16.xpose.msra.mxu0 0
        %1008 = vmatprep.subr.bf16.mxu0 0
        %1009 = vmatpush1.bf16.xpose.msra.mxu0 %v992
        %1010 = vmatprep.subr.bf16.mxu0 0
        %1011 = vmatpush2.bf16.xpose.msra.mxu0 0
        %1012 = vmatprep.subr.bf16.mxu0 0
        %1013 = vmatpush2.bf16.xpose.msra.mxu0 0
        %1014 = vmatprep.subr.bf16.mxu0 0
        %1015 = vmatpush2.bf16.xpose.msra.mxu0 0
        %1016 = vmatprep.subr.bf16.mxu0 0
        %1017 = vmatpush2.bf16.xpose.msra.mxu0 0
        %1018 = vmatprep.subr.bf16.mxu0 0
        %1019 = vmatpush2.bf16.xpose.msra.mxu0 0
        %1020 = vmatprep.subr.bf16.mxu0 0
        %1021 = vmatpush2.bf16.xpose.msra.mxu0 0
        %1022 = vmatprep.subr.bf16.mxu0 0
        %1023 = vmatpush2.bf16.xpose.msra.mxu0 0
        %1024 = vmatprep.subr.bf16.mxu0 0
        %1025 = vmatpush2.bf16.xpose.msra.mxu0 0
        %1026 = vmatprep.mubr.bf16.mxu0 0
        %1027 = vmatmul.mubr.bf16.gmra.mxu0 %v989
        %v1028 = vpop.f32.mrf.mxu0
        %v1029 = vadd.f32 %v796, %v1028
        %v1030 = vpop.f32.mrf.mxu0
        %v1031 = vpop.f32.mrf.mxu0
        %v1032 = vpop.f32.mrf.mxu0
        %1033 = vdwg.mxu0
        %v1035 = vsel %vm941, %v939, 0
        %v1038 = vsel %vm941, %v891, 0
        %1040 = vmatprep.subr.bf16.mxu0 0
        %1041 = vmatpush1.bf16.xpose.msra.mxu0 0
        %1042 = vmatprep.subr.bf16.mxu0 0
        %1043 = vmatpush1.bf16.xpose.msra.mxu0 0
        %1044 = vmatprep.subr.bf16.mxu0 0
        %1045 = vmatpush1.bf16.xpose.msra.mxu0 0
        %1046 = vmatprep.subr.bf16.mxu0 0
        %1047 = vmatpush1.bf16.xpose.msra.mxu0 0
        %1048 = vmatprep.subr.bf16.mxu0 0
        %1049 = vmatpush1.bf16.xpose.msra.mxu0 0
        %1050 = vmatprep.subr.bf16.mxu0 0
        %1051 = vmatpush1.bf16.xpose.msra.mxu0 0
        %1052 = vmatprep.subr.bf16.mxu0 0
        %1053 = vmatpush1.bf16.xpose.msra.mxu0 0
        %1054 = vmatprep.subr.bf16.mxu0 0
        %1055 = vmatpush1.bf16.xpose.msra.mxu0 %v1038
        %1056 = vmatprep.subr.bf16.mxu0 0
        %1057 = vmatpush2.bf16.xpose.msra.mxu0 0
        %1058 = vmatprep.subr.bf16.mxu0 0
        %1059 = vmatpush2.bf16.xpose.msra.mxu0 0
        %1060 = vmatprep.subr.bf16.mxu0 0
        %1061 = vmatpush2.bf16.xpose.msra.mxu0 0
        %1062 = vmatprep.subr.bf16.mxu0 0
        %1063 = vmatpush2.bf16.xpose.msra.mxu0 0
        %1064 = vmatprep.subr.bf16.mxu0 0
        %1065 = vmatpush2.bf16.xpose.msra.mxu0 0
        %1066 = vmatprep.subr.bf16.mxu0 0
        %1067 = vmatpush2.bf16.xpose.msra.mxu0 0
        %1068 = vmatprep.subr.bf16.mxu0 0
        %1069 = vmatpush2.bf16.xpose.msra.mxu0 0
        %1070 = vmatprep.subr.bf16.mxu0 0
        %1071 = vmatpush2.bf16.xpose.msra.mxu0 0
        %1072 = vmatprep.mubr.bf16.mxu0 0
        %1073 = vmatmul.mubr.bf16.gmra.mxu0 %v1035
        %v1074 = vpop.f32.mrf.mxu0
        %v1075 = vadd.f32 %v796, %v1074
        %v1076 = vpop.f32.mrf.mxu0
        %v1077 = vpop.f32.mrf.mxu0
        %v1078 = vpop.f32.mrf.mxu0
        %1079 = vdwg.mxu0
        %v1081 = vsel %vm941, %v940, 0
        %v1084 = vsel %vm941, %v892, 0
        %1086 = vmatprep.subr.bf16.mxu0 0
        %1087 = vmatpush1.bf16.xpose.msra.mxu0 0
        %1088 = vmatprep.subr.bf16.mxu0 0
        %1089 = vmatpush1.bf16.xpose.msra.mxu0 0
        %1090 = vmatprep.subr.bf16.mxu0 0
        %1091 = vmatpush1.bf16.xpose.msra.mxu0 0
        %1092 = vmatprep.subr.bf16.mxu0 0
        %1093 = vmatpush1.bf16.xpose.msra.mxu0 0
        %1094 = vmatprep.subr.bf16.mxu0 0
        %1095 = vmatpush1.bf16.xpose.msra.mxu0 0
        %1096 = vmatprep.subr.bf16.mxu0 0
        %1097 = vmatpush1.bf16.xpose.msra.mxu0 0
        %1098 = vmatprep.subr.bf16.mxu0 0
        %1099 = vmatpush1.bf16.xpose.msra.mxu0 0
        %1100 = vmatprep.subr.bf16.mxu0 0
        %1101 = vmatpush1.bf16.xpose.msra.mxu0 %v1084
        %1102 = vmatprep.subr.bf16.mxu0 0
        %1103 = vmatpush2.bf16.xpose.msra.mxu0 0
        %1104 = vmatprep.subr.bf16.mxu0 0
        %1105 = vmatpush2.bf16.xpose.msra.mxu0 0
        %1106 = vmatprep.subr.bf16.mxu0 0
        %1107 = vmatpush2.bf16.xpose.msra.mxu0 0
        %1108 = vmatprep.subr.bf16.mxu0 0
        %1109 = vmatpush2.bf16.xpose.msra.mxu0 0
        %1110 = vmatprep.subr.bf16.mxu0 0
        %1111 = vmatpush2.bf16.xpose.msra.mxu0 0
        %1112 = vmatprep.subr.bf16.mxu0 0
        %1113 = vmatpush2.bf16.xpose.msra.mxu0 0
        %1114 = vmatprep.subr.bf16.mxu0 0
        %1115 = vmatpush2.bf16.xpose.msra.mxu0 0
        %1116 = vmatprep.subr.bf16.mxu0 0
        %1117 = vmatpush2.bf16.xpose.msra.mxu0 0
        %1118 = vmatprep.mubr.bf16.mxu0 0
        %1119 = vmatmul.mubr.bf16.gmra.mxu0 %v1081
        %v1120 = vpop.f32.mrf.mxu0
        %v1121 = vadd.f32 %v796, %v1120
        %v1122 = vpop.f32.mrf.mxu0
        %v1123 = vpop.f32.mrf.mxu0
        %v1124 = vpop.f32.mrf.mxu0
        %1125 = vdwg.mxu0
        %v1126 = vsel %vm941, %v983, -inf
        %1127 = vmax.xlane.f32.xlu0 %v1126
        %v1128 = vpop.xlane.xlu0 %1127
        %v1129 = vsel %vm941, %v1029, -inf
        %1130 = vmax.xlane.f32.xlu0 %v1129
        %v1131 = vpop.xlane.xlu0 %1130
        %v1132 = vsel %vm941, %v1075, -inf
        %1133 = vmax.xlane.f32.xlu0 %v1132
        %v1134 = vpop.xlane.xlu0 %1133
        %v1135 = vsel %vm941, %v1121, -inf
        %1136 = vmax.xlane.f32.xlu0 %v1135
        %v1137 = vpop.xlane.xlu0 %1136
        %v1138 = vsub.f32 %v983, %v1128
        %v1139 = vsub.f32 %v1029, %v1131
        %v1140 = vsub.f32 %v1075, %v1134
        %v1141 = vsub.f32 %v1121, %v1137
        %v1142 = vmul.f32 %v1138, 1.442695
        %v1143 = vpow.pop %v1142
        %v1144 = vmul.f32 %v1139, 1.442695
        %v1145 = vpow.pop %v1144
        %v1146 = vmul.f32 %v1140, 1.442695
        %v1147 = vpow.pop %v1146
        %v1148 = vmul.f32 %v1141, 1.442695
        %v1149 = vpow.pop %v1148
        %v1150 = vsel %vm941, %v1143, 0.0
        %1151 = vadd.xlane.f32.xlu0 %v1150
        %v1152 = vpop.xlane.xlu0 %1151
        %v1153 = vsel %vm941, %v1145, 0.0
        %1154 = vadd.xlane.f32.xlu0 %v1153
        %v1155 = vpop.xlane.xlu0 %1154
        %v1156 = vsel %vm941, %v1147, 0.0
        %1157 = vadd.xlane.f32.xlu0 %v1156
        %v1158 = vpop.xlane.xlu0 %1157
        %v1159 = vsel %vm941, %v1149, 0.0
        %1160 = vadd.xlane.f32.xlu0 %v1159
        %v1161 = vpop.xlane.xlu0 %1160
        %v1162 = vrcp.pop %v1152
        %v1163 = vrcp.pop %v1155
        %v1164 = vrcp.pop %v1158
        %v1165 = vrcp.pop %v1161
        %v1166 = vmul.f32 %v1143, %v1162
        %v1167 = vmul.f32 %v1145, %v1163
        %v1168 = vmul.f32 %v1147, %v1164
        %v1169 = vmul.f32 %v1149, %v1165
        %v1170 = vpack.c.bf16 %v1166, %v1166
        %v1171 = vpack.c.bf16 %v1167, %v1167
        %v1172 = vpack.c.bf16 %v1168, %v1168
        %v1173 = vpack.c.bf16 %v1169, %v1169
        %v1175 = vsel %vm941, %v1170, 0
        %vm1177 = vcmask 1043456
        %v1179 = vsel %vm1177, %v912, 0
        %1181 = vmatprep.subr.bf16.mxu0 0
        %1182 = vmatpush1.bf16.msra.mxu0 0
        %1183 = vmatprep.subr.bf16.mxu0 0
        %1184 = vmatpush1.bf16.msra.mxu0 0
        %1185 = vmatprep.subr.bf16.mxu0 0
        %1186 = vmatpush1.bf16.msra.mxu0 0
        %1187 = vmatprep.subr.bf16.mxu0 0
        %1188 = vmatpush1.bf16.msra.mxu0 0
        %1189 = vmatprep.subr.bf16.mxu0 0
        %1190 = vmatpush1.bf16.msra.mxu0 0
        %1191 = vmatprep.subr.bf16.mxu0 0
        %1192 = vmatpush1.bf16.msra.mxu0 0
        %1193 = vmatprep.subr.bf16.mxu0 0
        %1194 = vmatpush1.bf16.msra.mxu0 0
        %1195 = vmatprep.subr.bf16.mxu0 0
        %1196 = vmatpush1.bf16.msra.mxu0 %v1179
        %1197 = vmatprep.subr.bf16.mxu0 0
        %1198 = vmatpush2.bf16.msra.mxu0 0
        %1199 = vmatprep.subr.bf16.mxu0 0
        %1200 = vmatpush2.bf16.msra.mxu0 0
        %1201 = vmatprep.subr.bf16.mxu0 0
        %1202 = vmatpush2.bf16.msra.mxu0 0
        %1203 = vmatprep.subr.bf16.mxu0 0
        %1204 = vmatpush2.bf16.msra.mxu0 0
        %1205 = vmatprep.subr.bf16.mxu0 0
        %1206 = vmatpush2.bf16.msra.mxu0 0
        %1207 = vmatprep.subr.bf16.mxu0 0
        %1208 = vmatpush2.bf16.msra.mxu0 0
        %1209 = vmatprep.subr.bf16.mxu0 0
        %1210 = vmatpush2.bf16.msra.mxu0 0
        %1211 = vmatprep.subr.bf16.mxu0 0
        %1212 = vmatpush2.bf16.msra.mxu0 0
        %1213 = vmatprep.mubr.bf16.mxu0 0
        %1214 = vmatmul.mubr.bf16.gmra.mxu0 %v1175
        %v1215 = vpop.f32.mrf.mxu0
        %v1216 = vadd.f32 0.0, %v1215
        %v1217 = vpop.f32.mrf.mxu0
        %v1218 = vpop.f32.mrf.mxu0
        %v1219 = vpop.f32.mrf.mxu0
        %1220 = vdwg.mxu0
        %v1222 = vsel %vm941, %v1171, 0
        %v1225 = vsel %vm1177, %v913, 0
        %1227 = vmatprep.subr.bf16.mxu0 0
        %1228 = vmatpush1.bf16.msra.mxu0 0
        %1229 = vmatprep.subr.bf16.mxu0 0
        %1230 = vmatpush1.bf16.msra.mxu0 0
        %1231 = vmatprep.subr.bf16.mxu0 0
        %1232 = vmatpush1.bf16.msra.mxu0 0
        %1233 = vmatprep.subr.bf16.mxu0 0
        %1234 = vmatpush1.bf16.msra.mxu0 0
        %1235 = vmatprep.subr.bf16.mxu0 0
        %1236 = vmatpush1.bf16.msra.mxu0 0
        %1237 = vmatprep.subr.bf16.mxu0 0
        %1238 = vmatpush1.bf16.msra.mxu0 0
        %1239 = vmatprep.subr.bf16.mxu0 0
        %1240 = vmatpush1.bf16.msra.mxu0 0
        %1241 = vmatprep.subr.bf16.mxu0 0
        %1242 = vmatpush1.bf16.msra.mxu0 %v1225
        %1243 = vmatprep.subr.bf16.mxu0 0
        %1244 = vmatpush2.bf16.msra.mxu0 0
        %1245 = vmatprep.subr.bf16.mxu0 0
        %1246 = vmatpush2.bf16.msra.mxu0 0
        %1247 = vmatprep.subr.bf16.mxu0 0
        %1248 = vmatpush2.bf16.msra.mxu0 0
        %1249 = vmatprep.subr.bf16.mxu0 0
        %1250 = vmatpush2.bf16.msra.mxu0 0
        %1251 = vmatprep.subr.bf16.mxu0 0
        %1252 = vmatpush2.bf16.msra.mxu0 0
        %1253 = vmatprep.subr.bf16.mxu0 0
        %1254 = vmatpush2.bf16.msra.mxu0 0
        %1255 = vmatprep.subr.bf16.mxu0 0
        %1256 = vmatpush2.bf16.msra.mxu0 0
        %1257 = vmatprep.subr.bf16.mxu0 0
        %1258 = vmatpush2.bf16.msra.mxu0 0
        %1259 = vmatprep.mubr.bf16.mxu0 0
        %1260 = vmatmul.mubr.bf16.gmra.mxu0 %v1222
        %v1261 = vpop.f32.mrf.mxu0
        %v1262 = vadd.f32 0.0, %v1261
        %v1263 = vpop.f32.mrf.mxu0
        %v1264 = vpop.f32.mrf.mxu0
        %v1265 = vpop.f32.mrf.mxu0
        %1266 = vdwg.mxu0
        %v1268 = vsel %vm941, %v1172, 0
        %v1271 = vsel %vm1177, %v914, 0
        %1273 = vmatprep.subr.bf16.mxu0 0
        %1274 = vmatpush1.bf16.msra.mxu0 0
        %1275 = vmatprep.subr.bf16.mxu0 0
        %1276 = vmatpush1.bf16.msra.mxu0 0
        %1277 = vmatprep.subr.bf16.mxu0 0
        %1278 = vmatpush1.bf16.msra.mxu0 0
        %1279 = vmatprep.subr.bf16.mxu0 0
        %1280 = vmatpush1.bf16.msra.mxu0 0
        %1281 = vmatprep.subr.bf16.mxu0 0
        %1282 = vmatpush1.bf16.msra.mxu0 0
        %1283 = vmatprep.subr.bf16.mxu0 0
        %1284 = vmatpush1.bf16.msra.mxu0 0
        %1285 = vmatprep.subr.bf16.mxu0 0
        %1286 = vmatpush1.bf16.msra.mxu0 0
        %1287 = vmatprep.subr.bf16.mxu0 0
        %1288 = vmatpush1.bf16.msra.mxu0 %v1271
        %1289 = vmatprep.subr.bf16.mxu0 0
        %1290 = vmatpush2.bf16.msra.mxu0 0
        %1291 = vmatprep.subr.bf16.mxu0 0
        %1292 = vmatpush2.bf16.msra.mxu0 0
        %1293 = vmatprep.subr.bf16.mxu0 0
        %1294 = vmatpush2.bf16.msra.mxu0 0
        %1295 = vmatprep.subr.bf16.mxu0 0
        %1296 = vmatpush2.bf16.msra.mxu0 0
        %1297 = vmatprep.subr.bf16.mxu0 0
        %1298 = vmatpush2.bf16.msra.mxu0 0
        %1299 = vmatprep.subr.bf16.mxu0 0
        %1300 = vmatpush2.bf16.msra.mxu0 0
        %1301 = vmatprep.subr.bf16.mxu0 0
        %1302 = vmatpush2.bf16.msra.mxu0 0
        %1303 = vmatprep.subr.bf16.mxu0 0
        %1304 = vmatpush2.bf16.msra.mxu0 0
        %1305 = vmatprep.mubr.bf16.mxu0 0
        %1306 = vmatmul.mubr.bf16.gmra.mxu0 %v1268
        %v1307 = vpop.f32.mrf.mxu0
        %v1308 = vadd.f32 0.0, %v1307
        %v1309 = vpop.f32.mrf.mxu0
        %v1310 = vpop.f32.mrf.mxu0
        %v1311 = vpop.f32.mrf.mxu0
        %1312 = vdwg.mxu0
        %v1314 = vsel %vm941, %v1173, 0
        %v1317 = vsel %vm1177, %v915, 0
        %1319 = vmatprep.subr.bf16.mxu0 0
        %1320 = vmatpush1.bf16.msra.mxu0 0
        %1321 = vmatprep.subr.bf16.mxu0 0
        %1322 = vmatpush1.bf16.msra.mxu0 0
        %1323 = vmatprep.subr.bf16.mxu0 0
        %1324 = vmatpush1.bf16.msra.mxu0 0
        %1325 = vmatprep.subr.bf16.mxu0 0
        %1326 = vmatpush1.bf16.msra.mxu0 0
        %1327 = vmatprep.subr.bf16.mxu0 0
        %1328 = vmatpush1.bf16.msra.mxu0 0
        %1329 = vmatprep.subr.bf16.mxu0 0
        %1330 = vmatpush1.bf16.msra.mxu0 0
        %1331 = vmatprep.subr.bf16.mxu0 0
        %1332 = vmatpush1.bf16.msra.mxu0 0
        %1333 = vmatprep.subr.bf16.mxu0 0
        %1334 = vmatpush1.bf16.msra.mxu0 %v1317
        %1335 = vmatprep.subr.bf16.mxu0 0
        %1336 = vmatpush2.bf16.msra.mxu0 0
        %1337 = vmatprep.subr.bf16.mxu0 0
        %1338 = vmatpush2.bf16.msra.mxu0 0
        %1339 = vmatprep.subr.bf16.mxu0 0
        %1340 = vmatpush2.bf16.msra.mxu0 0
        %1341 = vmatprep.subr.bf16.mxu0 0
        %1342 = vmatpush2.bf16.msra.mxu0 0
        %1343 = vmatprep.subr.bf16.mxu0 0
        %1344 = vmatpush2.bf16.msra.mxu0 0
        %1345 = vmatprep.subr.bf16.mxu0 0
        %1346 = vmatpush2.bf16.msra.mxu0 0
        %1347 = vmatprep.subr.bf16.mxu0 0
        %1348 = vmatpush2.bf16.msra.mxu0 0
        %1349 = vmatprep.subr.bf16.mxu0 0
        %1350 = vmatpush2.bf16.msra.mxu0 0
        %1351 = vmatprep.mubr.bf16.mxu0 0
        %1352 = vmatmul.mubr.bf16.gmra.mxu0 %v1314
        %v1353 = vpop.f32.mrf.mxu0
        %v1354 = vadd.f32 0.0, %v1353
        %v1355 = vpop.f32.mrf.mxu0
        %v1356 = vpop.f32.mrf.mxu0
        %v1357 = vpop.f32.mrf.mxu0
        %1358 = vdwg.mxu0
        %v1359 = vpack.c.bf16 %v1216, %v1216
        %1360 = vst.msk [vmem:[#allocation7] sm:$0xf] %vm872, %v1359
        %v1361 = vpack.c.bf16 %v1262, %v1262
        %v1363 = vunpack.c.l.b16 %v1361
        %v1364 = vpack.c.b16 %v1363, %v1363
        %1365 = vrot.lane.b32.xlu0 %v1364, 8
        %v1366 = vpop.permute.xlu0 %1365
        %vm1368 = vcmask 126016
        %1369 = vst.msk [vmem:[#allocation7] sm:$0xf] %vm1368, %v1366
        %v1370 = vpack.c.bf16 %v1308, %v1308
        %v1372 = vunpack.c.l.b16 %v1370
        %v1373 = vpack.c.b16 %v1372, %v1372
        %1374 = vrot.lane.b32.xlu0 %v1373, 16
        %v1375 = vpop.permute.xlu0 %1374
        %vm1377 = vcmask 191616
        %1378 = vst.msk [vmem:[#allocation7] sm:$0xf] %vm1377, %v1375
        %v1379 = vpack.c.bf16 %v1354, %v1354
        %v1381 = vunpack.c.l.b16 %v1379
        %v1382 = vpack.c.b16 %v1381, %v1381
        %1383 = vrot.lane.b32.xlu0 %v1382, 24
        %v1384 = vpop.permute.xlu0 %1383
        %vm1386 = vcmask 257216
        %1387 = vst.msk [vmem:[#allocation7] sm:$0xf] %vm1386, %v1384
        %v1388 = vld [vmem:[#allocation7] sm:$0xf]
        %v1390 = vlaneseq
        %v1391 = vshrl.u32 %v1390, 7
        %v1392 = vsub.s32 0, %v1391
        %v1393 = vrot.slane %v920, %v1392
        %v1399 = vunpack.c.l.b16 %v916
        %v1400 = vunpack.c.l.b16 %v917
        %v1401 = vunpack.c.l.b16 %v918
        %v1402 = vunpack.c.l.b16 %v919
        %v1403 = vpack.c.b16 %v1400, %v1399
        %v1404 = vpack.c.b16 %v1402, %v1401
        %v1408 = vsel %vm821, %v1388, 0
        %1410 = vmatprep.subr.bf16.mxu0 0
        %1411 = vmatpush1.bf16.msra.mxu0 0
        %1412 = vmatprep.subr.bf16.mxu0 0
        %1413 = vmatpush1.bf16.msra.mxu0 0
        %1414 = vmatprep.subr.bf16.mxu0 0
        %1415 = vmatpush1.bf16.msra.mxu0 0
        %1416 = vmatprep.subr.bf16.mxu0 0
        %1417 = vmatpush1.bf16.msra.mxu0 0
        %1418 = vmatprep.subr.bf16.mxu0 0
        %1419 = vmatpush1.bf16.msra.mxu0 0
        %1420 = vmatprep.subr.bf16.mxu0 0
        %1421 = vmatpush1.bf16.msra.mxu0 0
        %1422 = vmatprep.subr.bf16.mxu0 0
        %1423 = vmatpush1.bf16.msra.mxu0 %v1404
        %1424 = vmatprep.subr.bf16.mxu0 0
        %1425 = vmatpush1.bf16.msra.mxu0 %v1403
        %1426 = vmatprep.subr.bf16.mxu0 0
        %1427 = vmatpush2.bf16.msra.mxu0 0
        %1428 = vmatprep.subr.bf16.mxu0 0
        %1429 = vmatpush2.bf16.msra.mxu0 0
        %1430 = vmatprep.subr.bf16.mxu0 0
        %1431 = vmatpush2.bf16.msra.mxu0 0
        %1432 = vmatprep.subr.bf16.mxu0 0
        %1433 = vmatpush2.bf16.msra.mxu0 0
        %1434 = vmatprep.subr.bf16.mxu0 0
        %1435 = vmatpush2.bf16.msra.mxu0 0
        %1436 = vmatprep.subr.bf16.mxu0 0
        %1437 = vmatpush2.bf16.msra.mxu0 0
        %1438 = vmatprep.subr.bf16.mxu0 0
        %1439 = vmatpush2.bf16.msra.mxu0 0
        %1440 = vmatprep.subr.bf16.mxu0 0
        %1441 = vmatpush2.bf16.msra.mxu0 0
        %1442 = vmatprep.mubr.bf16.mxu0 0
        %1443 = vmatmul.mubr.bf16.gmra.mxu0 %v1408
        %v1444 = vpop.f32.mrf.mxu0
        %v1445 = vadd.f32 %v1393, %v1444
        %v1446 = vpop.f32.mrf.mxu0
        %v1447 = vpop.f32.mrf.mxu0
        %v1448 = vpop.f32.mrf.mxu0
        %1449 = vdwg.mxu0
        %v1450 = vadd.f32 %v779, %v1445
        %v1451 = vld [vmem:[%s7] sm:$0x1]
        %v1452 = vld [vmem:[%s8] sm:$0x1]
        %v1453 = vsel %vm821, %v1450, 0.0
        %1454 = vadd.xlane.f32.xlu0 %v1453
        %v1455 = vpop.xlane.xlu0 %1454
        %v1456 = vrcp.pop 32.0
        %v1457 = vmul.f32 %v1455, %v1456
        %v1458 = vmul.f32 %v1450, %v1450
        %v1459 = vsel %vm821, %v1458, 0.0
        %1460 = vadd.xlane.f32.xlu0 %v1459
        %v1461 = vpop.xlane.xlu0 %1460
        %v1462 = vmul.f32 %v1461, %v1456
        %v1463 = vmul.f32 %v1457, %v1457
        %v1464 = vsub.f32 %v1462, %v1463
        %v1465 = vsub.f32 %v1450, %v1457
        %v1466 = vadd.f32 %v1464, 1e-05
        %v1467 = vrsqrt.pop %v1466
        %v1468 = vmul.f32 %v1465, %v1467
        %v1470 = vlaneseq
        %v1471 = vshrl.u32 %v1470, 7
        %v1472 = vsub.s32 0, %v1471
        %v1473 = vrot.slane %v1451, %v1472
        %v1475 = vmul.f32 %v1468, %v1473
        %v1477 = vlaneseq
        %v1478 = vshrl.u32 %v1477, 7
        %v1479 = vsub.s32 0, %v1478
        %v1480 = vrot.slane %v1452, %v1479
        %v1482 = vadd.f32 %v1475, %v1480
        %v1483 = vpack.c.bf16 %v1482, %v1482
        %v1484 = vld [vmem:[%s9] sm:$0xf]
        %v1485 = vld [vmem:[%s9 + $0x4] sm:$0xf]
        %v1486 = vld [vmem:[%s9 + $0x8] sm:$0xf]
        %v1487 = vld [vmem:[%s9 + $0xc] sm:$0xf]
        %v1488 = vld [vmem:[%s10] sm:$0x1]
        %v1490 = vlaneseq
        %v1491 = vshrl.u32 %v1490, 7
        %v1492 = vsub.s32 0, %v1491
        %v1493 = vrot.slane %v1488, %v1492
        %v1499 = vunpack.c.l.b16 %v1484
        %v1500 = vunpack.c.l.b16 %v1485
        %v1501 = vunpack.c.l.b16 %v1486
        %v1502 = vunpack.c.l.b16 %v1487
        %v1503 = vpack.c.b16 %v1500, %v1499
        %v1504 = vpack.c.b16 %v1502, %v1501
        %v1508 = vsel %vm821, %v1483, 0
        %1510 = vmatprep.subr.bf16.mxu0 0
        %1511 = vmatpush1.bf16.msra.mxu0 0
        %1512 = vmatprep.subr.bf16.mxu0 0
        %1513 = vmatpush1.bf16.msra.mxu0 0
        %1514 = vmatprep.subr.bf16.mxu0 0
        %1515 = vmatpush1.bf16.msra.mxu0 0
        %1516 = vmatprep.subr.bf16.mxu0 0
        %1517 = vmatpush1.bf16.msra.mxu0 0
        %1518 = vmatprep.subr.bf16.mxu0 0
        %1519 = vmatpush1.bf16.msra.mxu0 0
        %1520 = vmatprep.subr.bf16.mxu0 0
        %1521 = vmatpush1.bf16.msra.mxu0 0
        %1522 = vmatprep.subr.bf16.mxu0 0
        %1523 = vmatpush1.bf16.msra.mxu0 %v1504
        %1524 = vmatprep.subr.bf16.mxu0 0
        %1525 = vmatpush1.bf16.msra.mxu0 %v1503
        %1526 = vmatprep.subr.bf16.mxu0 0
        %1527 = vmatpush2.bf16.msra.mxu0 0
        %1528 = vmatprep.subr.bf16.mxu0 0
        %1529 = vmatpush2.bf16.msra.mxu0 0
        %1530 = vmatprep.subr.bf16.mxu0 0
        %1531 = vmatpush2.bf16.msra.mxu0 0
        %1532 = vmatprep.subr.bf16.mxu0 0
        %1533 = vmatpush2.bf16.msra.mxu0 0
        %1534 = vmatprep.subr.bf16.mxu0 0
        %1535 = vmatpush2.bf16.msra.mxu0 0
        %1536 = vmatprep.subr.bf16.mxu0 0
        %1537 = vmatpush2.bf16.msra.mxu0 0
        %1538 = vmatprep.subr.bf16.mxu0 0
        %1539 = vmatpush2.bf16.msra.mxu0 0
        %1540 = vmatprep.subr.bf16.mxu0 0
        %1541 = vmatpush2.bf16.msra.mxu0 0
        %1542 = vmatprep.mubr.bf16.mxu0 0
        %1543 = vmatmul.mubr.bf16.gmra.mxu0 %v1508
        %v1544 = vpop.f32.mrf.mxu0
        %v1545 = vadd.f32 %v1493, %v1544
        %v1546 = vpop.f32.mrf.mxu0
        %v1547 = vpop.f32.mrf.mxu0
        %v1548 = vpop.f32.mrf.mxu0
        %1549 = vdwg.mxu0
        %v1550 = vld [vmem:[%s11] sm:$0xf]
        %v1551 = vld [vmem:[%s11 + $0x4] sm:$0xf]
        %v1552 = vld [vmem:[%s11 + $0x8] sm:$0xf]
        %v1553 = vld [vmem:[%s11 + $0xc] sm:$0xf]
        %v1554 = vld [vmem:[%s12] sm:$0x1]
        %v1556 = vlaneseq
        %v1557 = vshrl.u32 %v1556, 7
        %v1558 = vsub.s32 0, %v1557
        %v1559 = vrot.slane %v1554, %v1558
        %v1565 = vunpack.c.l.b16 %v1550
        %v1566 = vunpack.c.l.b16 %v1551
        %v1567 = vunpack.c.l.b16 %v1552
        %v1568 = vunpack.c.l.b16 %v1553
        %v1569 = vpack.c.b16 %v1566, %v1565
        %v1570 = vpack.c.b16 %v1568, %v1567
        %v1574 = vsel %vm821, %v782, 0
        %1576 = vmatprep.subr.bf16.mxu0 0
        %1577 = vmatpush1.bf16.msra.mxu0 0
        %1578 = vmatprep.subr.bf16.mxu0 0
        %1579 = vmatpush1.bf16.msra.mxu0 0
        %1580 = vmatprep.subr.bf16.mxu0 0
        %1581 = vmatpush1.bf16.msra.mxu0 0
        %1582 = vmatprep.subr.bf16.mxu0 0
        %1583 = vmatpush1.bf16.msra.mxu0 0
        %1584 = vmatprep.subr.bf16.mxu0 0
        %1585 = vmatpush1.bf16.msra.mxu0 0
        %1586 = vmatprep.subr.bf16.mxu0 0
        %1587 = vmatpush1.bf16.msra.mxu0 0
        %1588 = vmatprep.subr.bf16.mxu0 0
        %1589 = vmatpush1.bf16.msra.mxu0 %v1570
        %1590 = vmatprep.subr.bf16.mxu0 0
        %1591 = vmatpush1.bf16.msra.mxu0 %v1569
        %1592 = vmatprep.subr.bf16.mxu0 0
        %1593 = vmatpush2.bf16.msra.mxu0 0
        %1594 = vmatprep.subr.bf16.mxu0 0
        %1595 = vmatpush2.bf16.msra.mxu0 0
        %1596 = vmatprep.subr.bf16.mxu0 0
        %1597 = vmatpush2.bf16.msra.mxu0 0
        %1598 = vmatprep.subr.bf16.mxu0 0
        %1599 = vmatpush2.bf16.msra.mxu0 0
        %1600 = vmatprep.subr.bf16.mxu0 0
        %1601 = vmatpush2.bf16.msra.mxu0 0
        %1602 = vmatprep.subr.bf16.mxu0 0
        %1603 = vmatpush2.bf16.msra.mxu0 0
        %1604 = vmatprep.subr.bf16.mxu0 0
        %1605 = vmatpush2.bf16.msra.mxu0 0
        %1606 = vmatprep.subr.bf16.mxu0 0
        %1607 = vmatpush2.bf16.msra.mxu0 0
        %1608 = vmatprep.mubr.bf16.mxu0 0
        %1609 = vmatmul.mubr.bf16.gmra.mxu0 %v1574
        %v1610 = vpop.f32.mrf.mxu0
        %v1611 = vadd.f32 %v1559, %v1610
        %v1612 = vpop.f32.mrf.mxu0
        %v1613 = vpop.f32.mrf.mxu0
        %v1614 = vadd.f32 %v1559, %v1613
        %v1615 = vpop.f32.mrf.mxu0
        %1616 = vdwg.mxu0
        %v1617 = vpack.c.bf16 %v1614, %v1611
        %v1619 = vunpack.c.l.b16 %v1617
        %v1620 = vunpack.c.h.b16 %v1617
        %v1621 = vpack.c.b16 %v1619, %v1619
        %v1622 = vpack.c.b16 %v1620, %v1620
        %1625 = vst.msk [vmem:[#allocation5] sm:$0xf] %vm872, %v1621
        %1626 = vst.msk [vmem:[#allocation5 + $0x4] sm:$0xf] %vm872, %v1622
        %1627 = vrot.lane.b32.xlu0 %v1621, 120
        %v1628 = vpop.permute.xlu0 %1627
        %1629 = vrot.lane.b32.xlu0 %v1622, 120
        %v1630 = vpop.permute.xlu0 %1629
        %s1633 = scalar_lea.vmem [#allocation5], 8
        %1634 = vst.msk [vmem:[%s1633] sm:$0xf] %vm872, %v1628
        %1635 = vst.msk [vmem:[%s1633 + $0x4] sm:$0xf] %vm872, %v1630
        %1636 = vrot.lane.b32.xlu0 %v1621, 112
        %v1637 = vpop.permute.xlu0 %1636
        %1638 = vrot.lane.b32.xlu0 %v1622, 112
        %v1639 = vpop.permute.xlu0 %1638
        %s1642 = scalar_lea.vmem [#allocation5], 16
        %1643 = vst.msk [vmem:[%s1642] sm:$0xf] %vm872, %v1637
        %1644 = vst.msk [vmem:[%s1642 + $0x4] sm:$0xf] %vm872, %v1639
        %1645 = vrot.lane.b32.xlu0 %v1621, 104
        %v1646 = vpop.permute.xlu0 %1645
        %1647 = vrot.lane.b32.xlu0 %v1622, 104
        %v1648 = vpop.permute.xlu0 %1647
        %s1651 = scalar_lea.vmem [#allocation5], 24
        %1652 = vst.msk [vmem:[%s1651] sm:$0xf] %vm872, %v1646
        %1653 = vst.msk [vmem:[%s1651 + $0x4] sm:$0xf] %vm872, %v1648
        %v1654 = vld [vmem:[#allocation5] sm:$0xf]
        %v1655 = vld [vmem:[#allocation5 + $0x4] sm:$0xf]
        %v1656 = vld [vmem:[#allocation5 + $0x8] sm:$0xf]
        %v1657 = vld [vmem:[#allocation5 + $0xc] sm:$0xf]
        %v1658 = vld [vmem:[#allocation5 + $0x10] sm:$0xf]
        %v1659 = vld [vmem:[#allocation5 + $0x14] sm:$0xf]
        %v1660 = vld [vmem:[#allocation5 + $0x18] sm:$0xf]
        %v1661 = vld [vmem:[#allocation5 + $0x1c] sm:$0xf]
        %1662 = vrot.lane.b32.xlu0 %v1621, 96
        %v1663 = vpop.permute.xlu0 %1662
        %1664 = vrot.lane.b32.xlu0 %v1622, 96
        %v1665 = vpop.permute.xlu0 %1664
        %1668 = vst.msk [vmem:[#allocation6] sm:$0xf] %vm872, %v1663
        %1669 = vst.msk [vmem:[#allocation6 + $0x4] sm:$0xf] %vm872, %v1665
        %1670 = vrot.lane.b32.xlu0 %v1621, 88
        %v1671 = vpop.permute.xlu0 %1670
        %1672 = vrot.lane.b32.xlu0 %v1622, 88
        %v1673 = vpop.permute.xlu0 %1672
        %s1676 = scalar_lea.vmem [#allocation6], 8
        %1677 = vst.msk [vmem:[%s1676] sm:$0xf] %vm872, %v1671
        %1678 = vst.msk [vmem:[%s1676 + $0x4] sm:$0xf] %vm872, %v1673
        %1679 = vrot.lane.b32.xlu0 %v1621, 80
        %v1680 = vpop.permute.xlu0 %1679
        %1681 = vrot.lane.b32.xlu0 %v1622, 80
        %v1682 = vpop.permute.xlu0 %1681
        %s1685 = scalar_lea.vmem [#allocation6], 16
        %1686 = vst.msk [vmem:[%s1685] sm:$0xf] %vm872, %v1680
        %1687 = vst.msk [vmem:[%s1685 + $0x4] sm:$0xf] %vm872, %v1682
        %1688 = vrot.lane.b32.xlu0 %v1621, 72
        %v1689 = vpop.permute.xlu0 %1688
        %1690 = vrot.lane.b32.xlu0 %v1622, 72
        %v1691 = vpop.permute.xlu0 %1690
        %s1694 = scalar_lea.vmem [#allocation6], 24
        %1695 = vst.msk [vmem:[%s1694] sm:$0xf] %vm872, %v1689
        %1696 = vst.msk [vmem:[%s1694 + $0x4] sm:$0xf] %vm872, %v1691
        %v1697 = vld [vmem:[#allocation6] sm:$0xf]
        %v1698 = vld [vmem:[#allocation6 + $0x4] sm:$0xf]
        %v1699 = vld [vmem:[#allocation6 + $0x8] sm:$0xf]
        %v1700 = vld [vmem:[#allocation6 + $0xc] sm:$0xf]
        %v1701 = vld [vmem:[#allocation6 + $0x10] sm:$0xf]
        %v1702 = vld [vmem:[#allocation6 + $0x14] sm:$0xf]
        %v1703 = vld [vmem:[#allocation6 + $0x18] sm:$0xf]
        %v1704 = vld [vmem:[#allocation6 + $0x1c] sm:$0xf]
        %v1705 = vld [vmem:[%s13] sm:$0xf]
        %v1706 = vld [vmem:[%s13 + $0x4] sm:$0xf]
        %v1707 = vld [vmem:[%s13 + $0x8] sm:$0xf]
        %v1708 = vld [vmem:[%s13 + $0xc] sm:$0xf]
        %v1709 = vld [vmem:[%s14] sm:$0x1]
        %v1710 = vpack.c.bf16 %v1545, %v1545
        %1711 = vst.msk [vmem:[#allocation2] sm:$0xf] %vm872, %v1710
        %v1713 = vunpack.c.l.b16 %v1710
        %v1714 = vpack.c.b16 %v1713, %v1713
        %1715 = vrot.lane.b32.xlu0 %v1714, 120
        %v1716 = vpop.permute.xlu0 %1715
        %1718 = vst.msk [vmem:[%s925] sm:$0xf] %vm872, %v1716
        %1719 = vrot.lane.b32.xlu0 %v1714, 112
        %v1720 = vpop.permute.xlu0 %1719
        %1722 = vst.msk [vmem:[%s930] sm:$0xf] %vm872, %v1720
        %1723 = vrot.lane.b32.xlu0 %v1714, 104
        %v1724 = vpop.permute.xlu0 %1723
        %1726 = vst.msk [vmem:[%s935] sm:$0xf] %vm872, %v1724
        %v1727 = vld [vmem:[#allocation2] sm:$0xf]
        %v1728 = vld [vmem:[#allocation2 + $0x4] sm:$0xf]
        %v1729 = vld [vmem:[#allocation2 + $0x8] sm:$0xf]
        %v1730 = vld [vmem:[#allocation2 + $0xc] sm:$0xf]
        %v1733 = vunpack.c.l.b16 %v1654
        %v1734 = vunpack.c.l.b16 %v1655
        %v1735 = vpack.c.b16 %v1734, %v1733
        %v1737 = vsel %vm941, %v1727, 0
        %v1740 = vsel %vm941, %v1735, 0
        %1742 = vmatprep.subr.bf16.mxu0 0
        %1743 = vmatpush1.bf16.xpose.msra.mxu0 0
        %1744 = vmatprep.subr.bf16.mxu0 0
        %1745 = vmatpush1.bf16.xpose.msra.mxu0 0
        %1746 = vmatprep.subr.bf16.mxu0 0
        %1747 = vmatpush1.bf16.xpose.msra.mxu0 0
        %1748 = vmatprep.subr.bf16.mxu0 0
        %1749 = vmatpush1.bf16.xpose.msra.mxu0 0
        %1750 = vmatprep.subr.bf16.mxu0 0
        %1751 = vmatpush1.bf16.xpose.msra.mxu0 0
        %1752 = vmatprep.subr.bf16.mxu0 0
        %1753 = vmatpush1.bf16.xpose.msra.mxu0 0
        %1754 = vmatprep.subr.bf16.mxu0 0
        %1755 = vmatpush1.bf16.xpose.msra.mxu0 0
        %1756 = vmatprep.subr.bf16.mxu0 0
        %1757 = vmatpush1.bf16.xpose.msra.mxu0 %v1740
        %1758 = vmatprep.subr.bf16.mxu0 0
        %1759 = vmatpush2.bf16.xpose.msra.mxu0 0
        %1760 = vmatprep.subr.bf16.mxu0 0
        %1761 = vmatpush2.bf16.xpose.msra.mxu0 0
        %1762 = vmatprep.subr.bf16.mxu0 0
        %1763 = vmatpush2.bf16.xpose.msra.mxu0 0
        %1764 = vmatprep.subr.bf16.mxu0 0
        %1765 = vmatpush2.bf16.xpose.msra.mxu0 0
        %1766 = vmatprep.subr.bf16.mxu0 0
        %1767 = vmatpush2.bf16.xpose.msra.mxu0 0
        %1768 = vmatprep.subr.bf16.mxu0 0
        %1769 = vmatpush2.bf16.xpose.msra.mxu0 0
        %1770 = vmatprep.subr.bf16.mxu0 0
        %1771 = vmatpush2.bf16.xpose.msra.mxu0 0
        %1772 = vmatprep.subr.bf16.mxu0 0
        %1773 = vmatpush2.bf16.xpose.msra.mxu0 0
        %1774 = vmatprep.mubr.bf16.mxu0 0
        %1775 = vmatmul.mubr.bf16.gmra.mxu0 %v1737
        %v1776 = vpop.f32.mrf.mxu0
        %v1777 = vadd.f32 0.0, %v1776
        %v1778 = vpop.f32.mrf.mxu0
        %v1779 = vpop.f32.mrf.mxu0
        %v1780 = vpop.f32.mrf.mxu0
        %1781 = vdwg.mxu0
        %v1784 = vunpack.c.l.b16 %v1656
        %v1785 = vunpack.c.l.b16 %v1657
        %v1786 = vpack.c.b16 %v1785, %v1784
        %v1788 = vsel %vm941, %v1728, 0
        %v1791 = vsel %vm941, %v1786, 0
        %1793 = vmatprep.subr.bf16.mxu0 0
        %1794 = vmatpush1.bf16.xpose.msra.mxu0 0
        %1795 = vmatprep.subr.bf16.mxu0 0
        %1796 = vmatpush1.bf16.xpose.msra.mxu0 0
        %1797 = vmatprep.subr.bf16.mxu0 0
        %1798 = vmatpush1.bf16.xpose.msra.mxu0 0
        %1799 = vmatprep.subr.bf16.mxu0 0
        %1800 = vmatpush1.bf16.xpose.msra.mxu0 0
        %1801 = vmatprep.subr.bf16.mxu0 0
        %1802 = vmatpush1.bf16.xpose.msra.mxu0 0
        %1803 = vmatprep.subr.bf16.mxu0 0
        %1804 = vmatpush1.bf16.xpose.msra.mxu0 0
        %1805 = vmatprep.subr.bf16.mxu0 0
        %1806 = vmatpush1.bf16.xpose.msra.mxu0 0
        %1807 = vmatprep.subr.bf16.mxu0 0
        %1808 = vmatpush1.bf16.xpose.msra.mxu0 %v1791
        %1809 = vmatprep.subr.bf16.mxu0 0
        %1810 = vmatpush2.bf16.xpose.msra.mxu0 0
        %1811 = vmatprep.subr.bf16.mxu0 0
        %1812 = vmatpush2.bf16.xpose.msra.mxu0 0
        %1813 = vmatprep.subr.bf16.mxu0 0
        %1814 = vmatpush2.bf16.xpose.msra.mxu0 0
        %1815 = vmatprep.subr.bf16.mxu0 0
        %1816 = vmatpush2.bf16.xpose.msra.mxu0 0
        %1817 = vmatprep.subr.bf16.mxu0 0
        %1818 = vmatpush2.bf16.xpose.msra.mxu0 0
        %1819 = vmatprep.subr.bf16.mxu0 0
        %1820 = vmatpush2.bf16.xpose.msra.mxu0 0
        %1821 = vmatprep.subr.bf16.mxu0 0
        %1822 = vmatpush2.bf16.xpose.msra.mxu0 0
        %1823 = vmatprep.subr.bf16.mxu0 0
        %1824 = vmatpush2.bf16.xpose.msra.mxu0 0
        %1825 = vmatprep.mubr.bf16.mxu0 0
        %1826 = vmatmul.mubr.bf16.gmra.mxu0 %v1788
        %v1827 = vpop.f32.mrf.mxu0
        %v1828 = vadd.f32 0.0, %v1827
        %v1829 = vpop.f32.mrf.mxu0
        %v1830 = vpop.f32.mrf.mxu0
        %v1831 = vpop.f32.mrf.mxu0
        %1832 = vdwg.mxu0
        %v1835 = vunpack.c.l.b16 %v1658
        %v1836 = vunpack.c.l.b16 %v1659
        %v1837 = vpack.c.b16 %v1836, %v1835
        %v1839 = vsel %vm941, %v1729, 0
        %v1842 = vsel %vm941, %v1837, 0
        %1844 = vmatprep.subr.bf16.mxu0 0
        %1845 = vmatpush1.bf16.xpose.msra.mxu0 0
        %1846 = vmatprep.subr.bf16.mxu0 0
        %1847 = vmatpush1.bf16.xpose.msra.mxu0 0
        %1848 = vmatprep.subr.bf16.mxu0 0
        %1849 = vmatpush1.bf16.xpose.msra.mxu0 0
        %1850 = vmatprep.subr.bf16.mxu0 0
        %1851 = vmatpush1.bf16.xpose.msra.mxu0 0
        %1852 = vmatprep.subr.bf16.mxu0 0
        %1853 = vmatpush1.bf16.xpose.msra.mxu0 0
        %1854 = vmatprep.subr.bf16.mxu0 0
        %1855 = vmatpush1.bf16.xpose.msra.mxu0 0
        %1856 = vmatprep.subr.bf16.mxu0 0
        %1857 = vmatpush1.bf16.xpose.msra.mxu0 0
        %1858 = vmatprep.subr.bf16.mxu0 0
        %1859 = vmatpush1.bf16.xpose.msra.mxu0 %v1842
        %1860 = vmatprep.subr.bf16.mxu0 0
        %1861 = vmatpush2.bf16.xpose.msra.mxu0 0
        %1862 = vmatprep.subr.bf16.mxu0 0
        %1863 = vmatpush2.bf16.xpose.msra.mxu0 0
        %1864 = vmatprep.subr.bf16.mxu0 0
        %1865 = vmatpush2.bf16.xpose.msra.mxu0 0
        %1866 = vmatprep.subr.bf16.mxu0 0
        %1867 = vmatpush2.bf16.xpose.msra.mxu0 0
        %1868 = vmatprep.subr.bf16.mxu0 0
        %1869 = vmatpush2.bf16.xpose.msra.mxu0 0
        %1870 = vmatprep.subr.bf16.mxu0 0
        %1871 = vmatpush2.bf16.xpose.msra.mxu0 0
        %1872 = vmatprep.subr.bf16.mxu0 0
        %1873 = vmatpush2.bf16.xpose.msra.mxu0 0
        %1874 = vmatprep.subr.bf16.mxu0 0
        %1875 = vmatpush2.bf16.xpose.msra.mxu0 0
        %1876 = vmatprep.mubr.bf16.mxu0 0
        %1877 = vmatmul.mubr.bf16.gmra.mxu0 %v1839
        %v1878 = vpop.f32.mrf.mxu0
        %v1879 = vadd.f32 0.0, %v1878
        %v1880 = vpop.f32.mrf.mxu0
        %v1881 = vpop.f32.mrf.mxu0
        %v1882 = vpop.f32.mrf.mxu0
        %1883 = vdwg.mxu0
        %v1886 = vunpack.c.l.b16 %v1660
        %v1887 = vunpack.c.l.b16 %v1661
        %v1888 = vpack.c.b16 %v1887, %v1886
        %v1890 = vsel %vm941, %v1730, 0
        %v1893 = vsel %vm941, %v1888, 0
        %1895 = vmatprep.subr.bf16.mxu0 0
        %1896 = vmatpush1.bf16.xpose.msra.mxu0 0
        %1897 = vmatprep.subr.bf16.mxu0 0
        %1898 = vmatpush1.bf16.xpose.msra.mxu0 0
        %1899 = vmatprep.subr.bf16.mxu0 0
        %1900 = vmatpush1.bf16.xpose.msra.mxu0 0
        %1901 = vmatprep.subr.bf16.mxu0 0
        %1902 = vmatpush1.bf16.xpose.msra.mxu0 0
        %1903 = vmatprep.subr.bf16.mxu0 0
        %1904 = vmatpush1.bf16.xpose.msra.mxu0 0
        %1905 = vmatprep.subr.bf16.mxu0 0
        %1906 = vmatpush1.bf16.xpose.msra.mxu0 0
        %1907 = vmatprep.subr.bf16.mxu0 0
        %1908 = vmatpush1.bf16.xpose.msra.mxu0 0
        %1909 = vmatprep.subr.bf16.mxu0 0
        %1910 = vmatpush1.bf16.xpose.msra.mxu0 %v1893
        %1911 = vmatprep.subr.bf16.mxu0 0
        %1912 = vmatpush2.bf16.xpose.msra.mxu0 0
        %1913 = vmatprep.subr.bf16.mxu0 0
        %1914 = vmatpush2.bf16.xpose.msra.mxu0 0
        %1915 = vmatprep.subr.bf16.mxu0 0
        %1916 = vmatpush2.bf16.xpose.msra.mxu0 0
        %1917 = vmatprep.subr.bf16.mxu0 0
        %1918 = vmatpush2.bf16.xpose.msra.mxu0 0
        %1919 = vmatprep.subr.bf16.mxu0 0
        %1920 = vmatpush2.bf16.xpose.msra.mxu0 0
        %1921 = vmatprep.subr.bf16.mxu0 0
        %1922 = vmatpush2.bf16.xpose.msra.mxu0 0
        %1923 = vmatprep.subr.bf16.mxu0 0
        %1924 = vmatpush2.bf16.xpose.msra.mxu0 0
        %1925 = vmatprep.subr.bf16.mxu0 0
        %1926 = vmatpush2.bf16.xpose.msra.mxu0 0
        %1927 = vmatprep.mubr.bf16.mxu0 0
        %1928 = vmatmul.mubr.bf16.gmra.mxu0 %v1890
        %v1929 = vpop.f32.mrf.mxu0
        %v1930 = vadd.f32 0.0, %v1929
        %v1931 = vpop.f32.mrf.mxu0
        %v1932 = vpop.f32.mrf.mxu0
        %v1933 = vpop.f32.mrf.mxu0
        %1934 = vdwg.mxu0
        %vm1935 = vcmask 130048
        %v1936 = vsel %vm1935, %v1777, -inf
        %1937 = vmax.xlane.f32.xlu0 %v1936
        %v1938 = vpop.xlane.xlu0 %1937
        %v1939 = vsel %vm1935, %v1828, -inf
        %1940 = vmax.xlane.f32.xlu0 %v1939
        %v1941 = vpop.xlane.xlu0 %1940
        %v1942 = vsel %vm1935, %v1879, -inf
        %1943 = vmax.xlane.f32.xlu0 %v1942
        %v1944 = vpop.xlane.xlu0 %1943
        %v1945 = vsel %vm1935, %v1930, -inf
        %1946 = vmax.xlane.f32.xlu0 %v1945
        %v1947 = vpop.xlane.xlu0 %1946
        %v1948 = vsub.f32 %v1777, %v1938
        %v1949 = vsub.f32 %v1828, %v1941
        %v1950 = vsub.f32 %v1879, %v1944
        %v1951 = vsub.f32 %v1930, %v1947
        %v1952 = vmul.f32 %v1948, 1.442695
        %v1953 = vpow.pop %v1952
        %v1954 = vmul.f32 %v1949, 1.442695
        %v1955 = vpow.pop %v1954
        %v1956 = vmul.f32 %v1950, 1.442695
        %v1957 = vpow.pop %v1956
        %v1958 = vmul.f32 %v1951, 1.442695
        %v1959 = vpow.pop %v1958
        %v1960 = vsel %vm1935, %v1953, 0.0
        %1961 = vadd.xlane.f32.xlu0 %v1960
        %v1962 = vpop.xlane.xlu0 %1961
        %v1963 = vsel %vm1935, %v1955, 0.0
        %1964 = vadd.xlane.f32.xlu0 %v1963
        %v1965 = vpop.xlane.xlu0 %1964
        %v1966 = vsel %vm1935, %v1957, 0.0
        %1967 = vadd.xlane.f32.xlu0 %v1966
        %v1968 = vpop.xlane.xlu0 %1967
        %v1969 = vsel %vm1935, %v1959, 0.0
        %1970 = vadd.xlane.f32.xlu0 %v1969
        %v1971 = vpop.xlane.xlu0 %1970
        %v1972 = vrcp.pop %v1962
        %v1973 = vmul.f32 %v1953, %v1972
        %v1974 = vrcp.pop %v1965
        %v1975 = vmul.f32 %v1955, %v1974
        %v1976 = vrcp.pop %v1968
        %v1977 = vmul.f32 %v1957, %v1976
        %v1978 = vrcp.pop %v1971
        %v1979 = vmul.f32 %v1959, %v1978
        %1980 = vst.msk [vmem:[%s761] sm:$0xff] %vm1935, %v1973
        %1981 = vst.msk [vmem:[%s761 + $0x8] sm:$0xff] %vm1935, %v1975
        %1982 = vst.msk [vmem:[%s761 + $0x10] sm:$0xff] %vm1935, %v1977
        %1983 = vst.msk [vmem:[%s761 + $0x18] sm:$0xff] %vm1935, %v1979
        %v1984 = vpack.c.bf16 %v1973, %v1973
        %v1985 = vpack.c.bf16 %v1975, %v1975
        %v1986 = vpack.c.bf16 %v1977, %v1977
        %v1987 = vpack.c.bf16 %v1979, %v1979
        %v1990 = vunpack.c.l.b16 %v1697
        %v1991 = vunpack.c.l.b16 %v1698
        %v1992 = vpack.c.b16 %v1991, %v1990
        %v1995 = vsel %vm1935, %v1984, 0
        %1997 = vmatprep.subr.bf16.mxu0 0
        %1998 = vmatpush1.bf16.msra.mxu0 0
        %1999 = vmatprep.subr.bf16.mxu0 0
        %2000 = vmatpush1.bf16.msra.mxu0 0
        %2001 = vmatprep.subr.bf16.mxu0 0
        %2002 = vmatpush1.bf16.msra.mxu0 0
        %2003 = vmatprep.subr.bf16.mxu0 0
        %2004 = vmatpush1.bf16.msra.mxu0 0
        %2005 = vmatprep.subr.bf16.mxu0 0
        %2006 = vmatpush1.bf16.msra.mxu0 0
        %2007 = vmatprep.subr.bf16.mxu0 0
        %2008 = vmatpush1.bf16.msra.mxu0 0
        %2009 = vmatprep.subr.bf16.mxu0 0
        %2010 = vmatpush1.bf16.msra.mxu0 0
        %2011 = vmatprep.subr.bf16.mxu0 0
        %2012 = vmatpush1.bf16.msra.mxu0 %v1992
        %2013 = vmatprep.subr.bf16.mxu0 0
        %2014 = vmatpush2.bf16.msra.mxu0 0
        %2015 = vmatprep.subr.bf16.mxu0 0
        %2016 = vmatpush2.bf16.msra.mxu0 0
        %2017 = vmatprep.subr.bf16.mxu0 0
        %2018 = vmatpush2.bf16.msra.mxu0 0
        %2019 = vmatprep.subr.bf16.mxu0 0
        %2020 = vmatpush2.bf16.msra.mxu0 0
        %2021 = vmatprep.subr.bf16.mxu0 0
        %2022 = vmatpush2.bf16.msra.mxu0 0
        %2023 = vmatprep.subr.bf16.mxu0 0
        %2024 = vmatpush2.bf16.msra.mxu0 0
        %2025 = vmatprep.subr.bf16.mxu0 0
        %2026 = vmatpush2.bf16.msra.mxu0 0
        %2027 = vmatprep.subr.bf16.mxu0 0
        %2028 = vmatpush2.bf16.msra.mxu0 0
        %2029 = vmatprep.mubr.bf16.mxu0 0
        %2030 = vmatmul.mubr.bf16.gmra.mxu0 %v1995
        %v2031 = vpop.f32.mrf.mxu0
        %v2032 = vadd.f32 0.0, %v2031
        %v2033 = vpop.f32.mrf.mxu0
        %v2034 = vpop.f32.mrf.mxu0
        %v2035 = vpop.f32.mrf.mxu0
        %2036 = vdwg.mxu0
        %v2039 = vunpack.c.l.b16 %v1699
        %v2040 = vunpack.c.l.b16 %v1700
        %v2041 = vpack.c.b16 %v2040, %v2039
        %v2044 = vsel %vm1935, %v1985, 0
        %2046 = vmatprep.subr.bf16.mxu0 0
        %2047 = vmatpush1.bf16.msra.mxu0 0
        %2048 = vmatprep.subr.bf16.mxu0 0
        %2049 = vmatpush1.bf16.msra.mxu0 0
        %2050 = vmatprep.subr.bf16.mxu0 0
        %2051 = vmatpush1.bf16.msra.mxu0 0
        %2052 = vmatprep.subr.bf16.mxu0 0
        %2053 = vmatpush1.bf16.msra.mxu0 0
        %2054 = vmatprep.subr.bf16.mxu0 0
        %2055 = vmatpush1.bf16.msra.mxu0 0
        %2056 = vmatprep.subr.bf16.mxu0 0
        %2057 = vmatpush1.bf16.msra.mxu0 0
        %2058 = vmatprep.subr.bf16.mxu0 0
        %2059 = vmatpush1.bf16.msra.mxu0 0
        %2060 = vmatprep.subr.bf16.mxu0 0
        %2061 = vmatpush1.bf16.msra.mxu0 %v2041
        %2062 = vmatprep.subr.bf16.mxu0 0
        %2063 = vmatpush2.bf16.msra.mxu0 0
        %2064 = vmatprep.subr.bf16.mxu0 0
        %2065 = vmatpush2.bf16.msra.mxu0 0
        %2066 = vmatprep.subr.bf16.mxu0 0
        %2067 = vmatpush2.bf16.msra.mxu0 0
        %2068 = vmatprep.subr.bf16.mxu0 0
        %2069 = vmatpush2.bf16.msra.mxu0 0
        %2070 = vmatprep.subr.bf16.mxu0 0
        %2071 = vmatpush2.bf16.msra.mxu0 0
        %2072 = vmatprep.subr.bf16.mxu0 0
        %2073 = vmatpush2.bf16.msra.mxu0 0
        %2074 = vmatprep.subr.bf16.mxu0 0
        %2075 = vmatpush2.bf16.msra.mxu0 0
        %2076 = vmatprep.subr.bf16.mxu0 0
        %2077 = vmatpush2.bf16.msra.mxu0 0
        %2078 = vmatprep.mubr.bf16.mxu0 0
        %2079 = vmatmul.mubr.bf16.gmra.mxu0 %v2044
        %v2080 = vpop.f32.mrf.mxu0
        %v2081 = vadd.f32 0.0, %v2080
        %v2082 = vpop.f32.mrf.mxu0
        %v2083 = vpop.f32.mrf.mxu0
        %v2084 = vpop.f32.mrf.mxu0
        %2085 = vdwg.mxu0
        %v2088 = vunpack.c.l.b16 %v1701
        %v2089 = vunpack.c.l.b16 %v1702
        %v2090 = vpack.c.b16 %v2089, %v2088
        %v2093 = vsel %vm1935, %v1986, 0
        %2095 = vmatprep.subr.bf16.mxu0 0
        %2096 = vmatpush1.bf16.msra.mxu0 0
        %2097 = vmatprep.subr.bf16.mxu0 0
        %2098 = vmatpush1.bf16.msra.mxu0 0
        %2099 = vmatprep.subr.bf16.mxu0 0
        %2100 = vmatpush1.bf16.msra.mxu0 0
        %2101 = vmatprep.subr.bf16.mxu0 0
        %2102 = vmatpush1.bf16.msra.mxu0 0
        %2103 = vmatprep.subr.bf16.mxu0 0
        %2104 = vmatpush1.bf16.msra.mxu0 0
        %2105 = vmatprep.subr.bf16.mxu0 0
        %2106 = vmatpush1.bf16.msra.mxu0 0
        %2107 = vmatprep.subr.bf16.mxu0 0
        %2108 = vmatpush1.bf16.msra.mxu0 0
        %2109 = vmatprep.subr.bf16.mxu0 0
        %2110 = vmatpush1.bf16.msra.mxu0 %v2090
        %2111 = vmatprep.subr.bf16.mxu0 0
        %2112 = vmatpush2.bf16.msra.mxu0 0
        %2113 = vmatprep.subr.bf16.mxu0 0
        %2114 = vmatpush2.bf16.msra.mxu0 0
        %2115 = vmatprep.subr.bf16.mxu0 0
        %2116 = vmatpush2.bf16.msra.mxu0 0
        %2117 = vmatprep.subr.bf16.mxu0 0
        %2118 = vmatpush2.bf16.msra.mxu0 0
        %2119 = vmatprep.subr.bf16.mxu0 0
        %2120 = vmatpush2.bf16.msra.mxu0 0
        %2121 = vmatprep.subr.bf16.mxu0 0
        %2122 = vmatpush2.bf16.msra.mxu0 0
        %2123 = vmatprep.subr.bf16.mxu0 0
        %2124 = vmatpush2.bf16.msra.mxu0 0
        %2125 = vmatprep.subr.bf16.mxu0 0
        %2126 = vmatpush2.bf16.msra.mxu0 0
        %2127 = vmatprep.mubr.bf16.mxu0 0
        %2128 = vmatmul.mubr.bf16.gmra.mxu0 %v2093
        %v2129 = vpop.f32.mrf.mxu0
        %v2130 = vadd.f32 0.0, %v2129
        %v2131 = vpop.f32.mrf.mxu0
        %v2132 = vpop.f32.mrf.mxu0
        %v2133 = vpop.f32.mrf.mxu0
        %2134 = vdwg.mxu0
        %v2137 = vunpack.c.l.b16 %v1703
        %v2138 = vunpack.c.l.b16 %v1704
        %v2139 = vpack.c.b16 %v2138, %v2137
        %v2142 = vsel %vm1935, %v1987, 0
        %2144 = vmatprep.subr.bf16.mxu0 0
        %2145 = vmatpush1.bf16.msra.mxu0 0
        %2146 = vmatprep.subr.bf16.mxu0 0
        %2147 = vmatpush1.bf16.msra.mxu0 0
        %2148 = vmatprep.subr.bf16.mxu0 0
        %2149 = vmatpush1.bf16.msra.mxu0 0
        %2150 = vmatprep.subr.bf16.mxu0 0
        %2151 = vmatpush1.bf16.msra.mxu0 0
        %2152 = vmatprep.subr.bf16.mxu0 0
        %2153 = vmatpush1.bf16.msra.mxu0 0
        %2154 = vmatprep.subr.bf16.mxu0 0
        %2155 = vmatpush1.bf16.msra.mxu0 0
        %2156 = vmatprep.subr.bf16.mxu0 0
        %2157 = vmatpush1.bf16.msra.mxu0 0
        %2158 = vmatprep.subr.bf16.mxu0 0
        %2159 = vmatpush1.bf16.msra.mxu0 %v2139
        %2160 = vmatprep.subr.bf16.mxu0 0
        %2161 = vmatpush2.bf16.msra.mxu0 0
        %2162 = vmatprep.subr.bf16.mxu0 0
        %2163 = vmatpush2.bf16.msra.mxu0 0
        %2164 = vmatprep.subr.bf16.mxu0 0
        %2165 = vmatpush2.bf16.msra.mxu0 0
        %2166 = vmatprep.subr.bf16.mxu0 0
        %2167 = vmatpush2.bf16.msra.mxu0 0
        %2168 = vmatprep.subr.bf16.mxu0 0
        %2169 = vmatpush2.bf16.msra.mxu0 0
        %2170 = vmatprep.subr.bf16.mxu0 0
        %2171 = vmatpush2.bf16.msra.mxu0 0
        %2172 = vmatprep.subr.bf16.mxu0 0
        %2173 = vmatpush2.bf16.msra.mxu0 0
        %2174 = vmatprep.subr.bf16.mxu0 0
        %2175 = vmatpush2.bf16.msra.mxu0 0
        %2176 = vmatprep.mubr.bf16.mxu0 0
        %2177 = vmatmul.mubr.bf16.gmra.mxu0 %v2142
        %v2178 = vpop.f32.mrf.mxu0
        %v2179 = vadd.f32 0.0, %v2178
        %v2180 = vpop.f32.mrf.mxu0
        %v2181 = vpop.f32.mrf.mxu0
        %v2182 = vpop.f32.mrf.mxu0
        %2183 = vdwg.mxu0
        %v2184 = vpack.c.bf16 %v2032, %v2032
        %2185 = vst.msk [vmem:[#allocation7] sm:$0xf] %vm872, %v2184
        %v2186 = vpack.c.bf16 %v2081, %v2081
        %v2188 = vunpack.c.l.b16 %v2186
        %v2189 = vpack.c.b16 %v2188, %v2188
        %2190 = vrot.lane.b32.xlu0 %v2189, 8
        %v2191 = vpop.permute.xlu0 %2190
        %2193 = vst.msk [vmem:[#allocation7] sm:$0xf] %vm1368, %v2191
        %v2194 = vpack.c.bf16 %v2130, %v2130
        %v2196 = vunpack.c.l.b16 %v2194
        %v2197 = vpack.c.b16 %v2196, %v2196
        %2198 = vrot.lane.b32.xlu0 %v2197, 16
        %v2199 = vpop.permute.xlu0 %2198
        %2201 = vst.msk [vmem:[#allocation7] sm:$0xf] %vm1377, %v2199
        %v2202 = vpack.c.bf16 %v2179, %v2179
        %v2204 = vunpack.c.l.b16 %v2202
        %v2205 = vpack.c.b16 %v2204, %v2204
        %2206 = vrot.lane.b32.xlu0 %v2205, 24
        %v2207 = vpop.permute.xlu0 %2206
        %2209 = vst.msk [vmem:[#allocation7] sm:$0xf] %vm1386, %v2207
        %v2210 = vld [vmem:[#allocation7] sm:$0xf]
        %v2212 = vlaneseq
        %v2213 = vshrl.u32 %v2212, 7
        %v2214 = vsub.s32 0, %v2213
        %v2215 = vrot.slane %v1709, %v2214
        %v2221 = vunpack.c.l.b16 %v1705
        %v2222 = vunpack.c.l.b16 %v1706
        %v2223 = vunpack.c.l.b16 %v1707
        %v2224 = vunpack.c.l.b16 %v1708
        %v2225 = vpack.c.b16 %v2222, %v2221
        %v2226 = vpack.c.b16 %v2224, %v2223
        %v2230 = vsel %vm821, %v2210, 0
        %2232 = vmatprep.subr.bf16.mxu0 0
        %2233 = vmatpush1.bf16.msra.mxu0 0
        %2234 = vmatprep.subr.bf16.mxu0 0
        %2235 = vmatpush1.bf16.msra.mxu0 0
        %2236 = vmatprep.subr.bf16.mxu0 0
        %2237 = vmatpush1.bf16.msra.mxu0 0
        %2238 = vmatprep.subr.bf16.mxu0 0
        %2239 = vmatpush1.bf16.msra.mxu0 0
        %2240 = vmatprep.subr.bf16.mxu0 0
        %2241 = vmatpush1.bf16.msra.mxu0 0
        %2242 = vmatprep.subr.bf16.mxu0 0
        %2243 = vmatpush1.bf16.msra.mxu0 0
        %2244 = vmatprep.subr.bf16.mxu0 0
        %2245 = vmatpush1.bf16.msra.mxu0 %v2226
        %2246 = vmatprep.subr.bf16.mxu0 0
        %2247 = vmatpush1.bf16.msra.mxu0 %v2225
        %2248 = vmatprep.subr.bf16.mxu0 0
        %2249 = vmatpush2.bf16.msra.mxu0 0
        %2250 = vmatprep.subr.bf16.mxu0 0
        %2251 = vmatpush2.bf16.msra.mxu0 0
        %2252 = vmatprep.subr.bf16.mxu0 0
        %2253 = vmatpush2.bf16.msra.mxu0 0
        %2254 = vmatprep.subr.bf16.mxu0 0
        %2255 = vmatpush2.bf16.msra.mxu0 0
        %2256 = vmatprep.subr.bf16.mxu0 0
        %2257 = vmatpush2.bf16.msra.mxu0 0
        %2258 = vmatprep.subr.bf16.mxu0 0
        %2259 = vmatpush2.bf16.msra.mxu0 0
        %2260 = vmatprep.subr.bf16.mxu0 0
        %2261 = vmatpush2.bf16.msra.mxu0 0
        %2262 = vmatprep.subr.bf16.mxu0 0
        %2263 = vmatpush2.bf16.msra.mxu0 0
        %2264 = vmatprep.mubr.bf16.mxu0 0
        %2265 = vmatmul.mubr.bf16.gmra.mxu0 %v2230
        %v2266 = vpop.f32.mrf.mxu0
        %v2267 = vadd.f32 %v2215, %v2266
        %v2268 = vpop.f32.mrf.mxu0
        %v2269 = vpop.f32.mrf.mxu0
        %v2270 = vpop.f32.mrf.mxu0
        %2271 = vdwg.mxu0
        %v2272 = vadd.f32 %v1482, %v2267
        %v2273 = vld [vmem:[%s15] sm:$0x1]
        %v2274 = vld [vmem:[%s16] sm:$0x1]
        %v2275 = vsel %vm821, %v2272, 0.0
        %2276 = vadd.xlane.f32.xlu0 %v2275
        %v2277 = vpop.xlane.xlu0 %2276
        %v2278 = vmul.f32 %v2277, %v1456
        %v2279 = vmul.f32 %v2272, %v2272
        %v2280 = vsel %vm821, %v2279, 0.0
        %2281 = vadd.xlane.f32.xlu0 %v2280
        %v2282 = vpop.xlane.xlu0 %2281
        %v2283 = vmul.f32 %v2282, %v1456
        %v2284 = vmul.f32 %v2278, %v2278
        %v2285 = vsub.f32 %v2283, %v2284
        %v2286 = vsub.f32 %v2272, %v2278
        %v2287 = vadd.f32 %v2285, 1e-05
        %v2288 = vrsqrt.pop %v2287
        %v2289 = vmul.f32 %v2286, %v2288
        %v2291 = vlaneseq
        %v2292 = vshrl.u32 %v2291, 7
        %v2293 = vsub.s32 0, %v2292
        %v2294 = vrot.slane %v2273, %v2293
        %v2296 = vmul.f32 %v2289, %v2294
        %v2298 = vlaneseq
        %v2299 = vshrl.u32 %v2298, 7
        %v2300 = vsub.s32 0, %v2299
        %v2301 = vrot.slane %v2274, %v2300
        %v2303 = vadd.f32 %v2296, %v2301
        %v2304 = vpack.c.bf16 %v2303, %v2303
        %v2305 = vld [vmem:[%s17] sm:$0xf]
        %v2306 = vld [vmem:[%s17 + $0x4] sm:$0xf]
        %v2307 = vld [vmem:[%s17 + $0x8] sm:$0xf]
        %v2308 = vld [vmem:[%s17 + $0xc] sm:$0xf]
        %v2309 = vld [vmem:[%s18] sm:$0x1]
        %v2311 = vlaneseq
        %v2312 = vshrl.u32 %v2311, 7
        %v2313 = vsub.s32 0, %v2312
        %v2314 = vrot.slane %v2309, %v2313
        %v2320 = vunpack.c.l.b16 %v2305
        %v2321 = vunpack.c.l.b16 %v2306
        %v2322 = vunpack.c.l.b16 %v2307
        %v2323 = vunpack.c.l.b16 %v2308
        %v2324 = vpack.c.b16 %v2321, %v2320
        %v2325 = vpack.c.b16 %v2323, %v2322
        %v2329 = vsel %vm821, %v2304, 0
        %2331 = vmatprep.subr.bf16.mxu0 0
        %2332 = vmatpush1.bf16.msra.mxu0 0
        %2333 = vmatprep.subr.bf16.mxu0 0
        %2334 = vmatpush1.bf16.msra.mxu0 0
        %2335 = vmatprep.subr.bf16.mxu0 0
        %2336 = vmatpush1.bf16.msra.mxu0 0
        %2337 = vmatprep.subr.bf16.mxu0 0
        %2338 = vmatpush1.bf16.msra.mxu0 0
        %2339 = vmatprep.subr.bf16.mxu0 0
        %2340 = vmatpush1.bf16.msra.mxu0 0
        %2341 = vmatprep.subr.bf16.mxu0 0
        %2342 = vmatpush1.bf16.msra.mxu0 0
        %2343 = vmatprep.subr.bf16.mxu0 0
        %2344 = vmatpush1.bf16.msra.mxu0 %v2325
        %2345 = vmatprep.subr.bf16.mxu0 0
        %2346 = vmatpush1.bf16.msra.mxu0 %v2324
        %2347 = vmatprep.subr.bf16.mxu0 0
        %2348 = vmatpush2.bf16.msra.mxu0 0
        %2349 = vmatprep.subr.bf16.mxu0 0
        %2350 = vmatpush2.bf16.msra.mxu0 0
        %2351 = vmatprep.subr.bf16.mxu0 0
        %2352 = vmatpush2.bf16.msra.mxu0 0
        %2353 = vmatprep.subr.bf16.mxu0 0
        %2354 = vmatpush2.bf16.msra.mxu0 0
        %2355 = vmatprep.subr.bf16.mxu0 0
        %2356 = vmatpush2.bf16.msra.mxu0 0
        %2357 = vmatprep.subr.bf16.mxu0 0
        %2358 = vmatpush2.bf16.msra.mxu0 0
        %2359 = vmatprep.subr.bf16.mxu0 0
        %2360 = vmatpush2.bf16.msra.mxu0 0
        %2361 = vmatprep.subr.bf16.mxu0 0
        %2362 = vmatpush2.bf16.msra.mxu0 0
        %2363 = vmatprep.mubr.bf16.mxu0 0
        %2364 = vmatmul.mubr.bf16.gmra.mxu0 %v2329
        %v2365 = vpop.f32.mrf.mxu0
        %v2366 = vadd.f32 %v2314, %v2365
        %v2367 = vpop.f32.mrf.mxu0
        %v2368 = vpop.f32.mrf.mxu0
        %v2369 = vpop.f32.mrf.mxu0
        %2370 = vdwg.mxu0
        %v2371 = vmax.f32 %v2366, 0.0
        %v2372 = vpack.c.bf16 %v2371, %v2371
        %v2373 = vld [vmem:[%s19] sm:$0xf]
        %v2374 = vld [vmem:[%s19 + $0x4] sm:$0xf]
        %v2375 = vld [vmem:[%s19 + $0x8] sm:$0xf]
        %v2376 = vld [vmem:[%s19 + $0xc] sm:$0xf]
        %v2377 = vld [vmem:[%s19 + $0x10] sm:$0xf]
        %v2378 = vld [vmem:[%s19 + $0x14] sm:$0xf]
        %v2379 = vld [vmem:[%s19 + $0x18] sm:$0xf]
        %v2380 = vld [vmem:[%s19 + $0x1c] sm:$0xf]
        %v2381 = vld [vmem:[%s20] sm:$0x1]
        %v2383 = vlaneseq
        %v2384 = vshrl.u32 %v2383, 7
        %v2385 = vsub.s32 0, %v2384
        %v2386 = vrot.slane %v2381, %v2385
        %v2396 = vunpack.c.l.b16 %v2373
        %v2397 = vunpack.c.l.b16 %v2374
        %v2398 = vunpack.c.l.b16 %v2375
        %v2399 = vunpack.c.l.b16 %v2376
        %v2400 = vunpack.c.l.b16 %v2377
        %v2401 = vunpack.c.l.b16 %v2378
        %v2402 = vunpack.c.l.b16 %v2379
        %v2403 = vunpack.c.l.b16 %v2380
        %v2404 = vpack.c.b16 %v2397, %v2396
        %v2405 = vpack.c.b16 %v2399, %v2398
        %v2406 = vpack.c.b16 %v2401, %v2400
        %v2407 = vpack.c.b16 %v2403, %v2402
        %vm2412 = vcmask 523264
        %v2414 = vsel %vm2412, %v2372, 0
        %2416 = vmatprep.subr.bf16.mxu0 0
        %2417 = vmatpush1.bf16.msra.mxu0 0
        %2418 = vmatprep.subr.bf16.mxu0 0
        %2419 = vmatpush1.bf16.msra.mxu0 0
        %2420 = vmatprep.subr.bf16.mxu0 0
        %2421 = vmatpush1.bf16.msra.mxu0 0
        %2422 = vmatprep.subr.bf16.mxu0 0
        %2423 = vmatpush1.bf16.msra.mxu0 0
        %2424 = vmatprep.subr.bf16.mxu0 0
        %2425 = vmatpush1.bf16.msra.mxu0 %v2407
        %2426 = vmatprep.subr.bf16.mxu0 0
        %2427 = vmatpush1.bf16.msra.mxu0 %v2406
        %2428 = vmatprep.subr.bf16.mxu0 0
        %2429 = vmatpush1.bf16.msra.mxu0 %v2405
        %2430 = vmatprep.subr.bf16.mxu0 0
        %2431 = vmatpush1.bf16.msra.mxu0 %v2404
        %2432 = vmatprep.subr.bf16.mxu0 0
        %2433 = vmatpush2.bf16.msra.mxu0 0
        %2434 = vmatprep.subr.bf16.mxu0 0
        %2435 = vmatpush2.bf16.msra.mxu0 0
        %2436 = vmatprep.subr.bf16.mxu0 0
        %2437 = vmatpush2.bf16.msra.mxu0 0
        %2438 = vmatprep.subr.bf16.mxu0 0
        %2439 = vmatpush2.bf16.msra.mxu0 0
        %2440 = vmatprep.subr.bf16.mxu0 0
        %2441 = vmatpush2.bf16.msra.mxu0 0
        %2442 = vmatprep.subr.bf16.mxu0 0
        %2443 = vmatpush2.bf16.msra.mxu0 0
        %2444 = vmatprep.subr.bf16.mxu0 0
        %2445 = vmatpush2.bf16.msra.mxu0 0
        %2446 = vmatprep.subr.bf16.mxu0 0
        %2447 = vmatpush2.bf16.msra.mxu0 0
        %2448 = vmatprep.mubr.bf16.mxu0 0
        %2449 = vmatmul.mubr.bf16.gmra.mxu0 %v2414
        %v2450 = vpop.f32.mrf.mxu0
        %v2451 = vadd.f32 %v2386, %v2450
        %v2452 = vpop.f32.mrf.mxu0
        %v2453 = vpop.f32.mrf.mxu0
        %v2454 = vpop.f32.mrf.mxu0
        %2455 = vdwg.mxu0
        %v2456 = vadd.f32 %v2303, %v2451
        %v2457 = vld [vmem:[%s21] sm:$0x1]
        %v2458 = vld [vmem:[%s22] sm:$0x1]
        %v2459 = vsel %vm821, %v2456, 0.0
        %2460 = vadd.xlane.f32.xlu0 %v2459
        %v2461 = vpop.xlane.xlu0 %2460
        %v2462 = vmul.f32 %v2461, %v1456
        %v2463 = vmul.f32 %v2456, %v2456
        %v2464 = vsel %vm821, %v2463, 0.0
        %2465 = vadd.xlane.f32.xlu0 %v2464
        %v2466 = vpop.xlane.xlu0 %2465
        %v2467 = vmul.f32 %v2466, %v1456
        %v2468 = vmul.f32 %v2462, %v2462
        %v2469 = vsub.f32 %v2467, %v2468
        %v2470 = vsub.f32 %v2456, %v2462
        %v2471 = vadd.f32 %v2469, 1e-05
        %v2472 = vrsqrt.pop %v2471
        %v2473 = vmul.f32 %v2470, %v2472
        %v2475 = vlaneseq
        %v2476 = vshrl.u32 %v2475, 7
        %v2477 = vsub.s32 0, %v2476
        %v2478 = vrot.slane %v2457, %v2477
        %v2480 = vmul.f32 %v2473, %v2478
        %v2482 = vlaneseq
        %v2483 = vshrl.u32 %v2482, 7
        %v2484 = vsub.s32 0, %v2483
        %v2485 = vrot.slane %v2458, %v2484
        %v2487 = vadd.f32 %v2480, %v2485
        %v2488 = vpack.c.bf16 %v2487, %v2487
        %s2489 = scalar_lea.vmem %s3, 16
        %v2490 = vld [vmem:[%s2489] sm:$0xf]
        %v2491 = vld [vmem:[%s2489 + $0x4] sm:$0xf]
        %v2492 = vld [vmem:[%s2489 + $0x8] sm:$0xf]
        %v2493 = vld [vmem:[%s2489 + $0xc] sm:$0xf]
        %s2494 = scalar_lea.vmem %s4, 1
        %v2495 = vld [vmem:[%s2494] sm:$0x1]
        %v2497 = vlaneseq
        %v2498 = vshrl.u32 %v2497, 7
        %v2499 = vsub.s32 0, %v2498
        %v2500 = vrot.slane %v2495, %v2499
        %v2506 = vunpack.c.l.b16 %v2490
        %v2507 = vunpack.c.l.b16 %v2491
        %v2508 = vunpack.c.l.b16 %v2492
        %v2509 = vunpack.c.l.b16 %v2493
        %v2510 = vpack.c.b16 %v2507, %v2506
        %v2511 = vpack.c.b16 %v2509, %v2508
        %v2515 = vsel %vm821, %v2488, 0
        %2517 = vmatprep.subr.bf16.mxu0 0
        %2518 = vmatpush1.bf16.msra.mxu0 0
        %2519 = vmatprep.subr.bf16.mxu0 0
        %2520 = vmatpush1.bf16.msra.mxu0 0
        %2521 = vmatprep.subr.bf16.mxu0 0
        %2522 = vmatpush1.bf16.msra.mxu0 0
        %2523 = vmatprep.subr.bf16.mxu0 0
        %2524 = vmatpush1.bf16.msra.mxu0 0
        %2525 = vmatprep.subr.bf16.mxu0 0
        %2526 = vmatpush1.bf16.msra.mxu0 0
        %2527 = vmatprep.subr.bf16.mxu0 0
        %2528 = vmatpush1.bf16.msra.mxu0 0
        %2529 = vmatprep.subr.bf16.mxu0 0
        %2530 = vmatpush1.bf16.msra.mxu0 %v2511
        %2531 = vmatprep.subr.bf16.mxu0 0
        %2532 = vmatpush1.bf16.msra.mxu0 %v2510
        %2533 = vmatprep.subr.bf16.mxu0 0
        %2534 = vmatpush2.bf16.msra.mxu0 0
        %2535 = vmatprep.subr.bf16.mxu0 0
        %2536 = vmatpush2.bf16.msra.mxu0 0
        %2537 = vmatprep.subr.bf16.mxu0 0
        %2538 = vmatpush2.bf16.msra.mxu0 0
        %2539 = vmatprep.subr.bf16.mxu0 0
        %2540 = vmatpush2.bf16.msra.mxu0 0
        %2541 = vmatprep.subr.bf16.mxu0 0
        %2542 = vmatpush2.bf16.msra.mxu0 0
        %2543 = vmatprep.subr.bf16.mxu0 0
        %2544 = vmatpush2.bf16.msra.mxu0 0
        %2545 = vmatprep.subr.bf16.mxu0 0
        %2546 = vmatpush2.bf16.msra.mxu0 0
        %2547 = vmatprep.subr.bf16.mxu0 0
        %2548 = vmatpush2.bf16.msra.mxu0 0
        %2549 = vmatprep.mubr.bf16.mxu0 0
        %2550 = vmatmul.mubr.bf16.gmra.mxu0 %v2515
        %v2551 = vpop.f32.mrf.mxu0
        %v2552 = vadd.f32 %v2500, %v2551
        %v2553 = vpop.f32.mrf.mxu0
        %v2554 = vpop.f32.mrf.mxu0
        %v2555 = vpop.f32.mrf.mxu0
        %2556 = vdwg.mxu0
        %v2557 = vpack.c.bf16 %v2552, %v2552
        %v2559 = vunpack.c.l.b16 %v2557
        %v2560 = vpack.c.b16 %v2559, %v2559
        %2561 = vrot.lane.b32.xlu0 %v2560, 96
        %v2562 = vpop.permute.xlu0 %2561
        %2564 = vst.msk [vmem:[#allocation3] sm:$0xf] %vm872, %v2562
        %2565 = vrot.lane.b32.xlu0 %v2560, 88
        %v2566 = vpop.permute.xlu0 %2565
        %2568 = vst.msk [vmem:[%s877] sm:$0xf] %vm872, %v2566
        %2569 = vrot.lane.b32.xlu0 %v2560, 80
        %v2570 = vpop.permute.xlu0 %2569
        %2572 = vst.msk [vmem:[%s882] sm:$0xf] %vm872, %v2570
        %2573 = vrot.lane.b32.xlu0 %v2560, 72
        %v2574 = vpop.permute.xlu0 %2573
        %2576 = vst.msk [vmem:[%s887] sm:$0xf] %vm872, %v2574
        %v2577 = vld [vmem:[#allocation3] sm:$0xf]
        %v2578 = vld [vmem:[#allocation3 + $0x4] sm:$0xf]
        %v2579 = vld [vmem:[#allocation3 + $0x8] sm:$0xf]
        %v2580 = vld [vmem:[#allocation3 + $0xc] sm:$0xf]
        %2581 = vrot.lane.b32.xlu0 %v2560, 64
        %v2582 = vpop.permute.xlu0 %2581
        %2584 = vst.msk [vmem:[#allocation4] sm:$0xf] %vm872, %v2582
        %2585 = vrot.lane.b32.xlu0 %v2560, 56
        %v2586 = vpop.permute.xlu0 %2585
        %2588 = vst.msk [vmem:[%s900] sm:$0xf] %vm872, %v2586
        %2589 = vrot.lane.b32.xlu0 %v2560, 48
        %v2590 = vpop.permute.xlu0 %2589
        %2592 = vst.msk [vmem:[%s905] sm:$0xf] %vm872, %v2590
        %2593 = vrot.lane.b32.xlu0 %v2560, 40
        %v2594 = vpop.permute.xlu0 %2593
        %2596 = vst.msk [vmem:[%s910] sm:$0xf] %vm872, %v2594
        %v2597 = vld [vmem:[#allocation4] sm:$0xf]
        %v2598 = vld [vmem:[#allocation4 + $0x4] sm:$0xf]
        %v2599 = vld [vmem:[#allocation4 + $0x8] sm:$0xf]
        %v2600 = vld [vmem:[#allocation4 + $0xc] sm:$0xf]
        %s2601 = scalar_lea.vmem %s5, 16
        %v2602 = vld [vmem:[%s2601] sm:$0xf]
        %v2603 = vld [vmem:[%s2601 + $0x4] sm:$0xf]
        %v2604 = vld [vmem:[%s2601 + $0x8] sm:$0xf]
        %v2605 = vld [vmem:[%s2601 + $0xc] sm:$0xf]
        %s2606 = scalar_lea.vmem %s6, 1
        %v2607 = vld [vmem:[%s2606] sm:$0x1]
        %2608 = vst.msk [vmem:[#allocation2] sm:$0xf] %vm872, %v2557
        %2609 = vrot.lane.b32.xlu0 %v2560, 120
        %v2610 = vpop.permute.xlu0 %2609
        %2612 = vst.msk [vmem:[%s925] sm:$0xf] %vm872, %v2610
        %2613 = vrot.lane.b32.xlu0 %v2560, 112
        %v2614 = vpop.permute.xlu0 %2613
        %2616 = vst.msk [vmem:[%s930] sm:$0xf] %vm872, %v2614
        %2617 = vrot.lane.b32.xlu0 %v2560, 104
        %v2618 = vpop.permute.xlu0 %2617
        %2620 = vst.msk [vmem:[%s935] sm:$0xf] %vm872, %v2618
        %v2621 = vld [vmem:[#allocation2] sm:$0xf]
        %v2622 = vld [vmem:[#allocation2 + $0x4] sm:$0xf]
        %v2623 = vld [vmem:[#allocation2 + $0x8] sm:$0xf]
        %v2624 = vld [vmem:[#allocation2 + $0xc] sm:$0xf]
        %v2626 = vsel %vm941, %v2621, 0
        %v2629 = vsel %vm941, %v2577, 0
        %2631 = vmatprep.subr.bf16.mxu0 0
        %2632 = vmatpush1.bf16.xpose.msra.mxu0 0
        %2633 = vmatprep.subr.bf16.mxu0 0
        %2634 = vmatpush1.bf16.xpose.msra.mxu0 0
        %2635 = vmatprep.subr.bf16.mxu0 0
        %2636 = vmatpush1.bf16.xpose.msra.mxu0 0
        %2637 = vmatprep.subr.bf16.mxu0 0
        %2638 = vmatpush1.bf16.xpose.msra.mxu0 0
        %2639 = vmatprep.subr.bf16.mxu0 0
        %2640 = vmatpush1.bf16.xpose.msra.mxu0 0
        %2641 = vmatprep.subr.bf16.mxu0 0
        %2642 = vmatpush1.bf16.xpose.msra.mxu0 0
        %2643 = vmatprep.subr.bf16.mxu0 0
        %2644 = vmatpush1.bf16.xpose.msra.mxu0 0
        %2645 = vmatprep.subr.bf16.mxu0 0
        %2646 = vmatpush1.bf16.xpose.msra.mxu0 %v2629
        %2647 = vmatprep.subr.bf16.mxu0 0
        %2648 = vmatpush2.bf16.xpose.msra.mxu0 0
        %2649 = vmatprep.subr.bf16.mxu0 0
        %2650 = vmatpush2.bf16.xpose.msra.mxu0 0
        %2651 = vmatprep.subr.bf16.mxu0 0
        %2652 = vmatpush2.bf16.xpose.msra.mxu0 0
        %2653 = vmatprep.subr.bf16.mxu0 0
        %2654 = vmatpush2.bf16.xpose.msra.mxu0 0
        %2655 = vmatprep.subr.bf16.mxu0 0
        %2656 = vmatpush2.bf16.xpose.msra.mxu0 0
        %2657 = vmatprep.subr.bf16.mxu0 0
        %2658 = vmatpush2.bf16.xpose.msra.mxu0 0
        %2659 = vmatprep.subr.bf16.mxu0 0
        %2660 = vmatpush2.bf16.xpose.msra.mxu0 0
        %2661 = vmatprep.subr.bf16.mxu0 0
        %2662 = vmatpush2.bf16.xpose.msra.mxu0 0
        %2663 = vmatprep.mubr.bf16.mxu0 0
        %2664 = vmatmul.mubr.bf16.gmra.mxu0 %v2626
        %v2665 = vpop.f32.mrf.mxu0
        %v2666 = vadd.f32 %v796, %v2665
        %v2667 = vpop.f32.mrf.mxu0
        %v2668 = vpop.f32.mrf.mxu0
        %v2669 = vpop.f32.mrf.mxu0
        %2670 = vdwg.mxu0
        %v2672 = vsel %vm941, %v2622, 0
        %v2675 = vsel %vm941, %v2578, 0
        %2677 = vmatprep.subr.bf16.mxu0 0
        %2678 = vmatpush1.bf16.xpose.msra.mxu0 0
        %2679 = vmatprep.subr.bf16.mxu0 0
        %2680 = vmatpush1.bf16.xpose.msra.mxu0 0
        %2681 = vmatprep.subr.bf16.mxu0 0
        %2682 = vmatpush1.bf16.xpose.msra.mxu0 0
        %2683 = vmatprep.subr.bf16.mxu0 0
        %2684 = vmatpush1.bf16.xpose.msra.mxu0 0
        %2685 = vmatprep.subr.bf16.mxu0 0
        %2686 = vmatpush1.bf16.xpose.msra.mxu0 0
        %2687 = vmatprep.subr.bf16.mxu0 0
        %2688 = vmatpush1.bf16.xpose.msra.mxu0 0
        %2689 = vmatprep.subr.bf16.mxu0 0
        %2690 = vmatpush1.bf16.xpose.msra.mxu0 0
        %2691 = vmatprep.subr.bf16.mxu0 0
        %2692 = vmatpush1.bf16.xpose.msra.mxu0 %v2675
        %2693 = vmatprep.subr.bf16.mxu0 0
        %2694 = vmatpush2.bf16.xpose.msra.mxu0 0
        %2695 = vmatprep.subr.bf16.mxu0 0
        %2696 = vmatpush2.bf16.xpose.msra.mxu0 0
        %2697 = vmatprep.subr.bf16.mxu0 0
        %2698 = vmatpush2.bf16.xpose.msra.mxu0 0
        %2699 = vmatprep.subr.bf16.mxu0 0
        %2700 = vmatpush2.bf16.xpose.msra.mxu0 0
        %2701 = vmatprep.subr.bf16.mxu0 0
        %2702 = vmatpush2.bf16.xpose.msra.mxu0 0
        %2703 = vmatprep.subr.bf16.mxu0 0
        %2704 = vmatpush2.bf16.xpose.msra.mxu0 0
        %2705 = vmatprep.subr.bf16.mxu0 0
        %2706 = vmatpush2.bf16.xpose.msra.mxu0 0
        %2707 = vmatprep.subr.bf16.mxu0 0
        %2708 = vmatpush2.bf16.xpose.msra.mxu0 0
        %2709 = vmatprep.mubr.bf16.mxu0 0
        %2710 = vmatmul.mubr.bf16.gmra.mxu0 %v2672
        %v2711 = vpop.f32.mrf.mxu0
        %v2712 = vadd.f32 %v796, %v2711
        %v2713 = vpop.f32.mrf.mxu0
        %v2714 = vpop.f32.mrf.mxu0
        %v2715 = vpop.f32.mrf.mxu0
        %2716 = vdwg.mxu0
        %v2718 = vsel %vm941, %v2623, 0
        %v2721 = vsel %vm941, %v2579, 0
        %2723 = vmatprep.subr.bf16.mxu0 0
        %2724 = vmatpush1.bf16.xpose.msra.mxu0 0
        %2725 = vmatprep.subr.bf16.mxu0 0
        %2726 = vmatpush1.bf16.xpose.msra.mxu0 0
        %2727 = vmatprep.subr.bf16.mxu0 0
        %2728 = vmatpush1.bf16.xpose.msra.mxu0 0
        %2729 = vmatprep.subr.bf16.mxu0 0
        %2730 = vmatpush1.bf16.xpose.msra.mxu0 0
        %2731 = vmatprep.subr.bf16.mxu0 0
        %2732 = vmatpush1.bf16.xpose.msra.mxu0 0
        %2733 = vmatprep.subr.bf16.mxu0 0
        %2734 = vmatpush1.bf16.xpose.msra.mxu0 0
        %2735 = vmatprep.subr.bf16.mxu0 0
        %2736 = vmatpush1.bf16.xpose.msra.mxu0 0
        %2737 = vmatprep.subr.bf16.mxu0 0
        %2738 = vmatpush1.bf16.xpose.msra.mxu0 %v2721
        %2739 = vmatprep.subr.bf16.mxu0 0
        %2740 = vmatpush2.bf16.xpose.msra.mxu0 0
        %2741 = vmatprep.subr.bf16.mxu0 0
        %2742 = vmatpush2.bf16.xpose.msra.mxu0 0
        %2743 = vmatprep.subr.bf16.mxu0 0
        %2744 = vmatpush2.bf16.xpose.msra.mxu0 0
        %2745 = vmatprep.subr.bf16.mxu0 0
        %2746 = vmatpush2.bf16.xpose.msra.mxu0 0
        %2747 = vmatprep.subr.bf16.mxu0 0
        %2748 = vmatpush2.bf16.xpose.msra.mxu0 0
        %2749 = vmatprep.subr.bf16.mxu0 0
        %2750 = vmatpush2.bf16.xpose.msra.mxu0 0
        %2751 = vmatprep.subr.bf16.mxu0 0
        %2752 = vmatpush2.bf16.xpose.msra.mxu0 0
        %2753 = vmatprep.subr.bf16.mxu0 0
        %2754 = vmatpush2.bf16.xpose.msra.mxu0 0
        %2755 = vmatprep.mubr.bf16.mxu0 0
        %2756 = vmatmul.mubr.bf16.gmra.mxu0 %v2718
        %v2757 = vpop.f32.mrf.mxu0
        %v2758 = vadd.f32 %v796, %v2757
        %v2759 = vpop.f32.mrf.mxu0
        %v2760 = vpop.f32.mrf.mxu0
        %v2761 = vpop.f32.mrf.mxu0
        %2762 = vdwg.mxu0
        %v2764 = vsel %vm941, %v2624, 0
        %v2767 = vsel %vm941, %v2580, 0
        %2769 = vmatprep.subr.bf16.mxu0 0
        %2770 = vmatpush1.bf16.xpose.msra.mxu0 0
        %2771 = vmatprep.subr.bf16.mxu0 0
        %2772 = vmatpush1.bf16.xpose.msra.mxu0 0
        %2773 = vmatprep.subr.bf16.mxu0 0
        %2774 = vmatpush1.bf16.xpose.msra.mxu0 0
        %2775 = vmatprep.subr.bf16.mxu0 0
        %2776 = vmatpush1.bf16.xpose.msra.mxu0 0
        %2777 = vmatprep.subr.bf16.mxu0 0
        %2778 = vmatpush1.bf16.xpose.msra.mxu0 0
        %2779 = vmatprep.subr.bf16.mxu0 0
        %2780 = vmatpush1.bf16.xpose.msra.mxu0 0
        %2781 = vmatprep.subr.bf16.mxu0 0
        %2782 = vmatpush1.bf16.xpose.msra.mxu0 0
        %2783 = vmatprep.subr.bf16.mxu0 0
        %2784 = vmatpush1.bf16.xpose.msra.mxu0 %v2767
        %2785 = vmatprep.subr.bf16.mxu0 0
        %2786 = vmatpush2.bf16.xpose.msra.mxu0 0
        %2787 = vmatprep.subr.bf16.mxu0 0
        %2788 = vmatpush2.bf16.xpose.msra.mxu0 0
        %2789 = vmatprep.subr.bf16.mxu0 0
        %2790 = vmatpush2.bf16.xpose.msra.mxu0 0
        %2791 = vmatprep.subr.bf16.mxu0 0
        %2792 = vmatpush2.bf16.xpose.msra.mxu0 0
        %2793 = vmatprep.subr.bf16.mxu0 0
        %2794 = vmatpush2.bf16.xpose.msra.mxu0 0
        %2795 = vmatprep.subr.bf16.mxu0 0
        %2796 = vmatpush2.bf16.xpose.msra.mxu0 0
        %2797 = vmatprep.subr.bf16.mxu0 0
        %2798 = vmatpush2.bf16.xpose.msra.mxu0 0
        %2799 = vmatprep.subr.bf16.mxu0 0
        %2800 = vmatpush2.bf16.xpose.msra.mxu0 0
        %2801 = vmatprep.mubr.bf16.mxu0 0
        %2802 = vmatmul.mubr.bf16.gmra.mxu0 %v2764
        %v2803 = vpop.f32.mrf.mxu0
        %v2804 = vadd.f32 %v796, %v2803
        %v2805 = vpop.f32.mrf.mxu0
        %v2806 = vpop.f32.mrf.mxu0
        %v2807 = vpop.f32.mrf.mxu0
        %2808 = vdwg.mxu0
        %v2809 = vsel %vm941, %v2666, -inf
        %2810 = vmax.xlane.f32.xlu0 %v2809
        %v2811 = vpop.xlane.xlu0 %2810
        %v2812 = vsel %vm941, %v2712, -inf
        %2813 = vmax.xlane.f32.xlu0 %v2812
        %v2814 = vpop.xlane.xlu0 %2813
        %v2815 = vsel %vm941, %v2758, -inf
        %2816 = vmax.xlane.f32.xlu0 %v2815
        %v2817 = vpop.xlane.xlu0 %2816
        %v2818 = vsel %vm941, %v2804, -inf
        %2819 = vmax.xlane.f32.xlu0 %v2818
        %v2820 = vpop.xlane.xlu0 %2819
        %v2821 = vsub.f32 %v2666, %v2811
        %v2822 = vsub.f32 %v2712, %v2814
        %v2823 = vsub.f32 %v2758, %v2817
        %v2824 = vsub.f32 %v2804, %v2820
        %v2825 = vmul.f32 %v2821, 1.442695
        %v2826 = vpow.pop %v2825
        %v2827 = vmul.f32 %v2822, 1.442695
        %v2828 = vpow.pop %v2827
        %v2829 = vmul.f32 %v2823, 1.442695
        %v2830 = vpow.pop %v2829
        %v2831 = vmul.f32 %v2824, 1.442695
        %v2832 = vpow.pop %v2831
        %v2833 = vsel %vm941, %v2826, 0.0
        %2834 = vadd.xlane.f32.xlu0 %v2833
        %v2835 = vpop.xlane.xlu0 %2834
        %v2836 = vsel %vm941, %v2828, 0.0
        %2837 = vadd.xlane.f32.xlu0 %v2836
        %v2838 = vpop.xlane.xlu0 %2837
        %v2839 = vsel %vm941, %v2830, 0.0
        %2840 = vadd.xlane.f32.xlu0 %v2839
        %v2841 = vpop.xlane.xlu0 %2840
        %v2842 = vsel %vm941, %v2832, 0.0
        %2843 = vadd.xlane.f32.xlu0 %v2842
        %v2844 = vpop.xlane.xlu0 %2843
        %v2845 = vrcp.pop %v2835
        %v2846 = vrcp.pop %v2838
        %v2847 = vrcp.pop %v2841
        %v2848 = vrcp.pop %v2844
        %v2849 = vmul.f32 %v2826, %v2845
        %v2850 = vmul.f32 %v2828, %v2846
        %v2851 = vmul.f32 %v2830, %v2847
        %v2852 = vmul.f32 %v2832, %v2848
        %v2853 = vpack.c.bf16 %v2849, %v2849
        %v2854 = vpack.c.bf16 %v2850, %v2850
        %v2855 = vpack.c.bf16 %v2851, %v2851
        %v2856 = vpack.c.bf16 %v2852, %v2852
        %v2858 = vsel %vm941, %v2853, 0
        %v2861 = vsel %vm1177, %v2597, 0
        %2863 = vmatprep.subr.bf16.mxu0 0
        %2864 = vmatpush1.bf16.msra.mxu0 0
        %2865 = vmatprep.subr.bf16.mxu0 0
        %2866 = vmatpush1.bf16.msra.mxu0 0
        %2867 = vmatprep.subr.bf16.mxu0 0
        %2868 = vmatpush1.bf16.msra.mxu0 0
        %2869 = vmatprep.subr.bf16.mxu0 0
        %2870 = vmatpush1.bf16.msra.mxu0 0
        %2871 = vmatprep.subr.bf16.mxu0 0
        %2872 = vmatpush1.bf16.msra.mxu0 0
        %2873 = vmatprep.subr.bf16.mxu0 0
        %2874 = vmatpush1.bf16.msra.mxu0 0
        %2875 = vmatprep.subr.bf16.mxu0 0
        %2876 = vmatpush1.bf16.msra.mxu0 0
        %2877 = vmatprep.subr.bf16.mxu0 0
        %2878 = vmatpush1.bf16.msra.mxu0 %v2861
        %2879 = vmatprep.subr.bf16.mxu0 0
        %2880 = vmatpush2.bf16.msra.mxu0 0
        %2881 = vmatprep.subr.bf16.mxu0 0
        %2882 = vmatpush2.bf16.msra.mxu0 0
        %2883 = vmatprep.subr.bf16.mxu0 0
        %2884 = vmatpush2.bf16.msra.mxu0 0
        %2885 = vmatprep.subr.bf16.mxu0 0
        %2886 = vmatpush2.bf16.msra.mxu0 0
        %2887 = vmatprep.subr.bf16.mxu0 0
        %2888 = vmatpush2.bf16.msra.mxu0 0
        %2889 = vmatprep.subr.bf16.mxu0 0
        %2890 = vmatpush2.bf16.msra.mxu0 0
        %2891 = vmatprep.subr.bf16.mxu0 0
        %2892 = vmatpush2.bf16.msra.mxu0 0
        %2893 = vmatprep.subr.bf16.mxu0 0
        %2894 = vmatpush2.bf16.msra.mxu0 0
        %2895 = vmatprep.mubr.bf16.mxu0 0
        %2896 = vmatmul.mubr.bf16.gmra.mxu0 %v2858
        %v2897 = vpop.f32.mrf.mxu0
        %v2898 = vadd.f32 0.0, %v2897
        %v2899 = vpop.f32.mrf.mxu0
        %v2900 = vpop.f32.mrf.mxu0
        %v2901 = vpop.f32.mrf.mxu0
        %2902 = vdwg.mxu0
        %v2904 = vsel %vm941, %v2854, 0
        %v2907 = vsel %vm1177, %v2598, 0
        %2909 = vmatprep.subr.bf16.mxu0 0
        %2910 = vmatpush1.bf16.msra.mxu0 0
        %2911 = vmatprep.subr.bf16.mxu0 0
        %2912 = vmatpush1.bf16.msra.mxu0 0
        %2913 = vmatprep.subr.bf16.mxu0 0
        %2914 = vmatpush1.bf16.msra.mxu0 0
        %2915 = vmatprep.subr.bf16.mxu0 0
        %2916 = vmatpush1.bf16.msra.mxu0 0
        %2917 = vmatprep.subr.bf16.mxu0 0
        %2918 = vmatpush1.bf16.msra.mxu0 0
        %2919 = vmatprep.subr.bf16.mxu0 0
        %2920 = vmatpush1.bf16.msra.mxu0 0
        %2921 = vmatprep.subr.bf16.mxu0 0
        %2922 = vmatpush1.bf16.msra.mxu0 0
        %2923 = vmatprep.subr.bf16.mxu0 0
        %2924 = vmatpush1.bf16.msra.mxu0 %v2907
        %2925 = vmatprep.subr.bf16.mxu0 0
        %2926 = vmatpush2.bf16.msra.mxu0 0
        %2927 = vmatprep.subr.bf16.mxu0 0
        %2928 = vmatpush2.bf16.msra.mxu0 0
        %2929 = vmatprep.subr.bf16.mxu0 0
        %2930 = vmatpush2.bf16.msra.mxu0 0
        %2931 = vmatprep.subr.bf16.mxu0 0
        %2932 = vmatpush2.bf16.msra.mxu0 0
        %2933 = vmatprep.subr.bf16.mxu0 0
        %2934 = vmatpush2.bf16.msra.mxu0 0
        %2935 = vmatprep.subr.bf16.mxu0 0
        %2936 = vmatpush2.bf16.msra.mxu0 0
        %2937 = vmatprep.subr.bf16.mxu0 0
        %2938 = vmatpush2.bf16.msra.mxu0 0
        %2939 = vmatprep.subr.bf16.mxu0 0
        %2940 = vmatpush2.bf16.msra.mxu0 0
        %2941 = vmatprep.mubr.bf16.mxu0 0
        %2942 = vmatmul.mubr.bf16.gmra.mxu0 %v2904
        %v2943 = vpop.f32.mrf.mxu0
        %v2944 = vadd.f32 0.0, %v2943
        %v2945 = vpop.f32.mrf.mxu0
        %v2946 = vpop.f32.mrf.mxu0
        %v2947 = vpop.f32.mrf.mxu0
        %2948 = vdwg.mxu0
        %v2950 = vsel %vm941, %v2855, 0
        %v2953 = vsel %vm1177, %v2599, 0
        %2955 = vmatprep.subr.bf16.mxu0 0
        %2956 = vmatpush1.bf16.msra.mxu0 0
        %2957 = vmatprep.subr.bf16.mxu0 0
        %2958 = vmatpush1.bf16.msra.mxu0 0
        %2959 = vmatprep.subr.bf16.mxu0 0
        %2960 = vmatpush1.bf16.msra.mxu0 0
        %2961 = vmatprep.subr.bf16.mxu0 0
        %2962 = vmatpush1.bf16.msra.mxu0 0
        %2963 = vmatprep.subr.bf16.mxu0 0
        %2964 = vmatpush1.bf16.msra.mxu0 0
        %2965 = vmatprep.subr.bf16.mxu0 0
        %2966 = vmatpush1.bf16.msra.mxu0 0
        %2967 = vmatprep.subr.bf16.mxu0 0
        %2968 = vmatpush1.bf16.msra.mxu0 0
        %2969 = vmatprep.subr.bf16.mxu0 0
        %2970 = vmatpush1.bf16.msra.mxu0 %v2953
        %2971 = vmatprep.subr.bf16.mxu0 0
        %2972 = vmatpush2.bf16.msra.mxu0 0
        %2973 = vmatprep.subr.bf16.mxu0 0
        %2974 = vmatpush2.bf16.msra.mxu0 0
        %2975 = vmatprep.subr.bf16.mxu0 0
        %2976 = vmatpush2.bf16.msra.mxu0 0
        %2977 = vmatprep.subr.bf16.mxu0 0
        %2978 = vmatpush2.bf16.msra.mxu0 0
        %2979 = vmatprep.subr.bf16.mxu0 0
        %2980 = vmatpush2.bf16.msra.mxu0 0
        %2981 = vmatprep.subr.bf16.mxu0 0
        %2982 = vmatpush2.bf16.msra.mxu0 0
        %2983 = vmatprep.subr.bf16.mxu0 0
        %2984 = vmatpush2.bf16.msra.mxu0 0
        %2985 = vmatprep.subr.bf16.mxu0 0
        %2986 = vmatpush2.bf16.msra.mxu0 0
        %2987 = vmatprep.mubr.bf16.mxu0 0
        %2988 = vmatmul.mubr.bf16.gmra.mxu0 %v2950
        %v2989 = vpop.f32.mrf.mxu0
        %v2990 = vadd.f32 0.0, %v2989
        %v2991 = vpop.f32.mrf.mxu0
        %v2992 = vpop.f32.mrf.mxu0
        %v2993 = vpop.f32.mrf.mxu0
        %2994 = vdwg.mxu0
        %v2996 = vsel %vm941, %v2856, 0
        %v2999 = vsel %vm1177, %v2600, 0
        %3001 = vmatprep.subr.bf16.mxu0 0
        %3002 = vmatpush1.bf16.msra.mxu0 0
        %3003 = vmatprep.subr.bf16.mxu0 0
        %3004 = vmatpush1.bf16.msra.mxu0 0
        %3005 = vmatprep.subr.bf16.mxu0 0
        %3006 = vmatpush1.bf16.msra.mxu0 0
        %3007 = vmatprep.subr.bf16.mxu0 0
        %3008 = vmatpush1.bf16.msra.mxu0 0
        %3009 = vmatprep.subr.bf16.mxu0 0
        %3010 = vmatpush1.bf16.msra.mxu0 0
        %3011 = vmatprep.subr.bf16.mxu0 0
        %3012 = vmatpush1.bf16.msra.mxu0 0
        %3013 = vmatprep.subr.bf16.mxu0 0
        %3014 = vmatpush1.bf16.msra.mxu0 0
        %3015 = vmatprep.subr.bf16.mxu0 0
        %3016 = vmatpush1.bf16.msra.mxu0 %v2999
        %3017 = vmatprep.subr.bf16.mxu0 0
        %3018 = vmatpush2.bf16.msra.mxu0 0
        %3019 = vmatprep.subr.bf16.mxu0 0
        %3020 = vmatpush2.bf16.msra.mxu0 0
        %3021 = vmatprep.subr.bf16.mxu0 0
        %3022 = vmatpush2.bf16.msra.mxu0 0
        %3023 = vmatprep.subr.bf16.mxu0 0
        %3024 = vmatpush2.bf16.msra.mxu0 0
        %3025 = vmatprep.subr.bf16.mxu0 0
        %3026 = vmatpush2.bf16.msra.mxu0 0
        %3027 = vmatprep.subr.bf16.mxu0 0
        %3028 = vmatpush2.bf16.msra.mxu0 0
        %3029 = vmatprep.subr.bf16.mxu0 0
        %3030 = vmatpush2.bf16.msra.mxu0 0
        %3031 = vmatprep.subr.bf16.mxu0 0
        %3032 = vmatpush2.bf16.msra.mxu0 0
        %3033 = vmatprep.mubr.bf16.mxu0 0
        %3034 = vmatmul.mubr.bf16.gmra.mxu0 %v2996
        %v3035 = vpop.f32.mrf.mxu0
        %v3036 = vadd.f32 0.0, %v3035
        %v3037 = vpop.f32.mrf.mxu0
        %v3038 = vpop.f32.mrf.mxu0
        %v3039 = vpop.f32.mrf.mxu0
        %3040 = vdwg.mxu0
        %v3041 = vpack.c.bf16 %v2898, %v2898
        %3042 = vst.msk [vmem:[#allocation7] sm:$0xf] %vm872, %v3041
        %v3043 = vpack.c.bf16 %v2944, %v2944
        %v3045 = vunpack.c.l.b16 %v3043
        %v3046 = vpack.c.b16 %v3045, %v3045
        %3047 = vrot.lane.b32.xlu0 %v3046, 8
        %v3048 = vpop.permute.xlu0 %3047
        %3050 = vst.msk [vmem:[#allocation7] sm:$0xf] %vm1368, %v3048
        %v3051 = vpack.c.bf16 %v2990, %v2990
        %v3053 = vunpack.c.l.b16 %v3051
        %v3054 = vpack.c.b16 %v3053, %v3053
        %3055 = vrot.lane.b32.xlu0 %v3054, 16
        %v3056 = vpop.permute.xlu0 %3055
        %3058 = vst.msk [vmem:[#allocation7] sm:$0xf] %vm1377, %v3056
        %v3059 = vpack.c.bf16 %v3036, %v3036
        %v3061 = vunpack.c.l.b16 %v3059
        %v3062 = vpack.c.b16 %v3061, %v3061
        %3063 = vrot.lane.b32.xlu0 %v3062, 24
        %v3064 = vpop.permute.xlu0 %3063
        %3066 = vst.msk [vmem:[#allocation7] sm:$0xf] %vm1386, %v3064
        %v3067 = vld [vmem:[#allocation7] sm:$0xf]
        %v3069 = vlaneseq
        %v3070 = vshrl.u32 %v3069, 7
        %v3071 = vsub.s32 0, %v3070
        %v3072 = vrot.slane %v2607, %v3071
        %v3078 = vunpack.c.l.b16 %v2602
        %v3079 = vunpack.c.l.b16 %v2603
        %v3080 = vunpack.c.l.b16 %v2604
        %v3081 = vunpack.c.l.b16 %v2605
        %v3082 = vpack.c.b16 %v3079, %v3078
        %v3083 = vpack.c.b16 %v3081, %v3080
        %v3087 = vsel %vm821, %v3067, 0
        %3089 = vmatprep.subr.bf16.mxu0 0
        %3090 = vmatpush1.bf16.msra.mxu0 0
        %3091 = vmatprep.subr.bf16.mxu0 0
        %3092 = vmatpush1.bf16.msra.mxu0 0
        %3093 = vmatprep.subr.bf16.mxu0 0
        %3094 = vmatpush1.bf16.msra.mxu0 0
        %3095 = vmatprep.subr.bf16.mxu0 0
        %3096 = vmatpush1.bf16.msra.mxu0 0
        %3097 = vmatprep.subr.bf16.mxu0 0
        %3098 = vmatpush1.bf16.msra.mxu0 0
        %3099 = vmatprep.subr.bf16.mxu0 0
        %3100 = vmatpush1.bf16.msra.mxu0 0
        %3101 = vmatprep.subr.bf16.mxu0 0
        %3102 = vmatpush1.bf16.msra.mxu0 %v3083
        %3103 = vmatprep.subr.bf16.mxu0 0
        %3104 = vmatpush1.bf16.msra.mxu0 %v3082
        %3105 = vmatprep.subr.bf16.mxu0 0
        %3106 = vmatpush2.bf16.msra.mxu0 0
        %3107 = vmatprep.subr.bf16.mxu0 0
        %3108 = vmatpush2.bf16.msra.mxu0 0
        %3109 = vmatprep.subr.bf16.mxu0 0
        %3110 = vmatpush2.bf16.msra.mxu0 0
        %3111 = vmatprep.subr.bf16.mxu0 0
        %3112 = vmatpush2.bf16.msra.mxu0 0
        %3113 = vmatprep.subr.bf16.mxu0 0
        %3114 = vmatpush2.bf16.msra.mxu0 0
        %3115 = vmatprep.subr.bf16.mxu0 0
        %3116 = vmatpush2.bf16.msra.mxu0 0
        %3117 = vmatprep.subr.bf16.mxu0 0
        %3118 = vmatpush2.bf16.msra.mxu0 0
        %3119 = vmatprep.subr.bf16.mxu0 0
        %3120 = vmatpush2.bf16.msra.mxu0 0
        %3121 = vmatprep.mubr.bf16.mxu0 0
        %3122 = vmatmul.mubr.bf16.gmra.mxu0 %v3087
        %v3123 = vpop.f32.mrf.mxu0
        %v3124 = vadd.f32 %v3072, %v3123
        %v3125 = vpop.f32.mrf.mxu0
        %v3126 = vpop.f32.mrf.mxu0
        %v3127 = vpop.f32.mrf.mxu0
        %3128 = vdwg.mxu0
        %v3129 = vadd.f32 %v2487, %v3124
        %s3130 = scalar_lea.vmem %s7, 1
        %v3131 = vld [vmem:[%s3130] sm:$0x1]
        %s3132 = scalar_lea.vmem %s8, 1
        %v3133 = vld [vmem:[%s3132] sm:$0x1]
        %v3134 = vsel %vm821, %v3129, 0.0
        %3135 = vadd.xlane.f32.xlu0 %v3134
        %v3136 = vpop.xlane.xlu0 %3135
        %v3137 = vmul.f32 %v3136, %v1456
        %v3138 = vmul.f32 %v3129, %v3129
        %v3139 = vsel %vm821, %v3138, 0.0
        %3140 = vadd.xlane.f32.xlu0 %v3139
        %v3141 = vpop.xlane.xlu0 %3140
        %v3142 = vmul.f32 %v3141, %v1456
        %v3143 = vmul.f32 %v3137, %v3137
        %v3144 = vsub.f32 %v3142, %v3143
        %v3145 = vsub.f32 %v3129, %v3137
        %v3146 = vadd.f32 %v3144, 1e-05
        %v3147 = vrsqrt.pop %v3146
        %v3148 = vmul.f32 %v3145, %v3147
        %v3150 = vlaneseq
        %v3151 = vshrl.u32 %v3150, 7
        %v3152 = vsub.s32 0, %v3151
        %v3153 = vrot.slane %v3131, %v3152
        %v3155 = vmul.f32 %v3148, %v3153
        %v3157 = vlaneseq
        %v3158 = vshrl.u32 %v3157, 7
        %v3159 = vsub.s32 0, %v3158
        %v3160 = vrot.slane %v3133, %v3159
        %v3162 = vadd.f32 %v3155, %v3160
        %v3163 = vpack.c.bf16 %v3162, %v3162
        %s3164 = scalar_lea.vmem %s9, 16
        %v3165 = vld [vmem:[%s3164] sm:$0xf]
        %v3166 = vld [vmem:[%s3164 + $0x4] sm:$0xf]
        %v3167 = vld [vmem:[%s3164 + $0x8] sm:$0xf]
        %v3168 = vld [vmem:[%s3164 + $0xc] sm:$0xf]
        %s3169 = scalar_lea.vmem %s10, 1
        %v3170 = vld [vmem:[%s3169] sm:$0x1]
        %v3172 = vlaneseq
        %v3173 = vshrl.u32 %v3172, 7
        %v3174 = vsub.s32 0, %v3173
        %v3175 = vrot.slane %v3170, %v3174
        %v3181 = vunpack.c.l.b16 %v3165
        %v3182 = vunpack.c.l.b16 %v3166
        %v3183 = vunpack.c.l.b16 %v3167
        %v3184 = vunpack.c.l.b16 %v3168
        %v3185 = vpack.c.b16 %v3182, %v3181
        %v3186 = vpack.c.b16 %v3184, %v3183
        %v3190 = vsel %vm821, %v3163, 0
        %3192 = vmatprep.subr.bf16.mxu0 0
        %3193 = vmatpush1.bf16.msra.mxu0 0
        %3194 = vmatprep.subr.bf16.mxu0 0
        %3195 = vmatpush1.bf16.msra.mxu0 0
        %3196 = vmatprep.subr.bf16.mxu0 0
        %3197 = vmatpush1.bf16.msra.mxu0 0
        %3198 = vmatprep.subr.bf16.mxu0 0
        %3199 = vmatpush1.bf16.msra.mxu0 0
        %3200 = vmatprep.subr.bf16.mxu0 0
        %3201 = vmatpush1.bf16.msra.mxu0 0
        %3202 = vmatprep.subr.bf16.mxu0 0
        %3203 = vmatpush1.bf16.msra.mxu0 0
        %3204 = vmatprep.subr.bf16.mxu0 0
        %3205 = vmatpush1.bf16.msra.mxu0 %v3186
        %3206 = vmatprep.subr.bf16.mxu0 0
        %3207 = vmatpush1.bf16.msra.mxu0 %v3185
        %3208 = vmatprep.subr.bf16.mxu0 0
        %3209 = vmatpush2.bf16.msra.mxu0 0
        %3210 = vmatprep.subr.bf16.mxu0 0
        %3211 = vmatpush2.bf16.msra.mxu0 0
        %3212 = vmatprep.subr.bf16.mxu0 0
        %3213 = vmatpush2.bf16.msra.mxu0 0
        %3214 = vmatprep.subr.bf16.mxu0 0
        %3215 = vmatpush2.bf16.msra.mxu0 0
        %3216 = vmatprep.subr.bf16.mxu0 0
        %3217 = vmatpush2.bf16.msra.mxu0 0
        %3218 = vmatprep.subr.bf16.mxu0 0
        %3219 = vmatpush2.bf16.msra.mxu0 0
        %3220 = vmatprep.subr.bf16.mxu0 0
        %3221 = vmatpush2.bf16.msra.mxu0 0
        %3222 = vmatprep.subr.bf16.mxu0 0
        %3223 = vmatpush2.bf16.msra.mxu0 0
        %3224 = vmatprep.mubr.bf16.mxu0 0
        %3225 = vmatmul.mubr.bf16.gmra.mxu0 %v3190
        %v3226 = vpop.f32.mrf.mxu0
        %v3227 = vadd.f32 %v3175, %v3226
        %v3228 = vpop.f32.mrf.mxu0
        %v3229 = vpop.f32.mrf.mxu0
        %v3230 = vpop.f32.mrf.mxu0
        %3231 = vdwg.mxu0
        %s3232 = scalar_lea.vmem %s11, 16
        %v3233 = vld [vmem:[%s3232] sm:$0xf]
        %v3234 = vld [vmem:[%s3232 + $0x4] sm:$0xf]
        %v3235 = vld [vmem:[%s3232 + $0x8] sm:$0xf]
        %v3236 = vld [vmem:[%s3232 + $0xc] sm:$0xf]
        %s3237 = scalar_lea.vmem %s12, 1
        %v3238 = vld [vmem:[%s3237] sm:$0x1]
        %v3240 = vlaneseq
        %v3241 = vshrl.u32 %v3240, 7
        %v3242 = vsub.s32 0, %v3241
        %v3243 = vrot.slane %v3238, %v3242
        %v3249 = vunpack.c.l.b16 %v3233
        %v3250 = vunpack.c.l.b16 %v3234
        %v3251 = vunpack.c.l.b16 %v3235
        %v3252 = vunpack.c.l.b16 %v3236
        %v3253 = vpack.c.b16 %v3250, %v3249
        %v3254 = vpack.c.b16 %v3252, %v3251
        %3257 = vmatprep.subr.bf16.mxu0 0
        %3258 = vmatpush1.bf16.msra.mxu0 0
        %3259 = vmatprep.subr.bf16.mxu0 0
        %3260 = vmatpush1.bf16.msra.mxu0 0
        %3261 = vmatprep.subr.bf16.mxu0 0
        %3262 = vmatpush1.bf16.msra.mxu0 0
        %3263 = vmatprep.subr.bf16.mxu0 0
        %3264 = vmatpush1.bf16.msra.mxu0 0
        %3265 = vmatprep.subr.bf16.mxu0 0
        %3266 = vmatpush1.bf16.msra.mxu0 0
        %3267 = vmatprep.subr.bf16.mxu0 0
        %3268 = vmatpush1.bf16.msra.mxu0 0
        %3269 = vmatprep.subr.bf16.mxu0 0
        %3270 = vmatpush1.bf16.msra.mxu0 %v3254
        %3271 = vmatprep.subr.bf16.mxu0 0
        %3272 = vmatpush1.bf16.msra.mxu0 %v3253
        %3273 = vmatprep.subr.bf16.mxu0 0
        %3274 = vmatpush2.bf16.msra.mxu0 0
        %3275 = vmatprep.subr.bf16.mxu0 0
        %3276 = vmatpush2.bf16.msra.mxu0 0
        %3277 = vmatprep.subr.bf16.mxu0 0
        %3278 = vmatpush2.bf16.msra.mxu0 0
        %3279 = vmatprep.subr.bf16.mxu0 0
        %3280 = vmatpush2.bf16.msra.mxu0 0
        %3281 = vmatprep.subr.bf16.mxu0 0
        %3282 = vmatpush2.bf16.msra.mxu0 0
        %3283 = vmatprep.subr.bf16.mxu0 0
        %3284 = vmatpush2.bf16.msra.mxu0 0
        %3285 = vmatprep.subr.bf16.mxu0 0
        %3286 = vmatpush2.bf16.msra.mxu0 0
        %3287 = vmatprep.subr.bf16.mxu0 0
        %3288 = vmatpush2.bf16.msra.mxu0 0
        %3289 = vmatprep.mubr.bf16.mxu0 0
        %3290 = vmatmul.mubr.bf16.gmra.mxu0 %v1574
        %v3291 = vpop.f32.mrf.mxu0
        %v3292 = vadd.f32 %v3243, %v3291
        %v3293 = vpop.f32.mrf.mxu0
        %v3294 = vpop.f32.mrf.mxu0
        %v3295 = vadd.f32 %v3243, %v3294
        %v3296 = vpop.f32.mrf.mxu0
        %3297 = vdwg.mxu0
        %v3298 = vpack.c.bf16 %v3295, %v3292
        %v3300 = vunpack.c.l.b16 %v3298
        %v3301 = vunpack.c.h.b16 %v3298
        %v3302 = vpack.c.b16 %v3300, %v3300
        %v3303 = vpack.c.b16 %v3301, %v3301
        %3306 = vst.msk [vmem:[#allocation5] sm:$0xf] %vm872, %v3302
        %3307 = vst.msk [vmem:[#allocation5 + $0x4] sm:$0xf] %vm872, %v3303
        %3308 = vrot.lane.b32.xlu0 %v3302, 120
        %v3309 = vpop.permute.xlu0 %3308
        %3310 = vrot.lane.b32.xlu0 %v3303, 120
        %v3311 = vpop.permute.xlu0 %3310
        %3314 = vst.msk [vmem:[%s1633] sm:$0xf] %vm872, %v3309
        %3315 = vst.msk [vmem:[%s1633 + $0x4] sm:$0xf] %vm872, %v3311
        %3316 = vrot.lane.b32.xlu0 %v3302, 112
        %v3317 = vpop.permute.xlu0 %3316
        %3318 = vrot.lane.b32.xlu0 %v3303, 112
        %v3319 = vpop.permute.xlu0 %3318
        %3322 = vst.msk [vmem:[%s1642] sm:$0xf] %vm872, %v3317
        %3323 = vst.msk [vmem:[%s1642 + $0x4] sm:$0xf] %vm872, %v3319
        %3324 = vrot.lane.b32.xlu0 %v3302, 104
        %v3325 = vpop.permute.xlu0 %3324
        %3326 = vrot.lane.b32.xlu0 %v3303, 104
        %v3327 = vpop.permute.xlu0 %3326
        %3330 = vst.msk [vmem:[%s1651] sm:$0xf] %vm872, %v3325
        %3331 = vst.msk [vmem:[%s1651 + $0x4] sm:$0xf] %vm872, %v3327
        %v3332 = vld [vmem:[#allocation5] sm:$0xf]
        %v3333 = vld [vmem:[#allocation5 + $0x4] sm:$0xf]
        %v3334 = vld [vmem:[#allocation5 + $0x8] sm:$0xf]
        %v3335 = vld [vmem:[#allocation5 + $0xc] sm:$0xf]
        %v3336 = vld [vmem:[#allocation5 + $0x10] sm:$0xf]
        %v3337 = vld [vmem:[#allocation5 + $0x14] sm:$0xf]
        %v3338 = vld [vmem:[#allocation5 + $0x18] sm:$0xf]
        %v3339 = vld [vmem:[#allocation5 + $0x1c] sm:$0xf]
        %3340 = vrot.lane.b32.xlu0 %v3302, 96
        %v3341 = vpop.permute.xlu0 %3340
        %3342 = vrot.lane.b32.xlu0 %v3303, 96
        %v3343 = vpop.permute.xlu0 %3342
        %3346 = vst.msk [vmem:[#allocation6] sm:$0xf] %vm872, %v3341
        %3347 = vst.msk [vmem:[#allocation6 + $0x4] sm:$0xf] %vm872, %v3343
        %3348 = vrot.lane.b32.xlu0 %v3302, 88
        %v3349 = vpop.permute.xlu0 %3348
        %3350 = vrot.lane.b32.xlu0 %v3303, 88
        %v3351 = vpop.permute.xlu0 %3350
        %3354 = vst.msk [vmem:[%s1676] sm:$0xf] %vm872, %v3349
        %3355 = vst.msk [vmem:[%s1676 + $0x4] sm:$0xf] %vm872, %v3351
        %3356 = vrot.lane.b32.xlu0 %v3302, 80
        %v3357 = vpop.permute.xlu0 %3356
        %3358 = vrot.lane.b32.xlu0 %v3303, 80
        %v3359 = vpop.permute.xlu0 %3358
        %3362 = vst.msk [vmem:[%s1685] sm:$0xf] %vm872, %v3357
        %3363 = vst.msk [vmem:[%s1685 + $0x4] sm:$0xf] %vm872, %v3359
        %3364 = vrot.lane.b32.xlu0 %v3302, 72
        %v3365 = vpop.permute.xlu0 %3364
        %3366 = vrot.lane.b32.xlu0 %v3303, 72
        %v3367 = vpop.permute.xlu0 %3366
        %3370 = vst.msk [vmem:[%s1694] sm:$0xf] %vm872, %v3365
        %3371 = vst.msk [vmem:[%s1694 + $0x4] sm:$0xf] %vm872, %v3367
        %v3372 = vld [vmem:[#allocation6] sm:$0xf]
        %v3373 = vld [vmem:[#allocation6 + $0x4] sm:$0xf]
        %v3374 = vld [vmem:[#allocation6 + $0x8] sm:$0xf]
        %v3375 = vld [vmem:[#allocation6 + $0xc] sm:$0xf]
        %v3376 = vld [vmem:[#allocation6 + $0x10] sm:$0xf]
        %v3377 = vld [vmem:[#allocation6 + $0x14] sm:$0xf]
        %v3378 = vld [vmem:[#allocation6 + $0x18] sm:$0xf]
        %v3379 = vld [vmem:[#allocation6 + $0x1c] sm:$0xf]
        %s3380 = scalar_lea.vmem %s13, 16
        %v3381 = vld [vmem:[%s3380] sm:$0xf]
        %v3382 = vld [vmem:[%s3380 + $0x4] sm:$0xf]
        %v3383 = vld [vmem:[%s3380 + $0x8] sm:$0xf]
        %v3384 = vld [vmem:[%s3380 + $0xc] sm:$0xf]
        %s3385 = scalar_lea.vmem %s14, 1
        %v3386 = vld [vmem:[%s3385] sm:$0x1]
        %v3387 = vpack.c.bf16 %v3227, %v3227
        %3388 = vst.msk [vmem:[#allocation2] sm:$0xf] %vm872, %v3387
        %v3390 = vunpack.c.l.b16 %v3387
        %v3391 = vpack.c.b16 %v3390, %v3390
        %3392 = vrot.lane.b32.xlu0 %v3391, 120
        %v3393 = vpop.permute.xlu0 %3392
        %3395 = vst.msk [vmem:[%s925] sm:$0xf] %vm872, %v3393
        %3396 = vrot.lane.b32.xlu0 %v3391, 112
        %v3397 = vpop.permute.xlu0 %3396
        %3399 = vst.msk [vmem:[%s930] sm:$0xf] %vm872, %v3397
        %3400 = vrot.lane.b32.xlu0 %v3391, 104
        %v3401 = vpop.permute.xlu0 %3400
        %3403 = vst.msk [vmem:[%s935] sm:$0xf] %vm872, %v3401
        %v3404 = vld [vmem:[#allocation2] sm:$0xf]
        %v3405 = vld [vmem:[#allocation2 + $0x4] sm:$0xf]
        %v3406 = vld [vmem:[#allocation2 + $0x8] sm:$0xf]
        %v3407 = vld [vmem:[#allocation2 + $0xc] sm:$0xf]
        %v3410 = vunpack.c.l.b16 %v3332
        %v3411 = vunpack.c.l.b16 %v3333
        %v3412 = vpack.c.b16 %v3411, %v3410
        %v3414 = vsel %vm941, %v3404, 0
        %v3417 = vsel %vm941, %v3412, 0
        %3419 = vmatprep.subr.bf16.mxu0 0
        %3420 = vmatpush1.bf16.xpose.msra.mxu0 0
        %3421 = vmatprep.subr.bf16.mxu0 0
        %3422 = vmatpush1.bf16.xpose.msra.mxu0 0
        %3423 = vmatprep.subr.bf16.mxu0 0
        %3424 = vmatpush1.bf16.xpose.msra.mxu0 0
        %3425 = vmatprep.subr.bf16.mxu0 0
        %3426 = vmatpush1.bf16.xpose.msra.mxu0 0
        %3427 = vmatprep.subr.bf16.mxu0 0
        %3428 = vmatpush1.bf16.xpose.msra.mxu0 0
        %3429 = vmatprep.subr.bf16.mxu0 0
        %3430 = vmatpush1.bf16.xpose.msra.mxu0 0
        %3431 = vmatprep.subr.bf16.mxu0 0
        %3432 = vmatpush1.bf16.xpose.msra.mxu0 0
        %3433 = vmatprep.subr.bf16.mxu0 0
        %3434 = vmatpush1.bf16.xpose.msra.mxu0 %v3417
        %3435 = vmatprep.subr.bf16.mxu0 0
        %3436 = vmatpush2.bf16.xpose.msra.mxu0 0
        %3437 = vmatprep.subr.bf16.mxu0 0
        %3438 = vmatpush2.bf16.xpose.msra.mxu0 0
        %3439 = vmatprep.subr.bf16.mxu0 0
        %3440 = vmatpush2.bf16.xpose.msra.mxu0 0
        %3441 = vmatprep.subr.bf16.mxu0 0
        %3442 = vmatpush2.bf16.xpose.msra.mxu0 0
        %3443 = vmatprep.subr.bf16.mxu0 0
        %3444 = vmatpush2.bf16.xpose.msra.mxu0 0
        %3445 = vmatprep.subr.bf16.mxu0 0
        %3446 = vmatpush2.bf16.xpose.msra.mxu0 0
        %3447 = vmatprep.subr.bf16.mxu0 0
        %3448 = vmatpush2.bf16.xpose.msra.mxu0 0
        %3449 = vmatprep.subr.bf16.mxu0 0
        %3450 = vmatpush2.bf16.xpose.msra.mxu0 0
        %3451 = vmatprep.mubr.bf16.mxu0 0
        %3452 = vmatmul.mubr.bf16.gmra.mxu0 %v3414
        %v3453 = vpop.f32.mrf.mxu0
        %v3454 = vadd.f32 0.0, %v3453
        %v3455 = vpop.f32.mrf.mxu0
        %v3456 = vpop.f32.mrf.mxu0
        %v3457 = vpop.f32.mrf.mxu0
        %3458 = vdwg.mxu0
        %v3461 = vunpack.c.l.b16 %v3334
        %v3462 = vunpack.c.l.b16 %v3335
        %v3463 = vpack.c.b16 %v3462, %v3461
        %v3465 = vsel %vm941, %v3405, 0
        %v3468 = vsel %vm941, %v3463, 0
        %3470 = vmatprep.subr.bf16.mxu0 0
        %3471 = vmatpush1.bf16.xpose.msra.mxu0 0
        %3472 = vmatprep.subr.bf16.mxu0 0
        %3473 = vmatpush1.bf16.xpose.msra.mxu0 0
        %3474 = vmatprep.subr.bf16.mxu0 0
        %3475 = vmatpush1.bf16.xpose.msra.mxu0 0
        %3476 = vmatprep.subr.bf16.mxu0 0
        %3477 = vmatpush1.bf16.xpose.msra.mxu0 0
        %3478 = vmatprep.subr.bf16.mxu0 0
        %3479 = vmatpush1.bf16.xpose.msra.mxu0 0
        %3480 = vmatprep.subr.bf16.mxu0 0
        %3481 = vmatpush1.bf16.xpose.msra.mxu0 0
        %3482 = vmatprep.subr.bf16.mxu0 0
        %3483 = vmatpush1.bf16.xpose.msra.mxu0 0
        %3484 = vmatprep.subr.bf16.mxu0 0
        %3485 = vmatpush1.bf16.xpose.msra.mxu0 %v3468
        %3486 = vmatprep.subr.bf16.mxu0 0
        %3487 = vmatpush2.bf16.xpose.msra.mxu0 0
        %3488 = vmatprep.subr.bf16.mxu0 0
        %3489 = vmatpush2.bf16.xpose.msra.mxu0 0
        %3490 = vmatprep.subr.bf16.mxu0 0
        %3491 = vmatpush2.bf16.xpose.msra.mxu0 0
        %3492 = vmatprep.subr.bf16.mxu0 0
        %3493 = vmatpush2.bf16.xpose.msra.mxu0 0
        %3494 = vmatprep.subr.bf16.mxu0 0
        %3495 = vmatpush2.bf16.xpose.msra.mxu0 0
        %3496 = vmatprep.subr.bf16.mxu0 0
        %3497 = vmatpush2.bf16.xpose.msra.mxu0 0
        %3498 = vmatprep.subr.bf16.mxu0 0
        %3499 = vmatpush2.bf16.xpose.msra.mxu0 0
        %3500 = vmatprep.subr.bf16.mxu0 0
        %3501 = vmatpush2.bf16.xpose.msra.mxu0 0
        %3502 = vmatprep.mubr.bf16.mxu0 0
        %3503 = vmatmul.mubr.bf16.gmra.mxu0 %v3465
        %v3504 = vpop.f32.mrf.mxu0
        %v3505 = vadd.f32 0.0, %v3504
        %v3506 = vpop.f32.mrf.mxu0
        %v3507 = vpop.f32.mrf.mxu0
        %v3508 = vpop.f32.mrf.mxu0
        %3509 = vdwg.mxu0
        %v3512 = vunpack.c.l.b16 %v3336
        %v3513 = vunpack.c.l.b16 %v3337
        %v3514 = vpack.c.b16 %v3513, %v3512
        %v3516 = vsel %vm941, %v3406, 0
        %v3519 = vsel %vm941, %v3514, 0
        %3521 = vmatprep.subr.bf16.mxu0 0
        %3522 = vmatpush1.bf16.xpose.msra.mxu0 0
        %3523 = vmatprep.subr.bf16.mxu0 0
        %3524 = vmatpush1.bf16.xpose.msra.mxu0 0
        %3525 = vmatprep.subr.bf16.mxu0 0
        %3526 = vmatpush1.bf16.xpose.msra.mxu0 0
        %3527 = vmatprep.subr.bf16.mxu0 0
        %3528 = vmatpush1.bf16.xpose.msra.mxu0 0
        %3529 = vmatprep.subr.bf16.mxu0 0
        %3530 = vmatpush1.bf16.xpose.msra.mxu0 0
        %3531 = vmatprep.subr.bf16.mxu0 0
        %3532 = vmatpush1.bf16.xpose.msra.mxu0 0
        %3533 = vmatprep.subr.bf16.mxu0 0
        %3534 = vmatpush1.bf16.xpose.msra.mxu0 0
        %3535 = vmatprep.subr.bf16.mxu0 0
        %3536 = vmatpush1.bf16.xpose.msra.mxu0 %v3519
        %3537 = vmatprep.subr.bf16.mxu0 0
        %3538 = vmatpush2.bf16.xpose.msra.mxu0 0
        %3539 = vmatprep.subr.bf16.mxu0 0
        %3540 = vmatpush2.bf16.xpose.msra.mxu0 0
        %3541 = vmatprep.subr.bf16.mxu0 0
        %3542 = vmatpush2.bf16.xpose.msra.mxu0 0
        %3543 = vmatprep.subr.bf16.mxu0 0
        %3544 = vmatpush2.bf16.xpose.msra.mxu0 0
        %3545 = vmatprep.subr.bf16.mxu0 0
        %3546 = vmatpush2.bf16.xpose.msra.mxu0 0
        %3547 = vmatprep.subr.bf16.mxu0 0
        %3548 = vmatpush2.bf16.xpose.msra.mxu0 0
        %3549 = vmatprep.subr.bf16.mxu0 0
        %3550 = vmatpush2.bf16.xpose.msra.mxu0 0
        %3551 = vmatprep.subr.bf16.mxu0 0
        %3552 = vmatpush2.bf16.xpose.msra.mxu0 0
        %3553 = vmatprep.mubr.bf16.mxu0 0
        %3554 = vmatmul.mubr.bf16.gmra.mxu0 %v3516
        %v3555 = vpop.f32.mrf.mxu0
        %v3556 = vadd.f32 0.0, %v3555
        %v3557 = vpop.f32.mrf.mxu0
        %v3558 = vpop.f32.mrf.mxu0
        %v3559 = vpop.f32.mrf.mxu0
        %3560 = vdwg.mxu0
        %v3563 = vunpack.c.l.b16 %v3338
        %v3564 = vunpack.c.l.b16 %v3339
        %v3565 = vpack.c.b16 %v3564, %v3563
        %v3567 = vsel %vm941, %v3407, 0
        %v3570 = vsel %vm941, %v3565, 0
        %3572 = vmatprep.subr.bf16.mxu0 0
        %3573 = vmatpush1.bf16.xpose.msra.mxu0 0
        %3574 = vmatprep.subr.bf16.mxu0 0
        %3575 = vmatpush1.bf16.xpose.msra.mxu0 0
        %3576 = vmatprep.subr.bf16.mxu0 0
        %3577 = vmatpush1.bf16.xpose.msra.mxu0 0
        %3578 = vmatprep.subr.bf16.mxu0 0
        %3579 = vmatpush1.bf16.xpose.msra.mxu0 0
        %3580 = vmatprep.subr.bf16.mxu0 0
        %3581 = vmatpush1.bf16.xpose.msra.mxu0 0
        %3582 = vmatprep.subr.bf16.mxu0 0
        %3583 = vmatpush1.bf16.xpose.msra.mxu0 0
        %3584 = vmatprep.subr.bf16.mxu0 0
        %3585 = vmatpush1.bf16.xpose.msra.mxu0 0
        %3586 = vmatprep.subr.bf16.mxu0 0
        %3587 = vmatpush1.bf16.xpose.msra.mxu0 %v3570
        %3588 = vmatprep.subr.bf16.mxu0 0
        %3589 = vmatpush2.bf16.xpose.msra.mxu0 0
        %3590 = vmatprep.subr.bf16.mxu0 0
        %3591 = vmatpush2.bf16.xpose.msra.mxu0 0
        %3592 = vmatprep.subr.bf16.mxu0 0
        %3593 = vmatpush2.bf16.xpose.msra.mxu0 0
        %3594 = vmatprep.subr.bf16.mxu0 0
        %3595 = vmatpush2.bf16.xpose.msra.mxu0 0
        %3596 = vmatprep.subr.bf16.mxu0 0
        %3597 = vmatpush2.bf16.xpose.msra.mxu0 0
        %3598 = vmatprep.subr.bf16.mxu0 0
        %3599 = vmatpush2.bf16.xpose.msra.mxu0 0
        %3600 = vmatprep.subr.bf16.mxu0 0
        %3601 = vmatpush2.bf16.xpose.msra.mxu0 0
        %3602 = vmatprep.subr.bf16.mxu0 0
        %3603 = vmatpush2.bf16.xpose.msra.mxu0 0
        %3604 = vmatprep.mubr.bf16.mxu0 0
        %3605 = vmatmul.mubr.bf16.gmra.mxu0 %v3567
        %v3606 = vpop.f32.mrf.mxu0
        %v3607 = vadd.f32 0.0, %v3606
        %v3608 = vpop.f32.mrf.mxu0
        %v3609 = vpop.f32.mrf.mxu0
        %v3610 = vpop.f32.mrf.mxu0
        %3611 = vdwg.mxu0
        %v3612 = vsel %vm1935, %v3454, -inf
        %3613 = vmax.xlane.f32.xlu0 %v3612
        %v3614 = vpop.xlane.xlu0 %3613
        %v3615 = vsel %vm1935, %v3505, -inf
        %3616 = vmax.xlane.f32.xlu0 %v3615
        %v3617 = vpop.xlane.xlu0 %3616
        %v3618 = vsel %vm1935, %v3556, -inf
        %3619 = vmax.xlane.f32.xlu0 %v3618
        %v3620 = vpop.xlane.xlu0 %3619
        %v3621 = vsel %vm1935, %v3607, -inf
        %3622 = vmax.xlane.f32.xlu0 %v3621
        %v3623 = vpop.xlane.xlu0 %3622
        %v3624 = vsub.f32 %v3454, %v3614
        %v3625 = vsub.f32 %v3505, %v3617
        %v3626 = vsub.f32 %v3556, %v3620
        %v3627 = vsub.f32 %v3607, %v3623
        %v3628 = vmul.f32 %v3624, 1.442695
        %v3629 = vpow.pop %v3628
        %v3630 = vmul.f32 %v3625, 1.442695
        %v3631 = vpow.pop %v3630
        %v3632 = vmul.f32 %v3626, 1.442695
        %v3633 = vpow.pop %v3632
        %v3634 = vmul.f32 %v3627, 1.442695
        %v3635 = vpow.pop %v3634
        %v3636 = vsel %vm1935, %v3629, 0.0
        %3637 = vadd.xlane.f32.xlu0 %v3636
        %v3638 = vpop.xlane.xlu0 %3637
        %v3639 = vsel %vm1935, %v3631, 0.0
        %3640 = vadd.xlane.f32.xlu0 %v3639
        %v3641 = vpop.xlane.xlu0 %3640
        %v3642 = vsel %vm1935, %v3633, 0.0
        %3643 = vadd.xlane.f32.xlu0 %v3642
        %v3644 = vpop.xlane.xlu0 %3643
        %v3645 = vsel %vm1935, %v3635, 0.0
        %3646 = vadd.xlane.f32.xlu0 %v3645
        %v3647 = vpop.xlane.xlu0 %3646
        %v3648 = vrcp.pop %v3638
        %v3649 = vmul.f32 %v3629, %v3648
        %v3650 = vrcp.pop %v3641
        %v3651 = vmul.f32 %v3631, %v3650
        %v3652 = vrcp.pop %v3644
        %v3653 = vmul.f32 %v3633, %v3652
        %v3654 = vrcp.pop %v3647
        %v3655 = vmul.f32 %v3635, %v3654
        %s3656 = scalar_lea.vmem %s761, 32 [#allocation8]
        %3657 = vst.msk [vmem:[%s3656] sm:$0xff] %vm1935, %v3649
        %3658 = vst.msk [vmem:[%s3656 + $0x8] sm:$0xff] %vm1935, %v3651
        %3659 = vst.msk [vmem:[%s3656 + $0x10] sm:$0xff] %vm1935, %v3653
        %3660 = vst.msk [vmem:[%s3656 + $0x18] sm:$0xff] %vm1935, %v3655
        %v3661 = vpack.c.bf16 %v3649, %v3649
        %v3662 = vpack.c.bf16 %v3651, %v3651
        %v3663 = vpack.c.bf16 %v3653, %v3653
        %v3664 = vpack.c.bf16 %v3655, %v3655
        %v3667 = vunpack.c.l.b16 %v3372
        %v3668 = vunpack.c.l.b16 %v3373
        %v3669 = vpack.c.b16 %v3668, %v3667
        %v3672 = vsel %vm1935, %v3661, 0
        %3674 = vmatprep.subr.bf16.mxu0 0
        %3675 = vmatpush1.bf16.msra.mxu0 0
        %3676 = vmatprep.subr.bf16.mxu0 0
        %3677 = vmatpush1.bf16.msra.mxu0 0
        %3678 = vmatprep.subr.bf16.mxu0 0
        %3679 = vmatpush1.bf16.msra.mxu0 0
        %3680 = vmatprep.subr.bf16.mxu0 0
        %3681 = vmatpush1.bf16.msra.mxu0 0
        %3682 = vmatprep.subr.bf16.mxu0 0
        %3683 = vmatpush1.bf16.msra.mxu0 0
        %3684 = vmatprep.subr.bf16.mxu0 0
        %3685 = vmatpush1.bf16.msra.mxu0 0
        %3686 = vmatprep.subr.bf16.mxu0 0
        %3687 = vmatpush1.bf16.msra.mxu0 0
        %3688 = vmatprep.subr.bf16.mxu0 0
        %3689 = vmatpush1.bf16.msra.mxu0 %v3669
        %3690 = vmatprep.subr.bf16.mxu0 0
        %3691 = vmatpush2.bf16.msra.mxu0 0
        %3692 = vmatprep.subr.bf16.mxu0 0
        %3693 = vmatpush2.bf16.msra.mxu0 0
        %3694 = vmatprep.subr.bf16.mxu0 0
        %3695 = vmatpush2.bf16.msra.mxu0 0
        %3696 = vmatprep.subr.bf16.mxu0 0
        %3697 = vmatpush2.bf16.msra.mxu0 0
        %3698 = vmatprep.subr.bf16.mxu0 0
        %3699 = vmatpush2.bf16.msra.mxu0 0
        %3700 = vmatprep.subr.bf16.mxu0 0
        %3701 = vmatpush2.bf16.msra.mxu0 0
        %3702 = vmatprep.subr.bf16.mxu0 0
        %3703 = vmatpush2.bf16.msra.mxu0 0
        %3704 = vmatprep.subr.bf16.mxu0 0
        %3705 = vmatpush2.bf16.msra.mxu0 0
        %3706 = vmatprep.mubr.bf16.mxu0 0
        %3707 = vmatmul.mubr.bf16.gmra.mxu0 %v3672
        %v3708 = vpop.f32.mrf.mxu0
        %v3709 = vadd.f32 0.0, %v3708
        %v3710 = vpop.f32.mrf.mxu0
        %v3711 = vpop.f32.mrf.mxu0
        %v3712 = vpop.f32.mrf.mxu0
        %3713 = vdwg.mxu0
        %v3716 = vunpack.c.l.b16 %v3374
        %v3717 = vunpack.c.l.b16 %v3375
        %v3718 = vpack.c.b16 %v3717, %v3716
        %v3721 = vsel %vm1935, %v3662, 0
        %3723 = vmatprep.subr.bf16.mxu0 0
        %3724 = vmatpush1.bf16.msra.mxu0 0
        %3725 = vmatprep.subr.bf16.mxu0 0
        %3726 = vmatpush1.bf16.msra.mxu0 0
        %3727 = vmatprep.subr.bf16.mxu0 0
        %3728 = vmatpush1.bf16.msra.mxu0 0
        %3729 = vmatprep.subr.bf16.mxu0 0
        %3730 = vmatpush1.bf16.msra.mxu0 0
        %3731 = vmatprep.subr.bf16.mxu0 0
        %3732 = vmatpush1.bf16.msra.mxu0 0
        %3733 = vmatprep.subr.bf16.mxu0 0
        %3734 = vmatpush1.bf16.msra.mxu0 0
        %3735 = vmatprep.subr.bf16.mxu0 0
        %3736 = vmatpush1.bf16.msra.mxu0 0
        %3737 = vmatprep.subr.bf16.mxu0 0
        %3738 = vmatpush1.bf16.msra.mxu0 %v3718
        %3739 = vmatprep.subr.bf16.mxu0 0
        %3740 = vmatpush2.bf16.msra.mxu0 0
        %3741 = vmatprep.subr.bf16.mxu0 0
        %3742 = vmatpush2.bf16.msra.mxu0 0
        %3743 = vmatprep.subr.bf16.mxu0 0
        %3744 = vmatpush2.bf16.msra.mxu0 0
        %3745 = vmatprep.subr.bf16.mxu0 0
        %3746 = vmatpush2.bf16.msra.mxu0 0
        %3747 = vmatprep.subr.bf16.mxu0 0
        %3748 = vmatpush2.bf16.msra.mxu0 0
        %3749 = vmatprep.subr.bf16.mxu0 0
        %3750 = vmatpush2.bf16.msra.mxu0 0
        %3751 = vmatprep.subr.bf16.mxu0 0
        %3752 = vmatpush2.bf16.msra.mxu0 0
        %3753 = vmatprep.subr.bf16.mxu0 0
        %3754 = vmatpush2.bf16.msra.mxu0 0
        %3755 = vmatprep.mubr.bf16.mxu0 0
        %3756 = vmatmul.mubr.bf16.gmra.mxu0 %v3721
        %v3757 = vpop.f32.mrf.mxu0
        %v3758 = vadd.f32 0.0, %v3757
        %v3759 = vpop.f32.mrf.mxu0
        %v3760 = vpop.f32.mrf.mxu0
        %v3761 = vpop.f32.mrf.mxu0
        %3762 = vdwg.mxu0
        %v3765 = vunpack.c.l.b16 %v3376
        %v3766 = vunpack.c.l.b16 %v3377
        %v3767 = vpack.c.b16 %v3766, %v3765
        %v3770 = vsel %vm1935, %v3663, 0
        %3772 = vmatprep.subr.bf16.mxu0 0
        %3773 = vmatpush1.bf16.msra.mxu0 0
        %3774 = vmatprep.subr.bf16.mxu0 0
        %3775 = vmatpush1.bf16.msra.mxu0 0
        %3776 = vmatprep.subr.bf16.mxu0 0
        %3777 = vmatpush1.bf16.msra.mxu0 0
        %3778 = vmatprep.subr.bf16.mxu0 0
        %3779 = vmatpush1.bf16.msra.mxu0 0
        %3780 = vmatprep.subr.bf16.mxu0 0
        %3781 = vmatpush1.bf16.msra.mxu0 0
        %3782 = vmatprep.subr.bf16.mxu0 0
        %3783 = vmatpush1.bf16.msra.mxu0 0
        %3784 = vmatprep.subr.bf16.mxu0 0
        %3785 = vmatpush1.bf16.msra.mxu0 0
        %3786 = vmatprep.subr.bf16.mxu0 0
        %3787 = vmatpush1.bf16.msra.mxu0 %v3767
        %3788 = vmatprep.subr.bf16.mxu0 0
        %3789 = vmatpush2.bf16.msra.mxu0 0
        %3790 = vmatprep.subr.bf16.mxu0 0
        %3791 = vmatpush2.bf16.msra.mxu0 0
        %3792 = vmatprep.subr.bf16.mxu0 0
        %3793 = vmatpush2.bf16.msra.mxu0 0
        %3794 = vmatprep.subr.bf16.mxu0 0
        %3795 = vmatpush2.bf16.msra.mxu0 0
        %3796 = vmatprep.subr.bf16.mxu0 0
        %3797 = vmatpush2.bf16.msra.mxu0 0
        %3798 = vmatprep.subr.bf16.mxu0 0
        %3799 = vmatpush2.bf16.msra.mxu0 0
        %3800 = vmatprep.subr.bf16.mxu0 0
        %3801 = vmatpush2.bf16.msra.mxu0 0
        %3802 = vmatprep.subr.bf16.mxu0 0
        %3803 = vmatpush2.bf16.msra.mxu0 0
        %3804 = vmatprep.mubr.bf16.mxu0 0
        %3805 = vmatmul.mubr.bf16.gmra.mxu0 %v3770
        %v3806 = vpop.f32.mrf.mxu0
        %v3807 = vadd.f32 0.0, %v3806
        %v3808 = vpop.f32.mrf.mxu0
        %v3809 = vpop.f32.mrf.mxu0
        %v3810 = vpop.f32.mrf.mxu0
        %3811 = vdwg.mxu0
        %v3814 = vunpack.c.l.b16 %v3378
        %v3815 = vunpack.c.l.b16 %v3379
        %v3816 = vpack.c.b16 %v3815, %v3814
        %v3819 = vsel %vm1935, %v3664, 0
        %3821 = vmatprep.subr.bf16.mxu0 0
        %3822 = vmatpush1.bf16.msra.mxu0 0
        %3823 = vmatprep.subr.bf16.mxu0 0
        %3824 = vmatpush1.bf16.msra.mxu0 0
        %3825 = vmatprep.subr.bf16.mxu0 0
        %3826 = vmatpush1.bf16.msra.mxu0 0
        %3827 = vmatprep.subr.bf16.mxu0 0
        %3828 = vmatpush1.bf16.msra.mxu0 0
        %3829 = vmatprep.subr.bf16.mxu0 0
        %3830 = vmatpush1.bf16.msra.mxu0 0
        %3831 = vmatprep.subr.bf16.mxu0 0
        %3832 = vmatpush1.bf16.msra.mxu0 0
        %3833 = vmatprep.subr.bf16.mxu0 0
        %3834 = vmatpush1.bf16.msra.mxu0 0
        %3835 = vmatprep.subr.bf16.mxu0 0
        %3836 = vmatpush1.bf16.msra.mxu0 %v3816
        %3837 = vmatprep.subr.bf16.mxu0 0
        %3838 = vmatpush2.bf16.msra.mxu0 0
        %3839 = vmatprep.subr.bf16.mxu0 0
        %3840 = vmatpush2.bf16.msra.mxu0 0
        %3841 = vmatprep.subr.bf16.mxu0 0
        %3842 = vmatpush2.bf16.msra.mxu0 0
        %3843 = vmatprep.subr.bf16.mxu0 0
        %3844 = vmatpush2.bf16.msra.mxu0 0
        %3845 = vmatprep.subr.bf16.mxu0 0
        %3846 = vmatpush2.bf16.msra.mxu0 0
        %3847 = vmatprep.subr.bf16.mxu0 0
        %3848 = vmatpush2.bf16.msra.mxu0 0
        %3849 = vmatprep.subr.bf16.mxu0 0
        %3850 = vmatpush2.bf16.msra.mxu0 0
        %3851 = vmatprep.subr.bf16.mxu0 0
        %3852 = vmatpush2.bf16.msra.mxu0 0
        %3853 = vmatprep.mubr.bf16.mxu0 0
        %3854 = vmatmul.mubr.bf16.gmra.mxu0 %v3819
        %v3855 = vpop.f32.mrf.mxu0
        %v3856 = vadd.f32 0.0, %v3855
        %v3857 = vpop.f32.mrf.mxu0
        %v3858 = vpop.f32.mrf.mxu0
        %v3859 = vpop.f32.mrf.mxu0
        %3860 = vdwg.mxu0
        %v3861 = vpack.c.bf16 %v3709, %v3709
        %3862 = vst.msk [vmem:[#allocation7] sm:$0xf] %vm872, %v3861
        %v3863 = vpack.c.bf16 %v3758, %v3758
        %v3865 = vunpack.c.l.b16 %v3863
        %v3866 = vpack.c.b16 %v3865, %v3865
        %3867 = vrot.lane.b32.xlu0 %v3866, 8
        %v3868 = vpop.permute.xlu0 %3867
        %3870 = vst.msk [vmem:[#allocation7] sm:$0xf] %vm1368, %v3868
        %v3871 = vpack.c.bf16 %v3807, %v3807
        %v3873 = vunpack.c.l.b16 %v3871
        %v3874 = vpack.c.b16 %v3873, %v3873
        %3875 = vrot.lane.b32.xlu0 %v3874, 16
        %v3876 = vpop.permute.xlu0 %3875
        %3878 = vst.msk [vmem:[#allocation7] sm:$0xf] %vm1377, %v3876
        %v3879 = vpack.c.bf16 %v3856, %v3856
        %v3881 = vunpack.c.l.b16 %v3879
        %v3882 = vpack.c.b16 %v3881, %v3881
        %3883 = vrot.lane.b32.xlu0 %v3882, 24
        %v3884 = vpop.permute.xlu0 %3883
        %3886 = vst.msk [vmem:[#allocation7] sm:$0xf] %vm1386, %v3884
        %v3887 = vld [vmem:[#allocation7] sm:$0xf]
        %v3889 = vlaneseq
        %v3890 = vshrl.u32 %v3889, 7
        %v3891 = vsub.s32 0, %v3890
        %v3892 = vrot.slane %v3386, %v3891
        %v3898 = vunpack.c.l.b16 %v3381
        %v3899 = vunpack.c.l.b16 %v3382
        %v3900 = vunpack.c.l.b16 %v3383
        %v3901 = vunpack.c.l.b16 %v3384
        %v3902 = vpack.c.b16 %v3899, %v3898
        %v3903 = vpack.c.b16 %v3901, %v3900
        %v3907 = vsel %vm821, %v3887, 0
        %3909 = vmatprep.subr.bf16.mxu0 0
        %3910 = vmatpush1.bf16.msra.mxu0 0
        %3911 = vmatprep.subr.bf16.mxu0 0
        %3912 = vmatpush1.bf16.msra.mxu0 0
        %3913 = vmatprep.subr.bf16.mxu0 0
        %3914 = vmatpush1.bf16.msra.mxu0 0
        %3915 = vmatprep.subr.bf16.mxu0 0
        %3916 = vmatpush1.bf16.msra.mxu0 0
        %3917 = vmatprep.subr.bf16.mxu0 0
        %3918 = vmatpush1.bf16.msra.mxu0 0
        %3919 = vmatprep.subr.bf16.mxu0 0
        %3920 = vmatpush1.bf16.msra.mxu0 0
        %3921 = vmatprep.subr.bf16.mxu0 0
        %3922 = vmatpush1.bf16.msra.mxu0 %v3903
        %3923 = vmatprep.subr.bf16.mxu0 0
        %3924 = vmatpush1.bf16.msra.mxu0 %v3902
        %3925 = vmatprep.subr.bf16.mxu0 0
        %3926 = vmatpush2.bf16.msra.mxu0 0
        %3927 = vmatprep.subr.bf16.mxu0 0
        %3928 = vmatpush2.bf16.msra.mxu0 0
        %3929 = vmatprep.subr.bf16.mxu0 0
        %3930 = vmatpush2.bf16.msra.mxu0 0
        %3931 = vmatprep.subr.bf16.mxu0 0
        %3932 = vmatpush2.bf16.msra.mxu0 0
        %3933 = vmatprep.subr.bf16.mxu0 0
        %3934 = vmatpush2.bf16.msra.mxu0 0
        %3935 = vmatprep.subr.bf16.mxu0 0
        %3936 = vmatpush2.bf16.msra.mxu0 0
        %3937 = vmatprep.subr.bf16.mxu0 0
        %3938 = vmatpush2.bf16.msra.mxu0 0
        %3939 = vmatprep.subr.bf16.mxu0 0
        %3940 = vmatpush2.bf16.msra.mxu0 0
        %3941 = vmatprep.mubr.bf16.mxu0 0
        %3942 = vmatmul.mubr.bf16.gmra.mxu0 %v3907
        %v3943 = vpop.f32.mrf.mxu0
        %v3944 = vadd.f32 %v3892, %v3943
        %v3945 = vpop.f32.mrf.mxu0
        %v3946 = vpop.f32.mrf.mxu0
        %v3947 = vpop.f32.mrf.mxu0
        %3948 = vdwg.mxu0
        %v3949 = vadd.f32 %v3162, %v3944
        %s3950 = scalar_lea.vmem %s15, 1
        %v3951 = vld [vmem:[%s3950] sm:$0x1]
        %s3952 = scalar_lea.vmem %s16, 1
        %v3953 = vld [vmem:[%s3952] sm:$0x1]
        %v3954 = vsel %vm821, %v3949, 0.0
        %3955 = vadd.xlane.f32.xlu0 %v3954
        %v3956 = vpop.xlane.xlu0 %3955
        %v3957 = vmul.f32 %v3956, %v1456
        %v3958 = vmul.f32 %v3949, %v3949
        %v3959 = vsel %vm821, %v3958, 0.0
        %3960 = vadd.xlane.f32.xlu0 %v3959
        %v3961 = vpop.xlane.xlu0 %3960
        %v3962 = vmul.f32 %v3961, %v1456
        %v3963 = vmul.f32 %v3957, %v3957
        %v3964 = vsub.f32 %v3962, %v3963
        %v3965 = vsub.f32 %v3949, %v3957
        %v3966 = vadd.f32 %v3964, 1e-05
        %v3967 = vrsqrt.pop %v3966
        %v3968 = vmul.f32 %v3965, %v3967
        %v3970 = vlaneseq
        %v3971 = vshrl.u32 %v3970, 7
        %v3972 = vsub.s32 0, %v3971
        %v3973 = vrot.slane %v3951, %v3972
        %v3975 = vmul.f32 %v3968, %v3973
        %v3977 = vlaneseq
        %v3978 = vshrl.u32 %v3977, 7
        %v3979 = vsub.s32 0, %v3978
        %v3980 = vrot.slane %v3953, %v3979
        %v3982 = vadd.f32 %v3975, %v3980
        %v3983 = vpack.c.bf16 %v3982, %v3982
        %s3984 = scalar_lea.vmem %s17, 16
        %v3985 = vld [vmem:[%s3984] sm:$0xf]
        %v3986 = vld [vmem:[%s3984 + $0x4] sm:$0xf]
        %v3987 = vld [vmem:[%s3984 + $0x8] sm:$0xf]
        %v3988 = vld [vmem:[%s3984 + $0xc] sm:$0xf]
        %s3989 = scalar_lea.vmem %s18, 1
        %v3990 = vld [vmem:[%s3989] sm:$0x1]
        %v3992 = vlaneseq
        %v3993 = vshrl.u32 %v3992, 7
        %v3994 = vsub.s32 0, %v3993
        %v3995 = vrot.slane %v3990, %v3994
        %v4001 = vunpack.c.l.b16 %v3985
        %v4002 = vunpack.c.l.b16 %v3986
        %v4003 = vunpack.c.l.b16 %v3987
        %v4004 = vunpack.c.l.b16 %v3988
        %v4005 = vpack.c.b16 %v4002, %v4001
        %v4006 = vpack.c.b16 %v4004, %v4003
        %v4010 = vsel %vm821, %v3983, 0
        %4012 = vmatprep.subr.bf16.mxu0 0
        %4013 = vmatpush1.bf16.msra.mxu0 0
        %4014 = vmatprep.subr.bf16.mxu0 0
        %4015 = vmatpush1.bf16.msra.mxu0 0
        %4016 = vmatprep.subr.bf16.mxu0 0
        %4017 = vmatpush1.bf16.msra.mxu0 0
        %4018 = vmatprep.subr.bf16.mxu0 0
        %4019 = vmatpush1.bf16.msra.mxu0 0
        %4020 = vmatprep.subr.bf16.mxu0 0
        %4021 = vmatpush1.bf16.msra.mxu0 0
        %4022 = vmatprep.subr.bf16.mxu0 0
        %4023 = vmatpush1.bf16.msra.mxu0 0
        %4024 = vmatprep.subr.bf16.mxu0 0
        %4025 = vmatpush1.bf16.msra.mxu0 %v4006
        %4026 = vmatprep.subr.bf16.mxu0 0
        %4027 = vmatpush1.bf16.msra.mxu0 %v4005
        %4028 = vmatprep.subr.bf16.mxu0 0
        %4029 = vmatpush2.bf16.msra.mxu0 0
        %4030 = vmatprep.subr.bf16.mxu0 0
        %4031 = vmatpush2.bf16.msra.mxu0 0
        %4032 = vmatprep.subr.bf16.mxu0 0
        %4033 = vmatpush2.bf16.msra.mxu0 0
        %4034 = vmatprep.subr.bf16.mxu0 0
        %4035 = vmatpush2.bf16.msra.mxu0 0
        %4036 = vmatprep.subr.bf16.mxu0 0
        %4037 = vmatpush2.bf16.msra.mxu0 0
        %4038 = vmatprep.subr.bf16.mxu0 0
        %4039 = vmatpush2.bf16.msra.mxu0 0
        %4040 = vmatprep.subr.bf16.mxu0 0
        %4041 = vmatpush2.bf16.msra.mxu0 0
        %4042 = vmatprep.subr.bf16.mxu0 0
        %4043 = vmatpush2.bf16.msra.mxu0 0
        %4044 = vmatprep.mubr.bf16.mxu0 0
        %4045 = vmatmul.mubr.bf16.gmra.mxu0 %v4010
        %v4046 = vpop.f32.mrf.mxu0
        %v4047 = vadd.f32 %v3995, %v4046
        %v4048 = vpop.f32.mrf.mxu0
        %v4049 = vpop.f32.mrf.mxu0
        %v4050 = vpop.f32.mrf.mxu0
        %4051 = vdwg.mxu0
        %v4052 = vmax.f32 %v4047, 0.0
        %v4053 = vpack.c.bf16 %v4052, %v4052
        %s4054 = scalar_lea.vmem %s19, 32
        %v4055 = vld [vmem:[%s4054] sm:$0xf]
        %v4056 = vld [vmem:[%s4054 + $0x4] sm:$0xf]
        %v4057 = vld [vmem:[%s4054 + $0x8] sm:$0xf]
        %v4058 = vld [vmem:[%s4054 + $0xc] sm:$0xf]
        %v4059 = vld [vmem:[%s4054 + $0x10] sm:$0xf]
        %v4060 = vld [vmem:[%s4054 + $0x14] sm:$0xf]
        %v4061 = vld [vmem:[%s4054 + $0x18] sm:$0xf]
        %v4062 = vld [vmem:[%s4054 + $0x1c] sm:$0xf]
        %s4063 = scalar_lea.vmem %s20, 1
        %v4064 = vld [vmem:[%s4063] sm:$0x1]
        %v4066 = vlaneseq
        %v4067 = vshrl.u32 %v4066, 7
        %v4068 = vsub.s32 0, %v4067
        %v4069 = vrot.slane %v4064, %v4068
        %v4079 = vunpack.c.l.b16 %v4055
        %v4080 = vunpack.c.l.b16 %v4056
        %v4081 = vunpack.c.l.b16 %v4057
        %v4082 = vunpack.c.l.b16 %v4058
        %v4083 = vunpack.c.l.b16 %v4059
        %v4084 = vunpack.c.l.b16 %v4060
        %v4085 = vunpack.c.l.b16 %v4061
        %v4086 = vunpack.c.l.b16 %v4062
        %v4087 = vpack.c.b16 %v4080, %v4079
        %v4088 = vpack.c.b16 %v4082, %v4081
        %v4089 = vpack.c.b16 %v4084, %v4083
        %v4090 = vpack.c.b16 %v4086, %v4085
        %v4096 = vsel %vm2412, %v4053, 0
        %4098 = vmatprep.subr.bf16.mxu0 0
        %4099 = vmatpush1.bf16.msra.mxu0 0
        %4100 = vmatprep.subr.bf16.mxu0 0
        %4101 = vmatpush1.bf16.msra.mxu0 0
        %4102 = vmatprep.subr.bf16.mxu0 0
        %4103 = vmatpush1.bf16.msra.mxu0 0
        %4104 = vmatprep.subr.bf16.mxu0 0
        %4105 = vmatpush1.bf16.msra.mxu0 0
        %4106 = vmatprep.subr.bf16.mxu0 0
        %4107 = vmatpush1.bf16.msra.mxu0 %v4090
        %4108 = vmatprep.subr.bf16.mxu0 0
        %4109 = vmatpush1.bf16.msra.mxu0 %v4089
        %4110 = vmatprep.subr.bf16.mxu0 0
        %4111 = vmatpush1.bf16.msra.mxu0 %v4088
        %4112 = vmatprep.subr.bf16.mxu0 0
        %4113 = vmatpush1.bf16.msra.mxu0 %v4087
        %4114 = vmatprep.subr.bf16.mxu0 0
        %4115 = vmatpush2.bf16.msra.mxu0 0
        %4116 = vmatprep.subr.bf16.mxu0 0
        %4117 = vmatpush2.bf16.msra.mxu0 0
        %4118 = vmatprep.subr.bf16.mxu0 0
        %4119 = vmatpush2.bf16.msra.mxu0 0
        %4120 = vmatprep.subr.bf16.mxu0 0
        %4121 = vmatpush2.bf16.msra.mxu0 0
        %4122 = vmatprep.subr.bf16.mxu0 0
        %4123 = vmatpush2.bf16.msra.mxu0 0
        %4124 = vmatprep.subr.bf16.mxu0 0
        %4125 = vmatpush2.bf16.msra.mxu0 0
        %4126 = vmatprep.subr.bf16.mxu0 0
        %4127 = vmatpush2.bf16.msra.mxu0 0
        %4128 = vmatprep.subr.bf16.mxu0 0
        %4129 = vmatpush2.bf16.msra.mxu0 0
        %4130 = vmatprep.mubr.bf16.mxu0 0
        %4131 = vmatmul.mubr.bf16.gmra.mxu0 %v4096
        %v4132 = vpop.f32.mrf.mxu0
        %v4133 = vadd.f32 %v4069, %v4132
        %v4134 = vpop.f32.mrf.mxu0
        %v4135 = vpop.f32.mrf.mxu0
        %v4136 = vpop.f32.mrf.mxu0
        %4137 = vdwg.mxu0
        %v4138 = vadd.f32 %v3982, %v4133
        %s4139 = scalar_lea.vmem %s21, 1
        %v4140 = vld [vmem:[%s4139] sm:$0x1]
        %s4141 = scalar_lea.vmem %s22, 1
        %v4142 = vld [vmem:[%s4141] sm:$0x1]
        %v4143 = vsel %vm821, %v4138, 0.0
        %4144 = vadd.xlane.f32.xlu0 %v4143
        %v4145 = vpop.xlane.xlu0 %4144
        %v4146 = vmul.f32 %v4145, %v1456
        %v4147 = vmul.f32 %v4138, %v4138
        %v4148 = vsel %vm821, %v4147, 0.0
        %4149 = vadd.xlane.f32.xlu0 %v4148
        %v4150 = vpop.xlane.xlu0 %4149
        %v4151 = vmul.f32 %v4150, %v1456
        %v4152 = vmul.f32 %v4146, %v4146
        %v4153 = vsub.f32 %v4151, %v4152
        %v4154 = vsub.f32 %v4138, %v4146
        %v4155 = vadd.f32 %v4153, 1e-05
        %v4156 = vrsqrt.pop %v4155
        %v4157 = vmul.f32 %v4154, %v4156
        %v4159 = vlaneseq
        %v4160 = vshrl.u32 %v4159, 7
        %v4161 = vsub.s32 0, %v4160
        %v4162 = vrot.slane %v4140, %v4161
        %v4164 = vmul.f32 %v4157, %v4162
        %v4166 = vlaneseq
        %v4167 = vshrl.u32 %v4166, 7
        %v4168 = vsub.s32 0, %v4167
        %v4169 = vrot.slane %v4142, %v4168
        %v4171 = vadd.f32 %v4164, %v4169
        %4172 = vst.msk [vmem:[%s777] sm:$0xff] %vm821, %v4171
        %p4173 = scmp.lt.s32.totalorder %s39, 1
        %s4174 = scalar_select %p4173, %s39, 1
        %s4175 = smul.addr %s4174, 8
        %s4176 = scalar_lea.vmem %s23, %s4175
        %s4177 = sand.u32 %s571, 1
        %s4178 = scalar_lea.sflag [#allocation9], %s4177
        %s4179 = sand.u32 %s571, 1
        %s4180 = smul.addr %s4179, 64
        %s4181 = scalar_lea.vmem [#allocation8], %s4180
        // Predicated region
        $region113: #{_lambda_.1} parent=111 // pred_check
          %p4182 = pneg %p555
        $region114: #{_lambda_.1} parent=111 // pred_check_branch
          %4184 = sbr.rel (%p4182) target = $region116
        $region115: #{_lambda_.1} parent=111 // pred_region
          _
        $region116: #{_lambda_.1} parent=111 // pred_fallthru
          _
        // Predicated region
        $region117: #{_lambda_.1} parent=111 // pred_check
          %p4185 = pneg %p581
        $region118: #{_lambda_.1} parent=111 // pred_check_branch
          %4187 = sbr.rel (%p4185) target = $region120
        $region119: #{_lambda_.1} parent=111 // pred_region
          #allocation11 [shape = 'u32[6]{0}', space=smem, size = 0x18, scoped, tag = 'DMA stride descriptor']
          %s4189 = ssub.s32 1024, 1024
          %4190 = vsyncadd %s4178, %s4189
          %s4191 = smul.addr %s39, 4
          %s4192 = smul.addr %s4191, 128
          %s4193 = scalar_lea.hbm %s24, %s4192
          %s4195 = sshll.u32 1, 14
          %s4196 = sxor.u32 4294967295, %s4195
          %s4199 = sshll.u32 7, 18
          %s4200 = sxor.u32 4294967295, %s4199
          %s4201 = sand.u32 0, %s4200
          %s4203 = sor.u32 %s4201, 0
          %s4204 = sshll.u32 %s4181, 4
          %s4205 = int_to_ptr.vmem [resolvable:$true] %s4204
          %4211 = sst [smem:[#allocation11]] 512
          %s4212 = scalar_lea.smem [#allocation11], 1
          %4213 = sst [smem:[%s4212]] 1024
          %s4214 = scalar_lea.smem [#allocation11], 2
          %4215 = sst [smem:[%s4214]] 4
          %s4216 = scalar_lea.smem [#allocation11], 3
          %4217 = sst [smem:[%s4216]] 128
          %s4218 = scalar_lea.smem [#allocation11], 4
          %4219 = sst [smem:[%s4218]] 128
          %s4220 = scalar_lea.smem [#allocation11], 5
          %4221 = sst [smem:[%s4220]] 8
          %4223 = dma.general %s4205, 1024, %s4193, %s4178, 131072, [#allocation11], %s4203, 0
        $region120: #{_lambda_.1} parent=111 // pred_fallthru
          _
      $region112: #{_lambda_.1} parent=5 // pred_fallthru
        _
      %p4224 = scmp.le.s32.totalorder 2, %s34
      // Predicated region
      $region121: #{_lambda_.1} parent=5 // pred_check
        %p4225 = pneg %p4224
      $region122: #{_lambda_.1} parent=5 // pred_check_branch
        %4227 = sbr.rel (%p4225) target = $region124
      $region123: #{_lambda_.1} parent=5 // pred_region
        %s4228 = ssub.s32 %s34, 2
        // Predicated region
        $region125: #{_lambda_.1} parent=123 // pred_check
          %p4229 = pneg %p561
        $region126: #{_lambda_.1} parent=123 // pred_check_branch
          %4231 = sbr.rel (%p4229) target = $region128
        $region127: #{_lambda_.1} parent=123 // pred_region
          %p4232 = scmp.lt.s32.totalorder %s40, 1
          %s4233 = scalar_select %p4232, %s40, 1
          %s4234 = smul.addr %s4233, 8
          %s4235 = scalar_lea.vmem %s23, %s4234
        $region128: #{_lambda_.1} parent=123 // pred_fallthru
          _
        // Predicated region
        $region129: #{_lambda_.1} parent=123 // pred_check
          %p4236 = pneg %p587
        $region130: #{_lambda_.1} parent=123 // pred_check_branch
          %4238 = sbr.rel (%p4236) target = $region132
        $region131: #{_lambda_.1} parent=123 // pred_region
          %s4239 = sand.u32 %s572, 1
          %s4240 = scalar_lea.sflag [#allocation9], %s4239
          %s4241 = sand.u32 %s572, 1
          %s4242 = smul.addr %s4241, 64
          %s4243 = scalar_lea.vmem [#allocation8], %s4242
          %4244 = dma.done %s4240, 1024
        $region132: #{_lambda_.1} parent=123 // pred_fallthru
          _
      $region124: #{_lambda_.1} parent=5 // pred_fallthru
        _
    $region6: #{_lambda_.1} parent=1 // loop_footer
      %s38 = sadd.s32 1, %s34
    $region7: #{_lambda_.1} parent=1 // loop_footer_branch
      %33 = sbr.rel target = $region3
    $region8: #{_lambda_.1} parent=1 // loop_exit
      _
    %4245 = vsyncpa [#allocation9], 1
    %s4246 = scalar_lea.sflag [#allocation9], 1
    %4247 = vsyncpa %s4246, 1

</llo_original>
